<compile_context>
chip_gen: v6e
topology: v6e:2x2x1
jax: 0.10.0
libtpu: 0.0.40
codegen_flags: <defaults>
</compile_context>

<pallas_src>
import functools

import jax
import jax.numpy as jnp
from jax.experimental import pallas as pl
from jax.experimental.pallas import tpu as pltpu


def _vit_output_kernel(x_ref, w_ref, vec_ref, o_ref, *, eps, inv_k):
    # x_ref:   (TP, I)     f32 rows of hidden_states
    # w_ref:   (I, 2H)     bf16 [dense_weight^T | pool_select_matrix]
    # vec_ref: (8, H)      f32 packed per-channel constants:
    #            row 0: dense bias + move @ W^T
    #            row 1: LayerNorm gamma
    #            row 2: LayerNorm beta - rprelu move1
    #            row 3: positive-branch scale   (= layerscale alpha)
    #            row 4: negative-branch scale   (= prelu alpha * layerscale alpha)
    #            row 5: final bias              (= move2 * ls_alpha + ls_move)
    # o_ref:   (TP, H)     f32 output
    H = o_ref.shape[-1]
    x = x_ref[...]                                                # (TP, I) f32

    # --- single MXU matmul: dense projection and pooling side by side ---
    res = jnp.dot(x.astype(jnp.bfloat16), w_ref[...],
                  preferred_element_type=jnp.float32)             # (TP, 2H) f32
    proj = res[:, :H] + vec_ref[0:1, :]                           # dense + bias
    pooled = res[:, H:] * inv_k                                   # AvgPool1d

    # --- LayerNorm over hidden dim (f32) ---
    mu = jnp.mean(proj, axis=-1, keepdims=True)
    cen = proj - mu
    var = jnp.mean(cen * cen, axis=-1, keepdims=True)
    normed = cen * jax.lax.rsqrt(var + eps) * vec_ref[1:2, :]

    # --- residual add, RPReLU + LayerScale folded into select/scale/add ---
    s = normed + vec_ref[2:3, :] + pooled
    out = jnp.where(s >= 0, s * vec_ref[3:4, :], s * vec_ref[4:5, :])
    o_ref[...] = (out + vec_ref[5:6, :]).astype(o_ref.dtype)


def _choose_tile(total_rows):
    for t in (512, 256, 128, 64, 32, 16, 8):
        if total_rows % t == 0:
            return t
    return total_rows


def vit_output_forward(hidden_states, params, *, eps=1e-6, tile_n=None):
    """hidden_states: (B, N, I) float32; returns (B, N, H) float32."""
    B, N, I = hidden_states.shape
    H = params["dense_w"].shape[0]           # PyTorch Linear weight: (H, I)
    assert I % H == 0, "intermediate_size must be a multiple of hidden_size"
    assert H % 128 == 0, "hidden_size must be lane-dense (multiple of 128)"
    kpool = I // H

    T = B * N
    if tile_n is None:
        tile_n = _choose_tile(T)
    assert T % tile_n == 0
    num_tiles = T // tile_n

    # Flatten batch into rows -> clean 2-D tiles inside the kernel.
    x2 = hidden_states.reshape(T, I)

    # Dense weight^T (I, H) and pool-selection matrix (I, H), concatenated so
    # one matmul produces both the projection and the pooled residual.
    w_t = params["dense_w"].T.astype(jnp.float32)                    # (I, H)
    pool_sel = jnp.repeat(jnp.eye(H, dtype=jnp.float32), kpool, axis=0)  # (I, H)
    w_cat = jnp.concatenate([w_t, pool_sel], axis=1).astype(jnp.bfloat16)

    # Fold the learned pre-dense shift `move` into the dense bias (f32).
    bias_proj = params["move"].astype(jnp.float32) @ w_t + params["dense_b"]

    gamma = params["ln_gamma"].astype(jnp.float32)
    beta_shift = params["ln_beta"].astype(jnp.float32) - params["rprelu_move1"]
    ls_alpha = params["ls_alpha"].astype(jnp.float32)
    pos_scale = ls_alpha
    neg_scale = params["prelu_alpha"].astype(jnp.float32) * ls_alpha
    bias_final = params["rprelu_move2"].astype(jnp.float32) * ls_alpha \
        + params["ls_move"].astype(jnp.float32)

    vecs = jnp.zeros((8, H), jnp.float32)
    vecs = vecs.at[0].set(bias_proj)
    vecs = vecs.at[1].set(gamma)
    vecs = vecs.at[2].set(beta_shift)
    vecs = vecs.at[3].set(pos_scale)
    vecs = vecs.at[4].set(neg_scale)
    vecs = vecs.at[5].set(bias_final)

    kernel = functools.partial(_vit_output_kernel, eps=eps, inv_k=1.0 / kpool)
    const2d = lambda i: (0, 0)   # noqa: E731  (constant operands, fetched once)

    out2 = pl.pallas_call(
        kernel,
        out_shape=jax.ShapeDtypeStruct((T, H), jnp.float32),
        grid=(num_tiles,),
        in_specs=[
            pl.BlockSpec((tile_n, I), lambda i: (i, 0)),   # activations
            pl.BlockSpec((I, 2 * H), const2d),             # [W^T | pool]
            pl.BlockSpec((8, H), const2d),                 # packed constants
        ],
        out_specs=pl.BlockSpec((tile_n, H), lambda i: (i, 0)),
        compiler_params=pltpu.CompilerParams(
            dimension_semantics=("parallel",),
            vmem_limit_bytes=32 * 1024 * 1024),
    )(x2, w_cat, vecs)

    return out2.reshape(B, N, H)


def make_params(key, intermediate_size, hidden_size):
    ks = jax.random.split(key, 8)
    dense_w = 0.02 * jax.random.normal(
        ks[0], (hidden_size, intermediate_size), jnp.float32)
    dense_b = 0.01 * jax.random.normal(ks[1], (hidden_size,), jnp.float32)
    # `move` / shifts init to zero in the module; use small random values so the
    # correctness test actually exercises them.
    move = 0.01 * jax.random.normal(ks[2], (intermediate_size,), jnp.float32)
    ln_gamma = 1.0 + 0.05 * jax.random.normal(ks[3], (hidden_size,), jnp.float32)
    ln_beta = 0.05 * jax.random.normal(ks[4], (hidden_size,), jnp.float32)
    rprelu_move1 = 0.05 * jax.random.normal(ks[5], (hidden_size,), jnp.float32)
    prelu_alpha = 0.25 + 0.05 * jax.random.normal(ks[6], (hidden_size,), jnp.float32)
    rprelu_move2 = 0.05 * jax.random.normal(ks[7], (hidden_size,), jnp.float32)
    ls_alpha = 0.1 * jnp.ones((hidden_size,), jnp.float32)
    ls_move = jnp.zeros((hidden_size,), jnp.float32)
    return dict(dense_w=dense_w, dense_b=dense_b, move=move,
                ln_gamma=ln_gamma, ln_beta=ln_beta,
                rprelu_move1=rprelu_move1, prelu_alpha=prelu_alpha,
                rprelu_move2=rprelu_move2,
                ls_alpha=ls_alpha, ls_move=ls_move)


def _reference(hidden_states, params, eps=1e-6):
    # Pure-JAX f32 reference mirroring the PyTorch forward (eval mode).
    H = params["dense_w"].shape[0]
    B, N, I = hidden_states.shape
    kpool = I // H
    z = hidden_states + params["move"]
    proj = z @ params["dense_w"].T + params["dense_b"]
    mu = proj.mean(-1, keepdims=True)
    var = ((proj - mu) ** 2).mean(-1, keepdims=True)
    normed = (proj - mu) / jnp.sqrt(var + eps)
    normed = normed * params["ln_gamma"] + params["ln_beta"]
    pooled = hidden_states.reshape(B, N, H, kpool).mean(-1)   # AvgPool1d
    out = normed + pooled
    s = out - params["rprelu_move1"]
    s = jnp.where(s >= 0, s, s * params["prelu_alpha"]) + params["rprelu_move2"]
    return s * params["ls_alpha"] + params["ls_move"]


if __name__ == "__main__":
    # Small but lane-dense config: hidden=128, intermediate=512 (pool kernel 4),
    # batch=2, seq=512  ->  1024 rows, 512-row tiles, grid (2,).
    B, N = 2, 512
    I, Hd = 512, 128

    key = jax.random.PRNGKey(0)
    kx, kp = jax.random.split(key)
    hidden_states = jax.random.normal(kx, (B, N, I), jnp.float32)
    params = make_params(kp, I, Hd)

    out = vit_output_forward(hidden_states, params, eps=1e-6)
    out = jax.block_until_ready(out)

    ref = _reference(hidden_states, params, eps=1e-6)
    assert out.shape == (B, N, Hd)
    max_err = float(jnp.max(jnp.abs(out - ref)))
    assert jnp.allclose(out, ref, atol=2e-2, rtol=2e-2), f"max abs err {max_err}"

    print("KERNEL_OK")
</pallas_src>

<mosaic_0001>
module attributes {stable_mosaic.version = 11 : i64} {
  func.func @_vit_output_kernel(%arg0: i32, %arg1: memref<512x512xf32, #tpu.memory_space<vmem>>, %arg2: memref<512x256xbf16, #tpu.memory_space<vmem>>, %arg3: memref<8x128xf32, #tpu.memory_space<vmem>>, %arg4: memref<512x128xf32, #tpu.memory_space<vmem>>) attributes {dimension_semantics = [#tpu.dimension_semantics<parallel>], iteration_bounds = array<i64: 2>, scalar_prefetch = 0 : i64, scratch_operands = 0 : i64, tpu.core_type = #tpu.core_type<tc>, window_params = [{transform_indices = @transform_0, window_bounds = array<i64: 512, 512>}, {pipeline_mode = #tpu.pipeline_mode<synchronous>, transform_indices = @transform_1, window_bounds = array<i64: 512, 256>}, {pipeline_mode = #tpu.pipeline_mode<synchronous>, transform_indices = @transform_2, window_bounds = array<i64: 8, 128>}, {transform_indices = @transform_3, window_bounds = array<i64: 512, 128>}]} {
    %c0 = arith.constant 0 : index
    %c0_0 = arith.constant 0 : index
    %0 = vector.load %arg1[%c0, %c0_0] : memref<512x512xf32, #tpu.memory_space<vmem>>, vector<512x512xf32>
    %1 = arith.truncf %0 : vector<512x512xf32> to vector<512x512xbf16>
    %c0_1 = arith.constant 0 : index
    %c0_2 = arith.constant 0 : index
    %2 = vector.load %arg2[%c0_1, %c0_2] : memref<512x256xbf16, #tpu.memory_space<vmem>>, vector<512x256xbf16>
    %cst = arith.constant dense<0.000000e+00> : vector<512x256xf32>
    %3 = tpu.matmul %1, %2, %cst {dimension_numbers = #tpu.dot_dimension_numbers<[1], [0], [0], [1], [0, 0, 1, 1], [], []>} : vector<512x512xbf16>, vector<512x256xbf16>, vector<512x256xf32> -> vector<512x256xf32>
    %4 = vector.extract_strided_slice %3 {offsets = [0, 0], sizes = [512, 128], strides = [1, 1]} : vector<512x256xf32> to vector<512x128xf32>
    %c0_3 = arith.constant 0 : index
    %c0_4 = arith.constant 0 : index
    %5 = vector.load %arg3[%c0_3, %c0_4] : memref<8x128xf32, #tpu.memory_space<vmem>>, vector<1x128xf32>
    %6 = vector.broadcast %5 : vector<1x128xf32> to vector<512x128xf32>
    %7 = arith.addf %4, %6 : vector<512x128xf32>
    %8 = vector.extract_strided_slice %3 {offsets = [0, 128], sizes = [512, 128], strides = [1, 1]} : vector<512x256xf32> to vector<512x128xf32>
    %cst_5 = arith.constant 2.500000e-01 : f32
    %9 = vector.broadcast %cst_5 : f32 to vector<512x128xf32>
    %10 = arith.mulf %8, %9 : vector<512x128xf32>
    %cst_6 = arith.constant dense<0.000000e+00> : vector<512xf32>
    %11 = vector.multi_reduction <add>, %7, %cst_6 [1] : vector<512x128xf32> to vector<512xf32>
    %12 = vector.shape_cast %11 : vector<512xf32> to vector<512x1xf32>
    %cst_7 = arith.constant 1.280000e+02 : f32
    %13 = vector.broadcast %cst_7 : f32 to vector<512x1xf32>
    %14 = arith.divf %12, %13 : vector<512x1xf32>
    %15 = vector.broadcast %14 : vector<512x1xf32> to vector<512x128xf32>
    %16 = arith.subf %7, %15 : vector<512x128xf32>
    %17 = arith.mulf %16, %16 : vector<512x128xf32>
    %cst_8 = arith.constant dense<0.000000e+00> : vector<512xf32>
    %18 = vector.multi_reduction <add>, %17, %cst_8 [1] : vector<512x128xf32> to vector<512xf32>
    %19 = vector.shape_cast %18 : vector<512xf32> to vector<512x1xf32>
    %cst_9 = arith.constant 1.280000e+02 : f32
    %20 = vector.broadcast %cst_9 : f32 to vector<512x1xf32>
    %21 = arith.divf %19, %20 : vector<512x1xf32>
    %cst_10 = arith.constant 9.99999997E-7 : f32
    %22 = vector.broadcast %cst_10 : f32 to vector<512x1xf32>
    %23 = arith.addf %21, %22 : vector<512x1xf32>
    %24 = math.rsqrt %23 : vector<512x1xf32>
    %25 = vector.broadcast %24 : vector<512x1xf32> to vector<512x128xf32>
    %26 = arith.mulf %16, %25 : vector<512x128xf32>
    %c1 = arith.constant 1 : index
    %c0_11 = arith.constant 0 : index
    %27 = vector.load %arg3[%c1, %c0_11] : memref<8x128xf32, #tpu.memory_space<vmem>>, vector<1x128xf32>
    %28 = vector.broadcast %27 : vector<1x128xf32> to vector<512x128xf32>
    %29 = arith.mulf %26, %28 : vector<512x128xf32>
    %c2 = arith.constant 2 : index
    %c0_12 = arith.constant 0 : index
    %30 = vector.load %arg3[%c2, %c0_12] : memref<8x128xf32, #tpu.memory_space<vmem>>, vector<1x128xf32>
    %31 = vector.broadcast %30 : vector<1x128xf32> to vector<512x128xf32>
    %32 = arith.addf %29, %31 : vector<512x128xf32>
    %33 = arith.addf %32, %10 : vector<512x128xf32>
    %cst_13 = arith.constant 0.000000e+00 : f32
    %34 = vector.broadcast %cst_13 : f32 to vector<512x128xf32>
    %35 = arith.cmpf oge, %33, %34 : vector<512x128xf32>
    %c3 = arith.constant 3 : index
    %c0_14 = arith.constant 0 : index
    %36 = vector.load %arg3[%c3, %c0_14] : memref<8x128xf32, #tpu.memory_space<vmem>>, vector<1x128xf32>
    %37 = vector.broadcast %36 : vector<1x128xf32> to vector<512x128xf32>
    %38 = arith.mulf %33, %37 : vector<512x128xf32>
    %c4 = arith.constant 4 : index
    %c0_15 = arith.constant 0 : index
    %39 = vector.load %arg3[%c4, %c0_15] : memref<8x128xf32, #tpu.memory_space<vmem>>, vector<1x128xf32>
    %40 = vector.broadcast %39 : vector<1x128xf32> to vector<512x128xf32>
    %41 = arith.mulf %33, %40 : vector<512x128xf32>
    %42 = arith.select %35, %38, %41 : vector<512x128xi1>, vector<512x128xf32>
    %c5 = arith.constant 5 : index
    %c0_16 = arith.constant 0 : index
    %43 = vector.load %arg3[%c5, %c0_16] : memref<8x128xf32, #tpu.memory_space<vmem>>, vector<1x128xf32>
    %44 = vector.broadcast %43 : vector<1x128xf32> to vector<512x128xf32>
    %45 = arith.addf %42, %44 : vector<512x128xf32>
    %c0_17 = arith.constant 0 : index
    %c0_18 = arith.constant 0 : index
    %46 = vector.load %arg4[%c0_17, %c0_18] : memref<512x128xf32, #tpu.memory_space<vmem>>, vector<512x128xf32>
    tpu.vector_store %arg4[%c0_17, %c0_18], %45 {strides = array<i32>} : memref<512x128xf32, #tpu.memory_space<vmem>>, vector<512x128xf32>,
    return
  }
  func.func @transform_0(%arg0: i32) -> (i32, i32) {
    %c0_i32 = arith.constant 0 : i32
    %c0_i32_0 = arith.constant 0 : i32
    return %arg0, %c0_i32 : i32, i32
  }
  func.func @transform_1(%arg0: i32) -> (i32, i32) {
    %c0_i32 = arith.constant 0 : i32
    %c0_i32_0 = arith.constant 0 : i32
    %c0_i32_1 = arith.constant 0 : i32
    return %c0_i32, %c0_i32_0 : i32, i32
  }
  func.func @transform_2(%arg0: i32) -> (i32, i32) {
    %c0_i32 = arith.constant 0 : i32
    %c0_i32_0 = arith.constant 0 : i32
    %c0_i32_1 = arith.constant 0 : i32
    return %c0_i32, %c0_i32_0 : i32, i32
  }
  func.func @transform_3(%arg0: i32) -> (i32, i32) {
    %c0_i32 = arith.constant 0 : i32
    %c0_i32_0 = arith.constant 0 : i32
    return %arg0, %c0_i32 : i32, i32
  }
}

</mosaic_0001>

<llo_original>
// kernel: tpu_custom_call.1
$region0: #{tpu_custom_call.1}
  #allocation0 [shape = 'u32[]', space=smem, size = 0x4, offset = 0x4, fixed_abs, tag = 'smem constant byte address 0x4 - core index']
  #allocation1 [shape = 'u32[144,128]{1,0:T(1,128)}', space=vmem, size = 0x12000, scoped, tag = 'internal scratch']
  %s0 = inlined_call_operand.hbm [shape: f32[1024,512], index: 0, kind: input, shape index: {}]
  %s1 = inlined_call_operand.hbm [shape: bf16[512,256], index: 1, kind: input, shape index: {}]
  %s2 = inlined_call_operand.hbm [shape: f32[8,128], index: 2, kind: input, shape index: {}]
  %s3 = inlined_call_operand.hbm [shape: f32[1024,128], index: 3, kind: output, shape index: {}]
  %s4 = sld [smem:[#allocation0]]
  $region57: #{tpu_custom_call.1} parent=0
    _
  %s6 = ssub.s32 1, %s4
  %s7 = scalar_select 0, %s6, %s4
  $region1: #{tpu_custom_call.1} parent=0
    #allocation2 [shape = 'u8[2097152]{0}', space=vmem, size = 0x200000, scoped, tag = 'input window, operand 0']
    #allocation3 [shape = 's32[2]{0}', space=sflag, size = 0x8, scoped, tag = 'scoped memory for tpu_custom_call.1']
    #allocation4 [shape = 's32[2]{0}', space=sflag, size = 0x8, scoped, tag = 'scoped memory for tpu_custom_call.1']
    #allocation5 [shape = 'u8[262144]{0}', space=vmem, size = 0x40000, scoped, tag = 'input window, operand 1, single buffered']
    #allocation6 [shape = 's32[1]{0}', space=sflag, size = 0x4, scoped, tag = 'scoped memory for tpu_custom_call.1']
    #allocation7 [shape = 'u8[4096]{0}', space=vmem, size = 0x1000, scoped, tag = 'input window, operand 2, single buffered']
    #allocation8 [shape = 'u8[524288]{0}', space=vmem, size = 0x80000, scoped, tag = 'output window, operand 0']
    %8 = vsyncpa [#allocation3], 0
    %s9 = scalar_lea.sflag [#allocation3], 1
    %10 = vsyncpa %s9, 0
    %11 = vsyncpa [#allocation6], 0
    %12 = vsyncpa [#allocation4], 0
    %s13 = scalar_lea.sflag [#allocation4], 1
    %14 = vsyncpa %s13, 0
    loop: start=0, step=1, limit=4
    $region2: #{tpu_custom_call.1} parent=1 // loop_pre_header
      _
    $region3: #{tpu_custom_call.1} parent=1 // loop_header
      %s16 = sphi 0, %s20
      %p17 = scmp.ge.s32.totalorder %s16, 4
      %s26 = sphi 0, %s28
      %s29 = sphi 0, %s26
      %s30 = sphi 0, %s29
      %s46 = sphi 0, %s30
      %s50 = sphi 0, %s50
      %s52 = sphi 0, %s50
      %s53 = sphi 0, %s52
      %s67 = sphi 0, %s53
      %s71 = sphi 0, %s71
      %s73 = sphi 0, %s71
      %s74 = sphi 0, %s73
      %s88 = sphi 0, %s74
      %s94 = sphi 0, %s96
      %s97 = sphi 0, %s94
      %s98 = sphi 0, %s97
      %s114 = sphi 0, %s98
    $region4: #{tpu_custom_call.1} parent=1 // loop_header_branch
      %19 = sbr.rel (%p17) target = $region8
    $region5: #{tpu_custom_call.1} parent=1 // loop_body
      %s21 = ssub.s32 %s16, 1
      %s22 = ssub.s32 %s16, 2
      %s23 = sadd.s32 %s16, 1
      %s24 = ssub.s32 %s16, %s23
      %p25 = scmp.eq.s32.totalorder %s24, 0
      %s27 = sadd.s32 %s26, 1
      %s28 = scalar_select %p25, %s26, %s27
      %p31 = pneg %p25
      %p32 = scmp.eq.s32.totalorder %s16, 1
      %p33 = por %p31, %p32
      %p34 = scmp.ne.s32.totalorder %s26, %s29
      %p35 = scmp.eq.s32.totalorder %s16, 0
      %p36 = por %p34, %p35
      %p37 = scmp.ne.s32.totalorder %s26, %s29
      %p38 = scmp.eq.s32.totalorder %s21, 1
      %p39 = por %p37, %p38
      %p40 = scmp.ne.s32.totalorder %s29, %s30
      %p41 = scmp.eq.s32.totalorder %s21, 0
      %p42 = por %p40, %p41
      %p43 = scmp.ne.s32.totalorder %s29, %s30
      %p44 = scmp.eq.s32.totalorder %s22, 1
      %p45 = por %p43, %p44
      %p47 = scmp.ne.s32.totalorder %s30, %s46
      %p48 = scmp.eq.s32.totalorder %s22, 0
      %p49 = por %p47, %p48
      %s51 = sadd.s32 %s50, 1
      %p54 = scmp.eq.s32.totalorder %s16, 1
      %p55 = scmp.ne.s32.totalorder %s50, %s52
      %p56 = scmp.eq.s32.totalorder %s16, 0
      %p57 = por %p55, %p56
      %p58 = scmp.ne.s32.totalorder %s50, %s52
      %p59 = scmp.eq.s32.totalorder %s21, 1
      %p60 = por %p58, %p59
      %p61 = scmp.ne.s32.totalorder %s52, %s53
      %p62 = scmp.eq.s32.totalorder %s21, 0
      %p63 = por %p61, %p62
      %p64 = scmp.ne.s32.totalorder %s52, %s53
      %p65 = scmp.eq.s32.totalorder %s22, 1
      %p66 = por %p64, %p65
      %p68 = scmp.ne.s32.totalorder %s53, %s67
      %p69 = scmp.eq.s32.totalorder %s22, 0
      %p70 = por %p68, %p69
      %s72 = sadd.s32 %s71, 1
      %p75 = scmp.eq.s32.totalorder %s16, 1
      %p76 = scmp.ne.s32.totalorder %s71, %s73
      %p77 = scmp.eq.s32.totalorder %s16, 0
      %p78 = por %p76, %p77
      %p79 = scmp.ne.s32.totalorder %s71, %s73
      %p80 = scmp.eq.s32.totalorder %s21, 1
      %p81 = por %p79, %p80
      %p82 = scmp.ne.s32.totalorder %s73, %s74
      %p83 = scmp.eq.s32.totalorder %s21, 0
      %p84 = por %p82, %p83
      %p85 = scmp.ne.s32.totalorder %s73, %s74
      %p86 = scmp.eq.s32.totalorder %s22, 1
      %p87 = por %p85, %p86
      %p89 = scmp.ne.s32.totalorder %s74, %s88
      %p90 = scmp.eq.s32.totalorder %s22, 0
      %p91 = por %p89, %p90
      %s92 = ssub.s32 %s16, %s23
      %p93 = scmp.eq.s32.totalorder %s92, 0
      %s95 = sadd.s32 %s94, 1
      %s96 = scalar_select %p93, %s94, %s95
      %p99 = pneg %p93
      %p100 = scmp.eq.s32.totalorder %s16, 1
      %p101 = por %p99, %p100
      %p102 = scmp.ne.s32.totalorder %s94, %s97
      %p103 = scmp.eq.s32.totalorder %s16, 0
      %p104 = por %p102, %p103
      %p105 = scmp.ne.s32.totalorder %s94, %s97
      %p106 = scmp.eq.s32.totalorder %s21, 1
      %p107 = por %p105, %p106
      %p108 = scmp.ne.s32.totalorder %s97, %s98
      %p109 = scmp.eq.s32.totalorder %s21, 0
      %p110 = por %p108, %p109
      %p111 = scmp.ne.s32.totalorder %s97, %s98
      %p112 = scmp.eq.s32.totalorder %s22, 1
      %p113 = por %p111, %p112
      %p115 = scmp.ne.s32.totalorder %s98, %s114
      %p116 = scmp.eq.s32.totalorder %s22, 0
      %p117 = por %p115, %p116
      %p118 = scmp.le.s32.totalorder 1, %s16
      %p119 = scmp.lt.s32.totalorder %s16, 3
      %p120 = pnand %p118, %p119
      %p121 = pneg %p120
      // Predicated region
      $region9: #{tpu_custom_call.1} parent=5 // pred_check
        _
      $region10: #{tpu_custom_call.1} parent=5 // pred_check_branch
        %123 = sbr.rel (%p120) target = $region12
      $region11: #{tpu_custom_call.1} parent=5 // pred_region
        %s124 = ssub.s32 %s16, 1
        // Predicated region
        $region13: #{tpu_custom_call.1} parent=11 // pred_check
          %p125 = pneg %p63
        $region14: #{tpu_custom_call.1} parent=11 // pred_check_branch
          %127 = sbr.rel (%p125) target = $region16
        $region15: #{tpu_custom_call.1} parent=11 // pred_region
          %s129 = ssub.s32 8192, 8192
          %130 = vsyncadd [#allocation6], %s129
          %s131 = sshll.u32 [#allocation5], 4
          %s132 = int_to_ptr.vmem [resolvable:$true] %s131
          %137 = dma.hbm_to_vmem [thread:$0]  %s1, 8192, %s132, [#allocation6], 128, 128, 8
        $region16: #{tpu_custom_call.1} parent=11 // pred_fallthru
          _
        // Predicated region
        $region17: #{tpu_custom_call.1} parent=11 // pred_check
          %p138 = pneg %p84
        $region18: #{tpu_custom_call.1} parent=11 // pred_check_branch
          %140 = sbr.rel (%p138) target = $region20
        $region19: #{tpu_custom_call.1} parent=11 // pred_region
          %s142 = ssub.s32 128, 128
          %143 = vsyncadd [#allocation6], %s142
          %s145 = sshll.u32 [#allocation7], 4
          %s146 = int_to_ptr.vmem [resolvable:$true] %s145
          %148 = dma.hbm_to_vmem [thread:$0]  %s2, 128, %s146, [#allocation6]
        $region20: #{tpu_custom_call.1} parent=11 // pred_fallthru
          _
      $region12: #{tpu_custom_call.1} parent=5 // pred_fallthru
        _
      %p149 = scmp.lt.s32.totalorder %s16, 2
      // Predicated region
      $region21: #{tpu_custom_call.1} parent=5 // pred_check
        %p150 = pneg %p149
      $region22: #{tpu_custom_call.1} parent=5 // pred_check_branch
        %152 = sbr.rel (%p150) target = $region24
      $region23: #{tpu_custom_call.1} parent=5 // pred_region
        // Predicated region
        $region25: #{tpu_custom_call.1} parent=23 // pred_check
          %p153 = pneg %p36
        $region26: #{tpu_custom_call.1} parent=23 // pred_check_branch
          %155 = sbr.rel (%p153) target = $region28
        $region27: #{tpu_custom_call.1} parent=23 // pred_region
          %s156 = sand.u32 %s26, 1
          %s157 = scalar_lea.sflag [#allocation3], %s156
          %s158 = sand.u32 %s26, 1
          %s159 = smul.addr %s158, 2048
          %s160 = scalar_lea.vmem [#allocation2], %s159
          %s161 = smul.u32 64, %s16
          %s163 = ssub.s32 32768, 32768
          %164 = vsyncadd %s157, %s163
          %s165 = smul.addr %s161, 4
          %s166 = smul.addr %s165, 128
          %s167 = scalar_lea.hbm %s0, %s166
          %s168 = sshll.u32 %s160, 4
          %s169 = int_to_ptr.vmem [resolvable:$true] %s168
          %174 = dma.hbm_to_vmem [thread:$0]  %s167, 32768, %s169, %s157, 512, 512, 32
        $region28: #{tpu_custom_call.1} parent=23 // pred_fallthru
          _
      $region24: #{tpu_custom_call.1} parent=5 // pred_fallthru
        _
      %p175 = scmp.le.s32.totalorder 1, %s16
      %p176 = scmp.lt.s32.totalorder %s16, 3
      %p177 = pnand %p175, %p176
      %p178 = pneg %p177
      // Predicated region
      $region29: #{tpu_custom_call.1} parent=5 // pred_check
        _
      $region30: #{tpu_custom_call.1} parent=5 // pred_check_branch
        %180 = sbr.rel (%p177) target = $region32
      $region31: #{tpu_custom_call.1} parent=5 // pred_region
        %s181 = ssub.s32 %s16, 1
        %s182 = sand.u32 %s29, 1
        %s183 = scalar_lea.sflag [#allocation3], %s182
        %s184 = sand.u32 %s29, 1
        %s185 = smul.addr %s184, 2048
        %s186 = scalar_lea.vmem [#allocation2], %s185
        // Predicated region
        $region33: #{tpu_custom_call.1} parent=31 // pred_check
          %p187 = pneg %p42
        $region34: #{tpu_custom_call.1} parent=31 // pred_check_branch
          %189 = sbr.rel (%p187) target = $region36
        $region35: #{tpu_custom_call.1} parent=31 // pred_region
          %190 = dma.done %s183, 32768
        $region36: #{tpu_custom_call.1} parent=31 // pred_fallthru
          _
        // Predicated region
        $region37: #{tpu_custom_call.1} parent=31 // pred_check
          %p191 = pneg %p63
        $region38: #{tpu_custom_call.1} parent=31 // pred_check_branch
          %193 = sbr.rel (%p191) target = $region40
        $region39: #{tpu_custom_call.1} parent=31 // pred_region
          %194 = dma.done [#allocation6], 8192
        $region40: #{tpu_custom_call.1} parent=31 // pred_fallthru
          _
        // Predicated region
        $region41: #{tpu_custom_call.1} parent=31 // pred_check
          %p195 = pneg %p84
        $region42: #{tpu_custom_call.1} parent=31 // pred_check_branch
          %197 = sbr.rel (%p195) target = $region44
        $region43: #{tpu_custom_call.1} parent=31 // pred_region
          %198 = dma.done [#allocation6], 128
        $region44: #{tpu_custom_call.1} parent=31 // pred_fallthru
          _
        %s199 = sand.u32 %s29, 1
        %s200 = scalar_lea.sflag [#allocation3], %s199
        %s201 = sand.u32 %s29, 1
        %s202 = smul.addr %s201, 2048
        %s203 = scalar_lea.vmem [#allocation2], %s202
        %p204 = pneg %p42
        %p205 = pneg %p39
        %p206 = pneg %p63
        %p207 = pneg %p60
        %p208 = pneg %p84
        %p209 = pneg %p81
        %p210 = pneg %p110
        %p211 = pneg %p107
        %s212 = sand.u32 %s97, 1
        %s213 = scalar_lea.sflag [#allocation4], %s212
        %s214 = sand.u32 %s97, 1
        %s215 = smul.addr %s214, 512
        %s216 = scalar_lea.vmem [#allocation8], %s215
        %s217 = smul.u32 64, %s21
        %s218 = smul.u32 64, %s21
        %v219 = vld [vmem:[%s186] sm:$0xff]
        %v220 = vld [vmem:[%s186 + $0x8] sm:$0xff]
        %v221 = vld [vmem:[%s186 + $0x10] sm:$0xff]
        %v222 = vld [vmem:[%s186 + $0x18] sm:$0xff]
        %v223 = vld [vmem:[%s186 + $0x20] sm:$0xff]
        %v224 = vld [vmem:[%s186 + $0x28] sm:$0xff]
        %v225 = vld [vmem:[%s186 + $0x30] sm:$0xff]
        %v226 = vld [vmem:[%s186 + $0x38] sm:$0xff]
        %v227 = vld [vmem:[%s186 + $0x40] sm:$0xff]
        %v228 = vld [vmem:[%s186 + $0x48] sm:$0xff]
        %v229 = vld [vmem:[%s186 + $0x50] sm:$0xff]
        %v230 = vld [vmem:[%s186 + $0x58] sm:$0xff]
        %v231 = vld [vmem:[%s186 + $0x60] sm:$0xff]
        %v232 = vld [vmem:[%s186 + $0x68] sm:$0xff]
        %v233 = vld [vmem:[%s186 + $0x70] sm:$0xff]
        %v234 = vld [vmem:[%s186 + $0x78] sm:$0xff]
        %v235 = vld [vmem:[%s186 + $0x80] sm:$0xff]
        %v236 = vld [vmem:[%s186 + $0x88] sm:$0xff]
        %v237 = vld [vmem:[%s186 + $0x90] sm:$0xff]
        %v238 = vld [vmem:[%s186 + $0x98] sm:$0xff]
        %v239 = vld [vmem:[%s186 + $0xa0] sm:$0xff]
        %v240 = vld [vmem:[%s186 + $0xa8] sm:$0xff]
        %v241 = vld [vmem:[%s186 + $0xb0] sm:$0xff]
        %v242 = vld [vmem:[%s186 + $0xb8] sm:$0xff]
        %v243 = vld [vmem:[%s186 + $0xc0] sm:$0xff]
        %v244 = vld [vmem:[%s186 + $0xc8] sm:$0xff]
        %v245 = vld [vmem:[%s186 + $0xd0] sm:$0xff]
        %v246 = vld [vmem:[%s186 + $0xd8] sm:$0xff]
        %v247 = vld [vmem:[%s186 + $0xe0] sm:$0xff]
        %v248 = vld [vmem:[%s186 + $0xe8] sm:$0xff]
        %v249 = vld [vmem:[%s186 + $0xf0] sm:$0xff]
        %v250 = vld [vmem:[%s186 + $0xf8] sm:$0xff]
        %v251 = vld [vmem:[%s186 + $0x100] sm:$0xff]
        %v252 = vld [vmem:[%s186 + $0x108] sm:$0xff]
        %v253 = vld [vmem:[%s186 + $0x110] sm:$0xff]
        %v254 = vld [vmem:[%s186 + $0x118] sm:$0xff]
        %v255 = vld [vmem:[%s186 + $0x120] sm:$0xff]
        %v256 = vld [vmem:[%s186 + $0x128] sm:$0xff]
        %v257 = vld [vmem:[%s186 + $0x130] sm:$0xff]
        %v258 = vld [vmem:[%s186 + $0x138] sm:$0xff]
        %v259 = vld [vmem:[%s186 + $0x140] sm:$0xff]
        %v260 = vld [vmem:[%s186 + $0x148] sm:$0xff]
        %v261 = vld [vmem:[%s186 + $0x150] sm:$0xff]
        %v262 = vld [vmem:[%s186 + $0x158] sm:$0xff]
        %v263 = vld [vmem:[%s186 + $0x160] sm:$0xff]
        %v264 = vld [vmem:[%s186 + $0x168] sm:$0xff]
        %v265 = vld [vmem:[%s186 + $0x170] sm:$0xff]
        %v266 = vld [vmem:[%s186 + $0x178] sm:$0xff]
        %v267 = vld [vmem:[%s186 + $0x180] sm:$0xff]
        %v268 = vld [vmem:[%s186 + $0x188] sm:$0xff]
        %v269 = vld [vmem:[%s186 + $0x190] sm:$0xff]
        %v270 = vld [vmem:[%s186 + $0x198] sm:$0xff]
        %v271 = vld [vmem:[%s186 + $0x1a0] sm:$0xff]
        %v272 = vld [vmem:[%s186 + $0x1a8] sm:$0xff]
        %v273 = vld [vmem:[%s186 + $0x1b0] sm:$0xff]
        %v274 = vld [vmem:[%s186 + $0x1b8] sm:$0xff]
        %v275 = vld [vmem:[%s186 + $0x1c0] sm:$0xff]
        %v276 = vld [vmem:[%s186 + $0x1c8] sm:$0xff]
        %v277 = vld [vmem:[%s186 + $0x1d0] sm:$0xff]
        %v278 = vld [vmem:[%s186 + $0x1d8] sm:$0xff]
        %v279 = vld [vmem:[%s186 + $0x1e0] sm:$0xff]
        %v280 = vld [vmem:[%s186 + $0x1e8] sm:$0xff]
        %v281 = vld [vmem:[%s186 + $0x1f0] sm:$0xff]
        %v282 = vld [vmem:[%s186 + $0x1f8] sm:$0xff]
        %v283 = vld [vmem:[%s186 + $0x200] sm:$0xff]
        %v284 = vld [vmem:[%s186 + $0x208] sm:$0xff]
        %v285 = vld [vmem:[%s186 + $0x210] sm:$0xff]
        %v286 = vld [vmem:[%s186 + $0x218] sm:$0xff]
        %v287 = vld [vmem:[%s186 + $0x220] sm:$0xff]
        %v288 = vld [vmem:[%s186 + $0x228] sm:$0xff]
        %v289 = vld [vmem:[%s186 + $0x230] sm:$0xff]
        %v290 = vld [vmem:[%s186 + $0x238] sm:$0xff]
        %v291 = vld [vmem:[%s186 + $0x240] sm:$0xff]
        %v292 = vld [vmem:[%s186 + $0x248] sm:$0xff]
        %v293 = vld [vmem:[%s186 + $0x250] sm:$0xff]
        %v294 = vld [vmem:[%s186 + $0x258] sm:$0xff]
        %v295 = vld [vmem:[%s186 + $0x260] sm:$0xff]
        %v296 = vld [vmem:[%s186 + $0x268] sm:$0xff]
        %v297 = vld [vmem:[%s186 + $0x270] sm:$0xff]
        %v298 = vld [vmem:[%s186 + $0x278] sm:$0xff]
        %v299 = vld [vmem:[%s186 + $0x280] sm:$0xff]
        %v300 = vld [vmem:[%s186 + $0x288] sm:$0xff]
        %v301 = vld [vmem:[%s186 + $0x290] sm:$0xff]
        %v302 = vld [vmem:[%s186 + $0x298] sm:$0xff]
        %v303 = vld [vmem:[%s186 + $0x2a0] sm:$0xff]
        %v304 = vld [vmem:[%s186 + $0x2a8] sm:$0xff]
        %v305 = vld [vmem:[%s186 + $0x2b0] sm:$0xff]
        %v306 = vld [vmem:[%s186 + $0x2b8] sm:$0xff]
        %v307 = vld [vmem:[%s186 + $0x2c0] sm:$0xff]
        %v308 = vld [vmem:[%s186 + $0x2c8] sm:$0xff]
        %v309 = vld [vmem:[%s186 + $0x2d0] sm:$0xff]
        %v310 = vld [vmem:[%s186 + $0x2d8] sm:$0xff]
        %v311 = vld [vmem:[%s186 + $0x2e0] sm:$0xff]
        %v312 = vld [vmem:[%s186 + $0x2e8] sm:$0xff]
        %v313 = vld [vmem:[%s186 + $0x2f0] sm:$0xff]
        %v314 = vld [vmem:[%s186 + $0x2f8] sm:$0xff]
        %v315 = vld [vmem:[%s186 + $0x300] sm:$0xff]
        %v316 = vld [vmem:[%s186 + $0x308] sm:$0xff]
        %v317 = vld [vmem:[%s186 + $0x310] sm:$0xff]
        %v318 = vld [vmem:[%s186 + $0x318] sm:$0xff]
        %v319 = vld [vmem:[%s186 + $0x320] sm:$0xff]
        %v320 = vld [vmem:[%s186 + $0x328] sm:$0xff]
        %v321 = vld [vmem:[%s186 + $0x330] sm:$0xff]
        %v322 = vld [vmem:[%s186 + $0x338] sm:$0xff]
        %v323 = vld [vmem:[%s186 + $0x340] sm:$0xff]
        %v324 = vld [vmem:[%s186 + $0x348] sm:$0xff]
        %v325 = vld [vmem:[%s186 + $0x350] sm:$0xff]
        %v326 = vld [vmem:[%s186 + $0x358] sm:$0xff]
        %v327 = vld [vmem:[%s186 + $0x360] sm:$0xff]
        %v328 = vld [vmem:[%s186 + $0x368] sm:$0xff]
        %v329 = vld [vmem:[%s186 + $0x370] sm:$0xff]
        %v330 = vld [vmem:[%s186 + $0x378] sm:$0xff]
        %v331 = vld [vmem:[%s186 + $0x380] sm:$0xff]
        %v332 = vld [vmem:[%s186 + $0x388] sm:$0xff]
        %v333 = vld [vmem:[%s186 + $0x390] sm:$0xff]
        %v334 = vld [vmem:[%s186 + $0x398] sm:$0xff]
        %v335 = vld [vmem:[%s186 + $0x3a0] sm:$0xff]
        %v336 = vld [vmem:[%s186 + $0x3a8] sm:$0xff]
        %v337 = vld [vmem:[%s186 + $0x3b0] sm:$0xff]
        %v338 = vld [vmem:[%s186 + $0x3b8] sm:$0xff]
        %v339 = vld [vmem:[%s186 + $0x3c0] sm:$0xff]
        %v340 = vld [vmem:[%s186 + $0x3c8] sm:$0xff]
        %v341 = vld [vmem:[%s186 + $0x3d0] sm:$0xff]
        %v342 = vld [vmem:[%s186 + $0x3d8] sm:$0xff]
        %v343 = vld [vmem:[%s186 + $0x3e0] sm:$0xff]
        %v344 = vld [vmem:[%s186 + $0x3e8] sm:$0xff]
        %v345 = vld [vmem:[%s186 + $0x3f0] sm:$0xff]
        %v346 = vld [vmem:[%s186 + $0x3f8] sm:$0xff]
        %v347 = vld [vmem:[%s186 + $0x400] sm:$0xff]
        %v348 = vld [vmem:[%s186 + $0x408] sm:$0xff]
        %v349 = vld [vmem:[%s186 + $0x410] sm:$0xff]
        %v350 = vld [vmem:[%s186 + $0x418] sm:$0xff]
        %v351 = vld [vmem:[%s186 + $0x420] sm:$0xff]
        %v352 = vld [vmem:[%s186 + $0x428] sm:$0xff]
        %v353 = vld [vmem:[%s186 + $0x430] sm:$0xff]
        %v354 = vld [vmem:[%s186 + $0x438] sm:$0xff]
        %v355 = vld [vmem:[%s186 + $0x440] sm:$0xff]
        %v356 = vld [vmem:[%s186 + $0x448] sm:$0xff]
        %v357 = vld [vmem:[%s186 + $0x450] sm:$0xff]
        %v358 = vld [vmem:[%s186 + $0x458] sm:$0xff]
        %v359 = vld [vmem:[%s186 + $0x460] sm:$0xff]
        %v360 = vld [vmem:[%s186 + $0x468] sm:$0xff]
        %v361 = vld [vmem:[%s186 + $0x470] sm:$0xff]
        %v362 = vld [vmem:[%s186 + $0x478] sm:$0xff]
        %v363 = vld [vmem:[%s186 + $0x480] sm:$0xff]
        %v364 = vld [vmem:[%s186 + $0x488] sm:$0xff]
        %v365 = vld [vmem:[%s186 + $0x490] sm:$0xff]
        %v366 = vld [vmem:[%s186 + $0x498] sm:$0xff]
        %v367 = vld [vmem:[%s186 + $0x4a0] sm:$0xff]
        %v368 = vld [vmem:[%s186 + $0x4a8] sm:$0xff]
        %v369 = vld [vmem:[%s186 + $0x4b0] sm:$0xff]
        %v370 = vld [vmem:[%s186 + $0x4b8] sm:$0xff]
        %v371 = vld [vmem:[%s186 + $0x4c0] sm:$0xff]
        %v372 = vld [vmem:[%s186 + $0x4c8] sm:$0xff]
        %v373 = vld [vmem:[%s186 + $0x4d0] sm:$0xff]
        %v374 = vld [vmem:[%s186 + $0x4d8] sm:$0xff]
        %v375 = vld [vmem:[%s186 + $0x4e0] sm:$0xff]
        %v376 = vld [vmem:[%s186 + $0x4e8] sm:$0xff]
        %v377 = vld [vmem:[%s186 + $0x4f0] sm:$0xff]
        %v378 = vld [vmem:[%s186 + $0x4f8] sm:$0xff]
        %v379 = vld [vmem:[%s186 + $0x500] sm:$0xff]
        %v380 = vld [vmem:[%s186 + $0x508] sm:$0xff]
        %v381 = vld [vmem:[%s186 + $0x510] sm:$0xff]
        %v382 = vld [vmem:[%s186 + $0x518] sm:$0xff]
        %v383 = vld [vmem:[%s186 + $0x520] sm:$0xff]
        %v384 = vld [vmem:[%s186 + $0x528] sm:$0xff]
        %v385 = vld [vmem:[%s186 + $0x530] sm:$0xff]
        %v386 = vld [vmem:[%s186 + $0x538] sm:$0xff]
        %v387 = vld [vmem:[%s186 + $0x540] sm:$0xff]
        %v388 = vld [vmem:[%s186 + $0x548] sm:$0xff]
        %v389 = vld [vmem:[%s186 + $0x550] sm:$0xff]
        %v390 = vld [vmem:[%s186 + $0x558] sm:$0xff]
        %v391 = vld [vmem:[%s186 + $0x560] sm:$0xff]
        %v392 = vld [vmem:[%s186 + $0x568] sm:$0xff]
        %v393 = vld [vmem:[%s186 + $0x570] sm:$0xff]
        %v394 = vld [vmem:[%s186 + $0x578] sm:$0xff]
        %v395 = vld [vmem:[%s186 + $0x580] sm:$0xff]
        %v396 = vld [vmem:[%s186 + $0x588] sm:$0xff]
        %v397 = vld [vmem:[%s186 + $0x590] sm:$0xff]
        %v398 = vld [vmem:[%s186 + $0x598] sm:$0xff]
        %v399 = vld [vmem:[%s186 + $0x5a0] sm:$0xff]
        %v400 = vld [vmem:[%s186 + $0x5a8] sm:$0xff]
        %v401 = vld [vmem:[%s186 + $0x5b0] sm:$0xff]
        %v402 = vld [vmem:[%s186 + $0x5b8] sm:$0xff]
        %v403 = vld [vmem:[%s186 + $0x5c0] sm:$0xff]
        %v404 = vld [vmem:[%s186 + $0x5c8] sm:$0xff]
        %v405 = vld [vmem:[%s186 + $0x5d0] sm:$0xff]
        %v406 = vld [vmem:[%s186 + $0x5d8] sm:$0xff]
        %v407 = vld [vmem:[%s186 + $0x5e0] sm:$0xff]
        %v408 = vld [vmem:[%s186 + $0x5e8] sm:$0xff]
        %v409 = vld [vmem:[%s186 + $0x5f0] sm:$0xff]
        %v410 = vld [vmem:[%s186 + $0x5f8] sm:$0xff]
        %v411 = vld [vmem:[%s186 + $0x600] sm:$0xff]
        %v412 = vld [vmem:[%s186 + $0x608] sm:$0xff]
        %v413 = vld [vmem:[%s186 + $0x610] sm:$0xff]
        %v414 = vld [vmem:[%s186 + $0x618] sm:$0xff]
        %v415 = vld [vmem:[%s186 + $0x620] sm:$0xff]
        %v416 = vld [vmem:[%s186 + $0x628] sm:$0xff]
        %v417 = vld [vmem:[%s186 + $0x630] sm:$0xff]
        %v418 = vld [vmem:[%s186 + $0x638] sm:$0xff]
        %v419 = vld [vmem:[%s186 + $0x640] sm:$0xff]
        %v420 = vld [vmem:[%s186 + $0x648] sm:$0xff]
        %v421 = vld [vmem:[%s186 + $0x650] sm:$0xff]
        %v422 = vld [vmem:[%s186 + $0x658] sm:$0xff]
        %v423 = vld [vmem:[%s186 + $0x660] sm:$0xff]
        %v424 = vld [vmem:[%s186 + $0x668] sm:$0xff]
        %v425 = vld [vmem:[%s186 + $0x670] sm:$0xff]
        %v426 = vld [vmem:[%s186 + $0x678] sm:$0xff]
        %v427 = vld [vmem:[%s186 + $0x680] sm:$0xff]
        %v428 = vld [vmem:[%s186 + $0x688] sm:$0xff]
        %v429 = vld [vmem:[%s186 + $0x690] sm:$0xff]
        %v430 = vld [vmem:[%s186 + $0x698] sm:$0xff]
        %v431 = vld [vmem:[%s186 + $0x6a0] sm:$0xff]
        %v432 = vld [vmem:[%s186 + $0x6a8] sm:$0xff]
        %v433 = vld [vmem:[%s186 + $0x6b0] sm:$0xff]
        %v434 = vld [vmem:[%s186 + $0x6b8] sm:$0xff]
        %v435 = vld [vmem:[%s186 + $0x6c0] sm:$0xff]
        %v436 = vld [vmem:[%s186 + $0x6c8] sm:$0xff]
        %v437 = vld [vmem:[%s186 + $0x6d0] sm:$0xff]
        %v438 = vld [vmem:[%s186 + $0x6d8] sm:$0xff]
        %v439 = vld [vmem:[%s186 + $0x6e0] sm:$0xff]
        %v440 = vld [vmem:[%s186 + $0x6e8] sm:$0xff]
        %v441 = vld [vmem:[%s186 + $0x6f0] sm:$0xff]
        %v442 = vld [vmem:[%s186 + $0x6f8] sm:$0xff]
        %v443 = vld [vmem:[%s186 + $0x700] sm:$0xff]
        %v444 = vld [vmem:[%s186 + $0x708] sm:$0xff]
        %v445 = vld [vmem:[%s186 + $0x710] sm:$0xff]
        %v446 = vld [vmem:[%s186 + $0x718] sm:$0xff]
        %v447 = vld [vmem:[%s186 + $0x720] sm:$0xff]
        %v448 = vld [vmem:[%s186 + $0x728] sm:$0xff]
        %v449 = vld [vmem:[%s186 + $0x730] sm:$0xff]
        %v450 = vld [vmem:[%s186 + $0x738] sm:$0xff]
        %v451 = vld [vmem:[%s186 + $0x740] sm:$0xff]
        %v452 = vld [vmem:[%s186 + $0x748] sm:$0xff]
        %v453 = vld [vmem:[%s186 + $0x750] sm:$0xff]
        %v454 = vld [vmem:[%s186 + $0x758] sm:$0xff]
        %v455 = vld [vmem:[%s186 + $0x760] sm:$0xff]
        %v456 = vld [vmem:[%s186 + $0x768] sm:$0xff]
        %v457 = vld [vmem:[%s186 + $0x770] sm:$0xff]
        %v458 = vld [vmem:[%s186 + $0x778] sm:$0xff]
        %v459 = vld [vmem:[%s186 + $0x780] sm:$0xff]
        %v460 = vld [vmem:[%s186 + $0x788] sm:$0xff]
        %v461 = vld [vmem:[%s186 + $0x790] sm:$0xff]
        %v462 = vld [vmem:[%s186 + $0x798] sm:$0xff]
        %v463 = vld [vmem:[%s186 + $0x7a0] sm:$0xff]
        %v464 = vld [vmem:[%s186 + $0x7a8] sm:$0xff]
        %v465 = vld [vmem:[%s186 + $0x7b0] sm:$0xff]
        %v466 = vld [vmem:[%s186 + $0x7b8] sm:$0xff]
        %v467 = vld [vmem:[%s186 + $0x7c0] sm:$0xff]
        %v468 = vld [vmem:[%s186 + $0x7c8] sm:$0xff]
        %v469 = vld [vmem:[%s186 + $0x7d0] sm:$0xff]
        %v470 = vld [vmem:[%s186 + $0x7d8] sm:$0xff]
        %v471 = vld [vmem:[%s186 + $0x7e0] sm:$0xff]
        %v472 = vld [vmem:[%s186 + $0x7e8] sm:$0xff]
        %v473 = vld [vmem:[%s186 + $0x7f0] sm:$0xff]
        %v474 = vld [vmem:[%s186 + $0x7f8] sm:$0xff]
        %v475 = vpack.c.bf16 %v223, %v219
        %v476 = vpack.c.bf16 %v224, %v220
        %v477 = vpack.c.bf16 %v225, %v221
        %v478 = vpack.c.bf16 %v226, %v222
        %v479 = vpack.c.bf16 %v231, %v227
        %v480 = vpack.c.bf16 %v232, %v228
        %v481 = vpack.c.bf16 %v233, %v229
        %v482 = vpack.c.bf16 %v234, %v230
        %v483 = vpack.c.bf16 %v239, %v235
        %v484 = vpack.c.bf16 %v240, %v236
        %v485 = vpack.c.bf16 %v241, %v237
        %v486 = vpack.c.bf16 %v242, %v238
        %v487 = vpack.c.bf16 %v247, %v243
        %v488 = vpack.c.bf16 %v248, %v244
        %v489 = vpack.c.bf16 %v249, %v245
        %v490 = vpack.c.bf16 %v250, %v246
        %v491 = vpack.c.bf16 %v255, %v251
        %v492 = vpack.c.bf16 %v256, %v252
        %v493 = vpack.c.bf16 %v257, %v253
        %v494 = vpack.c.bf16 %v258, %v254
        %v495 = vpack.c.bf16 %v263, %v259
        %v496 = vpack.c.bf16 %v264, %v260
        %v497 = vpack.c.bf16 %v265, %v261
        %v498 = vpack.c.bf16 %v266, %v262
        %v499 = vpack.c.bf16 %v271, %v267
        %v500 = vpack.c.bf16 %v272, %v268
        %v501 = vpack.c.bf16 %v273, %v269
        %v502 = vpack.c.bf16 %v274, %v270
        %v503 = vpack.c.bf16 %v279, %v275
        %v504 = vpack.c.bf16 %v280, %v276
        %v505 = vpack.c.bf16 %v281, %v277
        %v506 = vpack.c.bf16 %v282, %v278
        %v507 = vpack.c.bf16 %v287, %v283
        %v508 = vpack.c.bf16 %v288, %v284
        %v509 = vpack.c.bf16 %v289, %v285
        %v510 = vpack.c.bf16 %v290, %v286
        %v511 = vpack.c.bf16 %v295, %v291
        %v512 = vpack.c.bf16 %v296, %v292
        %v513 = vpack.c.bf16 %v297, %v293
        %v514 = vpack.c.bf16 %v298, %v294
        %v515 = vpack.c.bf16 %v303, %v299
        %v516 = vpack.c.bf16 %v304, %v300
        %v517 = vpack.c.bf16 %v305, %v301
        %v518 = vpack.c.bf16 %v306, %v302
        %v519 = vpack.c.bf16 %v311, %v307
        %v520 = vpack.c.bf16 %v312, %v308
        %v521 = vpack.c.bf16 %v313, %v309
        %v522 = vpack.c.bf16 %v314, %v310
        %v523 = vpack.c.bf16 %v319, %v315
        %v524 = vpack.c.bf16 %v320, %v316
        %v525 = vpack.c.bf16 %v321, %v317
        %v526 = vpack.c.bf16 %v322, %v318
        %v527 = vpack.c.bf16 %v327, %v323
        %v528 = vpack.c.bf16 %v328, %v324
        %v529 = vpack.c.bf16 %v329, %v325
        %v530 = vpack.c.bf16 %v330, %v326
        %v531 = vpack.c.bf16 %v335, %v331
        %v532 = vpack.c.bf16 %v336, %v332
        %v533 = vpack.c.bf16 %v337, %v333
        %v534 = vpack.c.bf16 %v338, %v334
        %v535 = vpack.c.bf16 %v343, %v339
        %v536 = vpack.c.bf16 %v344, %v340
        %v537 = vpack.c.bf16 %v345, %v341
        %v538 = vpack.c.bf16 %v346, %v342
        %v539 = vpack.c.bf16 %v351, %v347
        %v540 = vpack.c.bf16 %v352, %v348
        %v541 = vpack.c.bf16 %v353, %v349
        %v542 = vpack.c.bf16 %v354, %v350
        %v543 = vpack.c.bf16 %v359, %v355
        %v544 = vpack.c.bf16 %v360, %v356
        %v545 = vpack.c.bf16 %v361, %v357
        %v546 = vpack.c.bf16 %v362, %v358
        %v547 = vpack.c.bf16 %v367, %v363
        %v548 = vpack.c.bf16 %v368, %v364
        %v549 = vpack.c.bf16 %v369, %v365
        %v550 = vpack.c.bf16 %v370, %v366
        %v551 = vpack.c.bf16 %v375, %v371
        %v552 = vpack.c.bf16 %v376, %v372
        %v553 = vpack.c.bf16 %v377, %v373
        %v554 = vpack.c.bf16 %v378, %v374
        %v555 = vpack.c.bf16 %v383, %v379
        %v556 = vpack.c.bf16 %v384, %v380
        %v557 = vpack.c.bf16 %v385, %v381
        %v558 = vpack.c.bf16 %v386, %v382
        %v559 = vpack.c.bf16 %v391, %v387
        %v560 = vpack.c.bf16 %v392, %v388
        %v561 = vpack.c.bf16 %v393, %v389
        %v562 = vpack.c.bf16 %v394, %v390
        %v563 = vpack.c.bf16 %v399, %v395
        %v564 = vpack.c.bf16 %v400, %v396
        %v565 = vpack.c.bf16 %v401, %v397
        %v566 = vpack.c.bf16 %v402, %v398
        %v567 = vpack.c.bf16 %v407, %v403
        %v568 = vpack.c.bf16 %v408, %v404
        %v569 = vpack.c.bf16 %v409, %v405
        %v570 = vpack.c.bf16 %v410, %v406
        %v571 = vpack.c.bf16 %v415, %v411
        %v572 = vpack.c.bf16 %v416, %v412
        %v573 = vpack.c.bf16 %v417, %v413
        %v574 = vpack.c.bf16 %v418, %v414
        %v575 = vpack.c.bf16 %v423, %v419
        %v576 = vpack.c.bf16 %v424, %v420
        %v577 = vpack.c.bf16 %v425, %v421
        %v578 = vpack.c.bf16 %v426, %v422
        %v579 = vpack.c.bf16 %v431, %v427
        %v580 = vpack.c.bf16 %v432, %v428
        %v581 = vpack.c.bf16 %v433, %v429
        %v582 = vpack.c.bf16 %v434, %v430
        %v583 = vpack.c.bf16 %v439, %v435
        %v584 = vpack.c.bf16 %v440, %v436
        %v585 = vpack.c.bf16 %v441, %v437
        %v586 = vpack.c.bf16 %v442, %v438
        %v587 = vpack.c.bf16 %v447, %v443
        %v588 = vpack.c.bf16 %v448, %v444
        %v589 = vpack.c.bf16 %v449, %v445
        %v590 = vpack.c.bf16 %v450, %v446
        %v591 = vpack.c.bf16 %v455, %v451
        %v592 = vpack.c.bf16 %v456, %v452
        %v593 = vpack.c.bf16 %v457, %v453
        %v594 = vpack.c.bf16 %v458, %v454
        %v595 = vpack.c.bf16 %v463, %v459
        %v596 = vpack.c.bf16 %v464, %v460
        %v597 = vpack.c.bf16 %v465, %v461
        %v598 = vpack.c.bf16 %v466, %v462
        %v599 = vpack.c.bf16 %v471, %v467
        %v600 = vpack.c.bf16 %v472, %v468
        %v601 = vpack.c.bf16 %v473, %v469
        %v602 = vpack.c.bf16 %v474, %v470
        %v603 = vld [vmem:[#allocation5] sm:$0xff]
        %v604 = vld [vmem:[#allocation5 + $0x8] sm:$0xff]
        %v605 = vld [vmem:[#allocation5 + $0x10] sm:$0xff]
        %v606 = vld [vmem:[#allocation5 + $0x18] sm:$0xff]
        %v607 = vld [vmem:[#allocation5 + $0x20] sm:$0xff]
        %v608 = vld [vmem:[#allocation5 + $0x28] sm:$0xff]
        %v609 = vld [vmem:[#allocation5 + $0x30] sm:$0xff]
        %v610 = vld [vmem:[#allocation5 + $0x38] sm:$0xff]
        %v611 = vld [vmem:[#allocation5 + $0x40] sm:$0xff]
        %v612 = vld [vmem:[#allocation5 + $0x48] sm:$0xff]
        %v613 = vld [vmem:[#allocation5 + $0x50] sm:$0xff]
        %v614 = vld [vmem:[#allocation5 + $0x58] sm:$0xff]
        %v615 = vld [vmem:[#allocation5 + $0x60] sm:$0xff]
        %v616 = vld [vmem:[#allocation5 + $0x68] sm:$0xff]
        %v617 = vld [vmem:[#allocation5 + $0x70] sm:$0xff]
        %v618 = vld [vmem:[#allocation5 + $0x78] sm:$0xff]
        %v619 = vld [vmem:[#allocation5 + $0x80] sm:$0xff]
        %v620 = vld [vmem:[#allocation5 + $0x88] sm:$0xff]
        %v621 = vld [vmem:[#allocation5 + $0x90] sm:$0xff]
        %v622 = vld [vmem:[#allocation5 + $0x98] sm:$0xff]
        %v623 = vld [vmem:[#allocation5 + $0xa0] sm:$0xff]
        %v624 = vld [vmem:[#allocation5 + $0xa8] sm:$0xff]
        %v625 = vld [vmem:[#allocation5 + $0xb0] sm:$0xff]
        %v626 = vld [vmem:[#allocation5 + $0xb8] sm:$0xff]
        %v627 = vld [vmem:[#allocation5 + $0xc0] sm:$0xff]
        %v628 = vld [vmem:[#allocation5 + $0xc8] sm:$0xff]
        %v629 = vld [vmem:[#allocation5 + $0xd0] sm:$0xff]
        %v630 = vld [vmem:[#allocation5 + $0xd8] sm:$0xff]
        %v631 = vld [vmem:[#allocation5 + $0xe0] sm:$0xff]
        %v632 = vld [vmem:[#allocation5 + $0xe8] sm:$0xff]
        %v633 = vld [vmem:[#allocation5 + $0xf0] sm:$0xff]
        %v634 = vld [vmem:[#allocation5 + $0xf8] sm:$0xff]
        %v635 = vld [vmem:[#allocation5 + $0x100] sm:$0xff]
        %v636 = vld [vmem:[#allocation5 + $0x108] sm:$0xff]
        %v637 = vld [vmem:[#allocation5 + $0x110] sm:$0xff]
        %v638 = vld [vmem:[#allocation5 + $0x118] sm:$0xff]
        %v639 = vld [vmem:[#allocation5 + $0x120] sm:$0xff]
        %v640 = vld [vmem:[#allocation5 + $0x128] sm:$0xff]
        %v641 = vld [vmem:[#allocation5 + $0x130] sm:$0xff]
        %v642 = vld [vmem:[#allocation5 + $0x138] sm:$0xff]
        %v643 = vld [vmem:[#allocation5 + $0x140] sm:$0xff]
        %v644 = vld [vmem:[#allocation5 + $0x148] sm:$0xff]
        %v645 = vld [vmem:[#allocation5 + $0x150] sm:$0xff]
        %v646 = vld [vmem:[#allocation5 + $0x158] sm:$0xff]
        %v647 = vld [vmem:[#allocation5 + $0x160] sm:$0xff]
        %v648 = vld [vmem:[#allocation5 + $0x168] sm:$0xff]
        %v649 = vld [vmem:[#allocation5 + $0x170] sm:$0xff]
        %v650 = vld [vmem:[#allocation5 + $0x178] sm:$0xff]
        %v651 = vld [vmem:[#allocation5 + $0x180] sm:$0xff]
        %v652 = vld [vmem:[#allocation5 + $0x188] sm:$0xff]
        %v653 = vld [vmem:[#allocation5 + $0x190] sm:$0xff]
        %v654 = vld [vmem:[#allocation5 + $0x198] sm:$0xff]
        %v655 = vld [vmem:[#allocation5 + $0x1a0] sm:$0xff]
        %v656 = vld [vmem:[#allocation5 + $0x1a8] sm:$0xff]
        %v657 = vld [vmem:[#allocation5 + $0x1b0] sm:$0xff]
        %v658 = vld [vmem:[#allocation5 + $0x1b8] sm:$0xff]
        %v659 = vld [vmem:[#allocation5 + $0x1c0] sm:$0xff]
        %v660 = vld [vmem:[#allocation5 + $0x1c8] sm:$0xff]
        %v661 = vld [vmem:[#allocation5 + $0x1d0] sm:$0xff]
        %v662 = vld [vmem:[#allocation5 + $0x1d8] sm:$0xff]
        %v663 = vld [vmem:[#allocation5 + $0x1e0] sm:$0xff]
        %v664 = vld [vmem:[#allocation5 + $0x1e8] sm:$0xff]
        %v665 = vld [vmem:[#allocation5 + $0x1f0] sm:$0xff]
        %v666 = vld [vmem:[#allocation5 + $0x1f8] sm:$0xff]
        %v731 = vunpack.c.l.b16 %v603
        %v732 = vunpack.c.h.b16 %v603
        %v733 = vunpack.c.l.b16 %v604
        %v734 = vunpack.c.h.b16 %v604
        %v735 = vunpack.c.l.b16 %v605
        %v736 = vunpack.c.h.b16 %v605
        %v737 = vunpack.c.l.b16 %v606
        %v738 = vunpack.c.h.b16 %v606
        %v739 = vunpack.c.l.b16 %v607
        %v740 = vunpack.c.h.b16 %v607
        %v741 = vunpack.c.l.b16 %v608
        %v742 = vunpack.c.h.b16 %v608
        %v743 = vunpack.c.l.b16 %v609
        %v744 = vunpack.c.h.b16 %v609
        %v745 = vunpack.c.l.b16 %v610
        %v746 = vunpack.c.h.b16 %v610
        %v747 = vunpack.c.l.b16 %v611
        %v748 = vunpack.c.h.b16 %v611
        %v749 = vunpack.c.l.b16 %v612
        %v750 = vunpack.c.h.b16 %v612
        %v751 = vunpack.c.l.b16 %v613
        %v752 = vunpack.c.h.b16 %v613
        %v753 = vunpack.c.l.b16 %v614
        %v754 = vunpack.c.h.b16 %v614
        %v755 = vunpack.c.l.b16 %v615
        %v756 = vunpack.c.h.b16 %v615
        %v757 = vunpack.c.l.b16 %v616
        %v758 = vunpack.c.h.b16 %v616
        %v759 = vunpack.c.l.b16 %v617
        %v760 = vunpack.c.h.b16 %v617
        %v761 = vunpack.c.l.b16 %v618
        %v762 = vunpack.c.h.b16 %v618
        %v763 = vunpack.c.l.b16 %v619
        %v764 = vunpack.c.h.b16 %v619
        %v765 = vunpack.c.l.b16 %v620
        %v766 = vunpack.c.h.b16 %v620
        %v767 = vunpack.c.l.b16 %v621
        %v768 = vunpack.c.h.b16 %v621
        %v769 = vunpack.c.l.b16 %v622
        %v770 = vunpack.c.h.b16 %v622
        %v771 = vunpack.c.l.b16 %v623
        %v772 = vunpack.c.h.b16 %v623
        %v773 = vunpack.c.l.b16 %v624
        %v774 = vunpack.c.h.b16 %v624
        %v775 = vunpack.c.l.b16 %v625
        %v776 = vunpack.c.h.b16 %v625
        %v777 = vunpack.c.l.b16 %v626
        %v778 = vunpack.c.h.b16 %v626
        %v779 = vunpack.c.l.b16 %v627
        %v780 = vunpack.c.h.b16 %v627
        %v781 = vunpack.c.l.b16 %v628
        %v782 = vunpack.c.h.b16 %v628
        %v783 = vunpack.c.l.b16 %v629
        %v784 = vunpack.c.h.b16 %v629
        %v785 = vunpack.c.l.b16 %v630
        %v786 = vunpack.c.h.b16 %v630
        %v787 = vunpack.c.l.b16 %v631
        %v788 = vunpack.c.h.b16 %v631
        %v789 = vunpack.c.l.b16 %v632
        %v790 = vunpack.c.h.b16 %v632
        %v791 = vunpack.c.l.b16 %v633
        %v792 = vunpack.c.h.b16 %v633
        %v793 = vunpack.c.l.b16 %v634
        %v794 = vunpack.c.h.b16 %v634
        %v795 = vunpack.c.l.b16 %v635
        %v796 = vunpack.c.h.b16 %v635
        %v797 = vunpack.c.l.b16 %v636
        %v798 = vunpack.c.h.b16 %v636
        %v799 = vunpack.c.l.b16 %v637
        %v800 = vunpack.c.h.b16 %v637
        %v801 = vunpack.c.l.b16 %v638
        %v802 = vunpack.c.h.b16 %v638
        %v803 = vunpack.c.l.b16 %v639
        %v804 = vunpack.c.h.b16 %v639
        %v805 = vunpack.c.l.b16 %v640
        %v806 = vunpack.c.h.b16 %v640
        %v807 = vunpack.c.l.b16 %v641
        %v808 = vunpack.c.h.b16 %v641
        %v809 = vunpack.c.l.b16 %v642
        %v810 = vunpack.c.h.b16 %v642
        %v811 = vunpack.c.l.b16 %v643
        %v812 = vunpack.c.h.b16 %v643
        %v813 = vunpack.c.l.b16 %v644
        %v814 = vunpack.c.h.b16 %v644
        %v815 = vunpack.c.l.b16 %v645
        %v816 = vunpack.c.h.b16 %v645
        %v817 = vunpack.c.l.b16 %v646
        %v818 = vunpack.c.h.b16 %v646
        %v819 = vunpack.c.l.b16 %v647
        %v820 = vunpack.c.h.b16 %v647
        %v821 = vunpack.c.l.b16 %v648
        %v822 = vunpack.c.h.b16 %v648
        %v823 = vunpack.c.l.b16 %v649
        %v824 = vunpack.c.h.b16 %v649
        %v825 = vunpack.c.l.b16 %v650
        %v826 = vunpack.c.h.b16 %v650
        %v827 = vunpack.c.l.b16 %v651
        %v828 = vunpack.c.h.b16 %v651
        %v829 = vunpack.c.l.b16 %v652
        %v830 = vunpack.c.h.b16 %v652
        %v831 = vunpack.c.l.b16 %v653
        %v832 = vunpack.c.h.b16 %v653
        %v833 = vunpack.c.l.b16 %v654
        %v834 = vunpack.c.h.b16 %v654
        %v835 = vunpack.c.l.b16 %v655
        %v836 = vunpack.c.h.b16 %v655
        %v837 = vunpack.c.l.b16 %v656
        %v838 = vunpack.c.h.b16 %v656
        %v839 = vunpack.c.l.b16 %v657
        %v840 = vunpack.c.h.b16 %v657
        %v841 = vunpack.c.l.b16 %v658
        %v842 = vunpack.c.h.b16 %v658
        %v843 = vunpack.c.l.b16 %v659
        %v844 = vunpack.c.h.b16 %v659
        %v845 = vunpack.c.l.b16 %v660
        %v846 = vunpack.c.h.b16 %v660
        %v847 = vunpack.c.l.b16 %v661
        %v848 = vunpack.c.h.b16 %v661
        %v849 = vunpack.c.l.b16 %v662
        %v850 = vunpack.c.h.b16 %v662
        %v851 = vunpack.c.l.b16 %v663
        %v852 = vunpack.c.h.b16 %v663
        %v853 = vunpack.c.l.b16 %v664
        %v854 = vunpack.c.h.b16 %v664
        %v855 = vunpack.c.l.b16 %v665
        %v856 = vunpack.c.h.b16 %v665
        %v857 = vunpack.c.l.b16 %v666
        %v858 = vunpack.c.h.b16 %v666
        %v859 = vpack.c.b16 %v733, %v731
        %v860 = vpack.c.b16 %v734, %v732
        %v861 = vpack.c.b16 %v737, %v735
        %v862 = vpack.c.b16 %v738, %v736
        %v863 = vpack.c.b16 %v741, %v739
        %v864 = vpack.c.b16 %v742, %v740
        %v865 = vpack.c.b16 %v745, %v743
        %v866 = vpack.c.b16 %v746, %v744
        %v867 = vpack.c.b16 %v749, %v747
        %v868 = vpack.c.b16 %v750, %v748
        %v869 = vpack.c.b16 %v753, %v751
        %v870 = vpack.c.b16 %v754, %v752
        %v871 = vpack.c.b16 %v757, %v755
        %v872 = vpack.c.b16 %v758, %v756
        %v873 = vpack.c.b16 %v761, %v759
        %v874 = vpack.c.b16 %v762, %v760
        %v875 = vpack.c.b16 %v765, %v763
        %v876 = vpack.c.b16 %v766, %v764
        %v877 = vpack.c.b16 %v769, %v767
        %v878 = vpack.c.b16 %v770, %v768
        %v879 = vpack.c.b16 %v773, %v771
        %v880 = vpack.c.b16 %v774, %v772
        %v881 = vpack.c.b16 %v777, %v775
        %v882 = vpack.c.b16 %v778, %v776
        %v883 = vpack.c.b16 %v781, %v779
        %v884 = vpack.c.b16 %v782, %v780
        %v885 = vpack.c.b16 %v785, %v783
        %v886 = vpack.c.b16 %v786, %v784
        %v887 = vpack.c.b16 %v789, %v787
        %v888 = vpack.c.b16 %v790, %v788
        %v889 = vpack.c.b16 %v793, %v791
        %v890 = vpack.c.b16 %v794, %v792
        %v891 = vpack.c.b16 %v797, %v795
        %v892 = vpack.c.b16 %v798, %v796
        %v893 = vpack.c.b16 %v801, %v799
        %v894 = vpack.c.b16 %v802, %v800
        %v895 = vpack.c.b16 %v805, %v803
        %v896 = vpack.c.b16 %v806, %v804
        %v897 = vpack.c.b16 %v809, %v807
        %v898 = vpack.c.b16 %v810, %v808
        %v899 = vpack.c.b16 %v813, %v811
        %v900 = vpack.c.b16 %v814, %v812
        %v901 = vpack.c.b16 %v817, %v815
        %v902 = vpack.c.b16 %v818, %v816
        %v903 = vpack.c.b16 %v821, %v819
        %v904 = vpack.c.b16 %v822, %v820
        %v905 = vpack.c.b16 %v825, %v823
        %v906 = vpack.c.b16 %v826, %v824
        %v907 = vpack.c.b16 %v829, %v827
        %v908 = vpack.c.b16 %v830, %v828
        %v909 = vpack.c.b16 %v833, %v831
        %v910 = vpack.c.b16 %v834, %v832
        %v911 = vpack.c.b16 %v837, %v835
        %v912 = vpack.c.b16 %v838, %v836
        %v913 = vpack.c.b16 %v841, %v839
        %v914 = vpack.c.b16 %v842, %v840
        %v915 = vpack.c.b16 %v845, %v843
        %v916 = vpack.c.b16 %v846, %v844
        %v917 = vpack.c.b16 %v849, %v847
        %v918 = vpack.c.b16 %v850, %v848
        %v919 = vpack.c.b16 %v853, %v851
        %v920 = vpack.c.b16 %v854, %v852
        %v921 = vpack.c.b16 %v857, %v855
        %v922 = vpack.c.b16 %v858, %v856
        %987 = vmatprep.subr.bf16.mxu0 %v874
        %988 = vmatpush1.bf16.msra.mxu0 %v873
        %989 = vmatprep.subr.bf16.mxu0 %v872
        %990 = vmatpush1.bf16.msra.mxu0 %v871
        %991 = vmatprep.subr.bf16.mxu0 %v870
        %992 = vmatpush1.bf16.msra.mxu0 %v869
        %993 = vmatprep.subr.bf16.mxu0 %v868
        %994 = vmatpush1.bf16.msra.mxu0 %v867
        %995 = vmatprep.subr.bf16.mxu0 %v866
        %996 = vmatpush1.bf16.msra.mxu0 %v865
        %997 = vmatprep.subr.bf16.mxu0 %v864
        %998 = vmatpush1.bf16.msra.mxu0 %v863
        %999 = vmatprep.subr.bf16.mxu0 %v862
        %1000 = vmatpush1.bf16.msra.mxu0 %v861
        %1001 = vmatprep.subr.bf16.mxu0 %v860
        %1002 = vmatpush1.bf16.msra.mxu0 %v859
        %1003 = vmatprep.subr.bf16.mxu0 %v890
        %1004 = vmatpush2.bf16.msra.mxu0 %v889
        %1005 = vmatprep.subr.bf16.mxu0 %v888
        %1006 = vmatpush2.bf16.msra.mxu0 %v887
        %1007 = vmatprep.subr.bf16.mxu0 %v886
        %1008 = vmatpush2.bf16.msra.mxu0 %v885
        %1009 = vmatprep.subr.bf16.mxu0 %v884
        %1010 = vmatpush2.bf16.msra.mxu0 %v883
        %1011 = vmatprep.subr.bf16.mxu0 %v882
        %1012 = vmatpush2.bf16.msra.mxu0 %v881
        %1013 = vmatprep.subr.bf16.mxu0 %v880
        %1014 = vmatpush2.bf16.msra.mxu0 %v879
        %1015 = vmatprep.subr.bf16.mxu0 %v878
        %1016 = vmatpush2.bf16.msra.mxu0 %v877
        %1017 = vmatprep.subr.bf16.mxu0 %v876
        %1018 = vmatpush2.bf16.msra.mxu0 %v875
        %1019 = vmatprep.mubr.bf16.mxu0 %v476
        %1020 = vmatmul.mubr.bf16.gmra.mxu0 %v475
        %v1021 = vpop.f32.mrf.mxu0
        %v1022 = vadd.f32 0.0, %v1021
        %v1023 = vpop.f32.mrf.mxu0
        %v1024 = vadd.f32 0.0, %v1023
        %v1025 = vpop.f32.mrf.mxu0
        %v1026 = vadd.f32 0.0, %v1025
        %v1027 = vpop.f32.mrf.mxu0
        %v1028 = vadd.f32 0.0, %v1027
        %1029 = vmatprep.mubr.bf16.mxu0 %v480
        %1030 = vmatmul.mubr.bf16.gmra.mxu0 %v479
        %v1031 = vpop.f32.mrf.mxu0
        %v1032 = vadd.f32 0.0, %v1031
        %v1033 = vpop.f32.mrf.mxu0
        %v1034 = vadd.f32 0.0, %v1033
        %v1035 = vpop.f32.mrf.mxu0
        %v1036 = vadd.f32 0.0, %v1035
        %v1037 = vpop.f32.mrf.mxu0
        %v1038 = vadd.f32 0.0, %v1037
        %1039 = vmatprep.mubr.bf16.mxu0 %v484
        %1040 = vmatmul.mubr.bf16.gmra.mxu0 %v483
        %v1041 = vpop.f32.mrf.mxu0
        %v1042 = vadd.f32 0.0, %v1041
        %v1043 = vpop.f32.mrf.mxu0
        %v1044 = vadd.f32 0.0, %v1043
        %v1045 = vpop.f32.mrf.mxu0
        %v1046 = vadd.f32 0.0, %v1045
        %v1047 = vpop.f32.mrf.mxu0
        %v1048 = vadd.f32 0.0, %v1047
        %1049 = vmatprep.mubr.bf16.mxu0 %v488
        %1050 = vmatmul.mubr.bf16.gmra.mxu0 %v487
        %v1051 = vpop.f32.mrf.mxu0
        %v1052 = vadd.f32 0.0, %v1051
        %v1053 = vpop.f32.mrf.mxu0
        %v1054 = vadd.f32 0.0, %v1053
        %v1055 = vpop.f32.mrf.mxu0
        %v1056 = vadd.f32 0.0, %v1055
        %v1057 = vpop.f32.mrf.mxu0
        %v1058 = vadd.f32 0.0, %v1057
        %1059 = vmatprep.mubr.bf16.mxu0 %v492
        %1060 = vmatmul.mubr.bf16.gmra.mxu0 %v491
        %v1061 = vpop.f32.mrf.mxu0
        %v1062 = vadd.f32 0.0, %v1061
        %v1063 = vpop.f32.mrf.mxu0
        %v1064 = vadd.f32 0.0, %v1063
        %v1065 = vpop.f32.mrf.mxu0
        %v1066 = vadd.f32 0.0, %v1065
        %v1067 = vpop.f32.mrf.mxu0
        %v1068 = vadd.f32 0.0, %v1067
        %1069 = vmatprep.mubr.bf16.mxu0 %v496
        %1070 = vmatmul.mubr.bf16.gmra.mxu0 %v495
        %v1071 = vpop.f32.mrf.mxu0
        %v1072 = vadd.f32 0.0, %v1071
        %v1073 = vpop.f32.mrf.mxu0
        %v1074 = vadd.f32 0.0, %v1073
        %v1075 = vpop.f32.mrf.mxu0
        %v1076 = vadd.f32 0.0, %v1075
        %v1077 = vpop.f32.mrf.mxu0
        %v1078 = vadd.f32 0.0, %v1077
        %1079 = vmatprep.mubr.bf16.mxu0 %v500
        %1080 = vmatmul.mubr.bf16.gmra.mxu0 %v499
        %v1081 = vpop.f32.mrf.mxu0
        %v1082 = vadd.f32 0.0, %v1081
        %v1083 = vpop.f32.mrf.mxu0
        %v1084 = vadd.f32 0.0, %v1083
        %v1085 = vpop.f32.mrf.mxu0
        %v1086 = vadd.f32 0.0, %v1085
        %v1087 = vpop.f32.mrf.mxu0
        %v1088 = vadd.f32 0.0, %v1087
        %1089 = vmatprep.mubr.bf16.mxu0 %v504
        %1090 = vmatmul.mubr.bf16.gmra.mxu0 %v503
        %v1091 = vpop.f32.mrf.mxu0
        %v1092 = vadd.f32 0.0, %v1091
        %v1093 = vpop.f32.mrf.mxu0
        %v1094 = vadd.f32 0.0, %v1093
        %v1095 = vpop.f32.mrf.mxu0
        %v1096 = vadd.f32 0.0, %v1095
        %v1097 = vpop.f32.mrf.mxu0
        %v1098 = vadd.f32 0.0, %v1097
        %1099 = vmatprep.mubr.bf16.mxu0 %v508
        %1100 = vmatmul.mubr.bf16.gmra.mxu0 %v507
        %v1101 = vpop.f32.mrf.mxu0
        %v1102 = vadd.f32 0.0, %v1101
        %v1103 = vpop.f32.mrf.mxu0
        %v1104 = vadd.f32 0.0, %v1103
        %v1105 = vpop.f32.mrf.mxu0
        %v1106 = vadd.f32 0.0, %v1105
        %v1107 = vpop.f32.mrf.mxu0
        %v1108 = vadd.f32 0.0, %v1107
        %1109 = vmatprep.mubr.bf16.mxu0 %v512
        %1110 = vmatmul.mubr.bf16.gmra.mxu0 %v511
        %v1111 = vpop.f32.mrf.mxu0
        %v1112 = vadd.f32 0.0, %v1111
        %v1113 = vpop.f32.mrf.mxu0
        %v1114 = vadd.f32 0.0, %v1113
        %v1115 = vpop.f32.mrf.mxu0
        %v1116 = vadd.f32 0.0, %v1115
        %v1117 = vpop.f32.mrf.mxu0
        %v1118 = vadd.f32 0.0, %v1117
        %1119 = vmatprep.mubr.bf16.mxu0 %v516
        %1120 = vmatmul.mubr.bf16.gmra.mxu0 %v515
        %v1121 = vpop.f32.mrf.mxu0
        %v1122 = vadd.f32 0.0, %v1121
        %v1123 = vpop.f32.mrf.mxu0
        %v1124 = vadd.f32 0.0, %v1123
        %v1125 = vpop.f32.mrf.mxu0
        %v1126 = vadd.f32 0.0, %v1125
        %v1127 = vpop.f32.mrf.mxu0
        %v1128 = vadd.f32 0.0, %v1127
        %1129 = vmatprep.mubr.bf16.mxu0 %v520
        %1130 = vmatmul.mubr.bf16.gmra.mxu0 %v519
        %v1131 = vpop.f32.mrf.mxu0
        %v1132 = vadd.f32 0.0, %v1131
        %v1133 = vpop.f32.mrf.mxu0
        %v1134 = vadd.f32 0.0, %v1133
        %v1135 = vpop.f32.mrf.mxu0
        %v1136 = vadd.f32 0.0, %v1135
        %v1137 = vpop.f32.mrf.mxu0
        %v1138 = vadd.f32 0.0, %v1137
        %1139 = vmatprep.mubr.bf16.mxu0 %v524
        %1140 = vmatmul.mubr.bf16.gmra.mxu0 %v523
        %v1141 = vpop.f32.mrf.mxu0
        %v1142 = vadd.f32 0.0, %v1141
        %v1143 = vpop.f32.mrf.mxu0
        %v1144 = vadd.f32 0.0, %v1143
        %v1145 = vpop.f32.mrf.mxu0
        %v1146 = vadd.f32 0.0, %v1145
        %v1147 = vpop.f32.mrf.mxu0
        %v1148 = vadd.f32 0.0, %v1147
        %1149 = vmatprep.mubr.bf16.mxu0 %v528
        %1150 = vmatmul.mubr.bf16.gmra.mxu0 %v527
        %v1151 = vpop.f32.mrf.mxu0
        %v1152 = vadd.f32 0.0, %v1151
        %v1153 = vpop.f32.mrf.mxu0
        %v1154 = vadd.f32 0.0, %v1153
        %v1155 = vpop.f32.mrf.mxu0
        %v1156 = vadd.f32 0.0, %v1155
        %v1157 = vpop.f32.mrf.mxu0
        %v1158 = vadd.f32 0.0, %v1157
        %1159 = vmatprep.mubr.bf16.mxu0 %v532
        %1160 = vmatmul.mubr.bf16.gmra.mxu0 %v531
        %v1161 = vpop.f32.mrf.mxu0
        %v1162 = vadd.f32 0.0, %v1161
        %v1163 = vpop.f32.mrf.mxu0
        %v1164 = vadd.f32 0.0, %v1163
        %v1165 = vpop.f32.mrf.mxu0
        %v1166 = vadd.f32 0.0, %v1165
        %v1167 = vpop.f32.mrf.mxu0
        %v1168 = vadd.f32 0.0, %v1167
        %1169 = vmatprep.mubr.bf16.mxu0 %v536
        %1170 = vmatmul.mubr.bf16.gmra.mxu0 %v535
        %v1171 = vpop.f32.mrf.mxu0
        %v1172 = vadd.f32 0.0, %v1171
        %v1173 = vpop.f32.mrf.mxu0
        %v1174 = vadd.f32 0.0, %v1173
        %v1175 = vpop.f32.mrf.mxu0
        %v1176 = vadd.f32 0.0, %v1175
        %v1177 = vpop.f32.mrf.mxu0
        %v1178 = vadd.f32 0.0, %v1177
        %1179 = vmatprep.mubr.bf16.mxu0 %v540
        %1180 = vmatmul.mubr.bf16.gmra.mxu0 %v539
        %v1181 = vpop.f32.mrf.mxu0
        %v1182 = vadd.f32 0.0, %v1181
        %v1183 = vpop.f32.mrf.mxu0
        %v1184 = vadd.f32 0.0, %v1183
        %v1185 = vpop.f32.mrf.mxu0
        %v1186 = vadd.f32 0.0, %v1185
        %v1187 = vpop.f32.mrf.mxu0
        %v1188 = vadd.f32 0.0, %v1187
        %1189 = vmatprep.mubr.bf16.mxu0 %v544
        %1190 = vmatmul.mubr.bf16.gmra.mxu0 %v543
        %v1191 = vpop.f32.mrf.mxu0
        %v1192 = vadd.f32 0.0, %v1191
        %v1193 = vpop.f32.mrf.mxu0
        %v1194 = vadd.f32 0.0, %v1193
        %v1195 = vpop.f32.mrf.mxu0
        %v1196 = vadd.f32 0.0, %v1195
        %v1197 = vpop.f32.mrf.mxu0
        %v1198 = vadd.f32 0.0, %v1197
        %1199 = vmatprep.mubr.bf16.mxu0 %v548
        %1200 = vmatmul.mubr.bf16.gmra.mxu0 %v547
        %v1201 = vpop.f32.mrf.mxu0
        %v1202 = vadd.f32 0.0, %v1201
        %v1203 = vpop.f32.mrf.mxu0
        %v1204 = vadd.f32 0.0, %v1203
        %v1205 = vpop.f32.mrf.mxu0
        %v1206 = vadd.f32 0.0, %v1205
        %v1207 = vpop.f32.mrf.mxu0
        %v1208 = vadd.f32 0.0, %v1207
        %1209 = vmatprep.mubr.bf16.mxu0 %v552
        %1210 = vmatmul.mubr.bf16.gmra.mxu0 %v551
        %v1211 = vpop.f32.mrf.mxu0
        %v1212 = vadd.f32 0.0, %v1211
        %v1213 = vpop.f32.mrf.mxu0
        %v1214 = vadd.f32 0.0, %v1213
        %v1215 = vpop.f32.mrf.mxu0
        %v1216 = vadd.f32 0.0, %v1215
        %v1217 = vpop.f32.mrf.mxu0
        %v1218 = vadd.f32 0.0, %v1217
        %1219 = vmatprep.mubr.bf16.mxu0 %v556
        %1220 = vmatmul.mubr.bf16.gmra.mxu0 %v555
        %v1221 = vpop.f32.mrf.mxu0
        %v1222 = vadd.f32 0.0, %v1221
        %v1223 = vpop.f32.mrf.mxu0
        %v1224 = vadd.f32 0.0, %v1223
        %v1225 = vpop.f32.mrf.mxu0
        %v1226 = vadd.f32 0.0, %v1225
        %v1227 = vpop.f32.mrf.mxu0
        %v1228 = vadd.f32 0.0, %v1227
        %1229 = vmatprep.mubr.bf16.mxu0 %v560
        %1230 = vmatmul.mubr.bf16.gmra.mxu0 %v559
        %v1231 = vpop.f32.mrf.mxu0
        %v1232 = vadd.f32 0.0, %v1231
        %v1233 = vpop.f32.mrf.mxu0
        %v1234 = vadd.f32 0.0, %v1233
        %v1235 = vpop.f32.mrf.mxu0
        %v1236 = vadd.f32 0.0, %v1235
        %v1237 = vpop.f32.mrf.mxu0
        %v1238 = vadd.f32 0.0, %v1237
        %1239 = vmatprep.mubr.bf16.mxu0 %v564
        %1240 = vmatmul.mubr.bf16.gmra.mxu0 %v563
        %v1241 = vpop.f32.mrf.mxu0
        %v1242 = vadd.f32 0.0, %v1241
        %v1243 = vpop.f32.mrf.mxu0
        %v1244 = vadd.f32 0.0, %v1243
        %v1245 = vpop.f32.mrf.mxu0
        %v1246 = vadd.f32 0.0, %v1245
        %v1247 = vpop.f32.mrf.mxu0
        %v1248 = vadd.f32 0.0, %v1247
        %1249 = vmatprep.mubr.bf16.mxu0 %v568
        %1250 = vmatmul.mubr.bf16.gmra.mxu0 %v567
        %v1251 = vpop.f32.mrf.mxu0
        %v1252 = vadd.f32 0.0, %v1251
        %v1253 = vpop.f32.mrf.mxu0
        %v1254 = vadd.f32 0.0, %v1253
        %v1255 = vpop.f32.mrf.mxu0
        %v1256 = vadd.f32 0.0, %v1255
        %v1257 = vpop.f32.mrf.mxu0
        %v1258 = vadd.f32 0.0, %v1257
        %1259 = vmatprep.mubr.bf16.mxu0 %v572
        %1260 = vmatmul.mubr.bf16.gmra.mxu0 %v571
        %v1261 = vpop.f32.mrf.mxu0
        %v1262 = vadd.f32 0.0, %v1261
        %v1263 = vpop.f32.mrf.mxu0
        %v1264 = vadd.f32 0.0, %v1263
        %v1265 = vpop.f32.mrf.mxu0
        %v1266 = vadd.f32 0.0, %v1265
        %v1267 = vpop.f32.mrf.mxu0
        %v1268 = vadd.f32 0.0, %v1267
        %1269 = vmatprep.mubr.bf16.mxu0 %v576
        %1270 = vmatmul.mubr.bf16.gmra.mxu0 %v575
        %v1271 = vpop.f32.mrf.mxu0
        %v1272 = vadd.f32 0.0, %v1271
        %v1273 = vpop.f32.mrf.mxu0
        %v1274 = vadd.f32 0.0, %v1273
        %v1275 = vpop.f32.mrf.mxu0
        %v1276 = vadd.f32 0.0, %v1275
        %v1277 = vpop.f32.mrf.mxu0
        %v1278 = vadd.f32 0.0, %v1277
        %1279 = vmatprep.mubr.bf16.mxu0 %v580
        %1280 = vmatmul.mubr.bf16.gmra.mxu0 %v579
        %v1281 = vpop.f32.mrf.mxu0
        %v1282 = vadd.f32 0.0, %v1281
        %v1283 = vpop.f32.mrf.mxu0
        %v1284 = vadd.f32 0.0, %v1283
        %v1285 = vpop.f32.mrf.mxu0
        %v1286 = vadd.f32 0.0, %v1285
        %v1287 = vpop.f32.mrf.mxu0
        %v1288 = vadd.f32 0.0, %v1287
        %1289 = vmatprep.mubr.bf16.mxu0 %v584
        %1290 = vmatmul.mubr.bf16.gmra.mxu0 %v583
        %v1291 = vpop.f32.mrf.mxu0
        %v1292 = vadd.f32 0.0, %v1291
        %v1293 = vpop.f32.mrf.mxu0
        %v1294 = vadd.f32 0.0, %v1293
        %v1295 = vpop.f32.mrf.mxu0
        %v1296 = vadd.f32 0.0, %v1295
        %v1297 = vpop.f32.mrf.mxu0
        %v1298 = vadd.f32 0.0, %v1297
        %1299 = vmatprep.mubr.bf16.mxu0 %v588
        %1300 = vmatmul.mubr.bf16.gmra.mxu0 %v587
        %v1301 = vpop.f32.mrf.mxu0
        %v1302 = vadd.f32 0.0, %v1301
        %v1303 = vpop.f32.mrf.mxu0
        %v1304 = vadd.f32 0.0, %v1303
        %v1305 = vpop.f32.mrf.mxu0
        %v1306 = vadd.f32 0.0, %v1305
        %v1307 = vpop.f32.mrf.mxu0
        %v1308 = vadd.f32 0.0, %v1307
        %1309 = vmatprep.mubr.bf16.mxu0 %v592
        %1310 = vmatmul.mubr.bf16.gmra.mxu0 %v591
        %v1311 = vpop.f32.mrf.mxu0
        %v1312 = vadd.f32 0.0, %v1311
        %v1313 = vpop.f32.mrf.mxu0
        %v1314 = vadd.f32 0.0, %v1313
        %v1315 = vpop.f32.mrf.mxu0
        %v1316 = vadd.f32 0.0, %v1315
        %v1317 = vpop.f32.mrf.mxu0
        %v1318 = vadd.f32 0.0, %v1317
        %1319 = vmatprep.mubr.bf16.mxu0 %v596
        %1320 = vmatmul.mubr.bf16.gmra.mxu0 %v595
        %v1321 = vpop.f32.mrf.mxu0
        %v1322 = vadd.f32 0.0, %v1321
        %v1323 = vpop.f32.mrf.mxu0
        %v1324 = vadd.f32 0.0, %v1323
        %v1325 = vpop.f32.mrf.mxu0
        %v1326 = vadd.f32 0.0, %v1325
        %v1327 = vpop.f32.mrf.mxu0
        %v1328 = vadd.f32 0.0, %v1327
        %1329 = vmatprep.mubr.bf16.mxu0 %v600
        %1330 = vmatmul.mubr.bf16.gmra.mxu0 %v599
        %v1331 = vpop.f32.mrf.mxu0
        %v1332 = vadd.f32 0.0, %v1331
        %v1333 = vpop.f32.mrf.mxu0
        %v1334 = vadd.f32 0.0, %v1333
        %v1335 = vpop.f32.mrf.mxu0
        %v1336 = vadd.f32 0.0, %v1335
        %v1337 = vpop.f32.mrf.mxu0
        %v1338 = vadd.f32 0.0, %v1337
        %1339 = vdwg.mxu0
        %1340 = vmatprep.subr.bf16.mxu0 %v906
        %1341 = vmatpush1.bf16.msra.mxu0 %v905
        %1342 = vmatprep.subr.bf16.mxu0 %v904
        %1343 = vmatpush1.bf16.msra.mxu0 %v903
        %1344 = vmatprep.subr.bf16.mxu0 %v902
        %1345 = vmatpush1.bf16.msra.mxu0 %v901
        %1346 = vmatprep.subr.bf16.mxu0 %v900
        %1347 = vmatpush1.bf16.msra.mxu0 %v899
        %1348 = vmatprep.subr.bf16.mxu0 %v898
        %1349 = vmatpush1.bf16.msra.mxu0 %v897
        %1350 = vmatprep.subr.bf16.mxu0 %v896
        %1351 = vmatpush1.bf16.msra.mxu0 %v895
        %1352 = vmatprep.subr.bf16.mxu0 %v894
        %1353 = vmatpush1.bf16.msra.mxu0 %v893
        %1354 = vmatprep.subr.bf16.mxu0 %v892
        %1355 = vmatpush1.bf16.msra.mxu0 %v891
        %1356 = vmatprep.subr.bf16.mxu0 %v922
        %1357 = vmatpush2.bf16.msra.mxu0 %v921
        %1358 = vmatprep.subr.bf16.mxu0 %v920
        %1359 = vmatpush2.bf16.msra.mxu0 %v919
        %1360 = vmatprep.subr.bf16.mxu0 %v918
        %1361 = vmatpush2.bf16.msra.mxu0 %v917
        %1362 = vmatprep.subr.bf16.mxu0 %v916
        %1363 = vmatpush2.bf16.msra.mxu0 %v915
        %1364 = vmatprep.subr.bf16.mxu0 %v914
        %1365 = vmatpush2.bf16.msra.mxu0 %v913
        %1366 = vmatprep.subr.bf16.mxu0 %v912
        %1367 = vmatpush2.bf16.msra.mxu0 %v911
        %1368 = vmatprep.subr.bf16.mxu0 %v910
        %1369 = vmatpush2.bf16.msra.mxu0 %v909
        %1370 = vmatprep.subr.bf16.mxu0 %v908
        %1371 = vmatpush2.bf16.msra.mxu0 %v907
        %1372 = vmatprep.mubr.bf16.mxu0 %v478
        %1373 = vmatmul.mubr.bf16.gmra.mxu0 %v477
        %v1374 = vpop.f32.mrf.mxu0
        %v1375 = vadd.f32 %v1022, %v1374
        %v1376 = vpop.f32.mrf.mxu0
        %v1377 = vadd.f32 %v1024, %v1376
        %v1378 = vpop.f32.mrf.mxu0
        %v1379 = vadd.f32 %v1026, %v1378
        %v1380 = vpop.f32.mrf.mxu0
        %v1381 = vadd.f32 %v1028, %v1380
        %1382 = vmatprep.mubr.bf16.mxu0 %v482
        %1383 = vmatmul.mubr.bf16.gmra.mxu0 %v481
        %v1384 = vpop.f32.mrf.mxu0
        %v1385 = vadd.f32 %v1032, %v1384
        %v1386 = vpop.f32.mrf.mxu0
        %v1387 = vadd.f32 %v1034, %v1386
        %v1388 = vpop.f32.mrf.mxu0
        %v1389 = vadd.f32 %v1036, %v1388
        %v1390 = vpop.f32.mrf.mxu0
        %v1391 = vadd.f32 %v1038, %v1390
        %1392 = vmatprep.mubr.bf16.mxu0 %v486
        %1393 = vmatmul.mubr.bf16.gmra.mxu0 %v485
        %v1394 = vpop.f32.mrf.mxu0
        %v1395 = vadd.f32 %v1042, %v1394
        %v1396 = vpop.f32.mrf.mxu0
        %v1397 = vadd.f32 %v1044, %v1396
        %v1398 = vpop.f32.mrf.mxu0
        %v1399 = vadd.f32 %v1046, %v1398
        %v1400 = vpop.f32.mrf.mxu0
        %v1401 = vadd.f32 %v1048, %v1400
        %1402 = vmatprep.mubr.bf16.mxu0 %v490
        %1403 = vmatmul.mubr.bf16.gmra.mxu0 %v489
        %v1404 = vpop.f32.mrf.mxu0
        %v1405 = vadd.f32 %v1052, %v1404
        %v1406 = vpop.f32.mrf.mxu0
        %v1407 = vadd.f32 %v1054, %v1406
        %v1408 = vpop.f32.mrf.mxu0
        %v1409 = vadd.f32 %v1056, %v1408
        %v1410 = vpop.f32.mrf.mxu0
        %v1411 = vadd.f32 %v1058, %v1410
        %1412 = vmatprep.mubr.bf16.mxu0 %v494
        %1413 = vmatmul.mubr.bf16.gmra.mxu0 %v493
        %v1414 = vpop.f32.mrf.mxu0
        %v1415 = vadd.f32 %v1062, %v1414
        %v1416 = vpop.f32.mrf.mxu0
        %v1417 = vadd.f32 %v1064, %v1416
        %v1418 = vpop.f32.mrf.mxu0
        %v1419 = vadd.f32 %v1066, %v1418
        %v1420 = vpop.f32.mrf.mxu0
        %v1421 = vadd.f32 %v1068, %v1420
        %1422 = vmatprep.mubr.bf16.mxu0 %v498
        %1423 = vmatmul.mubr.bf16.gmra.mxu0 %v497
        %v1424 = vpop.f32.mrf.mxu0
        %v1425 = vadd.f32 %v1072, %v1424
        %v1426 = vpop.f32.mrf.mxu0
        %v1427 = vadd.f32 %v1074, %v1426
        %v1428 = vpop.f32.mrf.mxu0
        %v1429 = vadd.f32 %v1076, %v1428
        %v1430 = vpop.f32.mrf.mxu0
        %v1431 = vadd.f32 %v1078, %v1430
        %1432 = vmatprep.mubr.bf16.mxu0 %v502
        %1433 = vmatmul.mubr.bf16.gmra.mxu0 %v501
        %v1434 = vpop.f32.mrf.mxu0
        %v1435 = vadd.f32 %v1082, %v1434
        %v1436 = vpop.f32.mrf.mxu0
        %v1437 = vadd.f32 %v1084, %v1436
        %v1438 = vpop.f32.mrf.mxu0
        %v1439 = vadd.f32 %v1086, %v1438
        %v1440 = vpop.f32.mrf.mxu0
        %v1441 = vadd.f32 %v1088, %v1440
        %1442 = vmatprep.mubr.bf16.mxu0 %v506
        %1443 = vmatmul.mubr.bf16.gmra.mxu0 %v505
        %v1444 = vpop.f32.mrf.mxu0
        %v1445 = vadd.f32 %v1092, %v1444
        %v1446 = vpop.f32.mrf.mxu0
        %v1447 = vadd.f32 %v1094, %v1446
        %v1448 = vpop.f32.mrf.mxu0
        %v1449 = vadd.f32 %v1096, %v1448
        %v1450 = vpop.f32.mrf.mxu0
        %v1451 = vadd.f32 %v1098, %v1450
        %1452 = vmatprep.mubr.bf16.mxu0 %v510
        %1453 = vmatmul.mubr.bf16.gmra.mxu0 %v509
        %v1454 = vpop.f32.mrf.mxu0
        %v1455 = vadd.f32 %v1102, %v1454
        %v1456 = vpop.f32.mrf.mxu0
        %v1457 = vadd.f32 %v1104, %v1456
        %v1458 = vpop.f32.mrf.mxu0
        %v1459 = vadd.f32 %v1106, %v1458
        %v1460 = vpop.f32.mrf.mxu0
        %v1461 = vadd.f32 %v1108, %v1460
        %1462 = vmatprep.mubr.bf16.mxu0 %v514
        %1463 = vmatmul.mubr.bf16.gmra.mxu0 %v513
        %v1464 = vpop.f32.mrf.mxu0
        %v1465 = vadd.f32 %v1112, %v1464
        %v1466 = vpop.f32.mrf.mxu0
        %v1467 = vadd.f32 %v1114, %v1466
        %v1468 = vpop.f32.mrf.mxu0
        %v1469 = vadd.f32 %v1116, %v1468
        %v1470 = vpop.f32.mrf.mxu0
        %v1471 = vadd.f32 %v1118, %v1470
        %1472 = vmatprep.mubr.bf16.mxu0 %v518
        %1473 = vmatmul.mubr.bf16.gmra.mxu0 %v517
        %v1474 = vpop.f32.mrf.mxu0
        %v1475 = vadd.f32 %v1122, %v1474
        %v1476 = vpop.f32.mrf.mxu0
        %v1477 = vadd.f32 %v1124, %v1476
        %v1478 = vpop.f32.mrf.mxu0
        %v1479 = vadd.f32 %v1126, %v1478
        %v1480 = vpop.f32.mrf.mxu0
        %v1481 = vadd.f32 %v1128, %v1480
        %1482 = vmatprep.mubr.bf16.mxu0 %v522
        %1483 = vmatmul.mubr.bf16.gmra.mxu0 %v521
        %v1484 = vpop.f32.mrf.mxu0
        %v1485 = vadd.f32 %v1132, %v1484
        %v1486 = vpop.f32.mrf.mxu0
        %v1487 = vadd.f32 %v1134, %v1486
        %v1488 = vpop.f32.mrf.mxu0
        %v1489 = vadd.f32 %v1136, %v1488
        %v1490 = vpop.f32.mrf.mxu0
        %v1491 = vadd.f32 %v1138, %v1490
        %1492 = vmatprep.mubr.bf16.mxu0 %v526
        %1493 = vmatmul.mubr.bf16.gmra.mxu0 %v525
        %v1494 = vpop.f32.mrf.mxu0
        %v1495 = vadd.f32 %v1142, %v1494
        %v1496 = vpop.f32.mrf.mxu0
        %v1497 = vadd.f32 %v1144, %v1496
        %v1498 = vpop.f32.mrf.mxu0
        %v1499 = vadd.f32 %v1146, %v1498
        %v1500 = vpop.f32.mrf.mxu0
        %v1501 = vadd.f32 %v1148, %v1500
        %1502 = vmatprep.mubr.bf16.mxu0 %v530
        %1503 = vmatmul.mubr.bf16.gmra.mxu0 %v529
        %v1504 = vpop.f32.mrf.mxu0
        %v1505 = vadd.f32 %v1152, %v1504
        %v1506 = vpop.f32.mrf.mxu0
        %v1507 = vadd.f32 %v1154, %v1506
        %v1508 = vpop.f32.mrf.mxu0
        %v1509 = vadd.f32 %v1156, %v1508
        %v1510 = vpop.f32.mrf.mxu0
        %v1511 = vadd.f32 %v1158, %v1510
        %1512 = vmatprep.mubr.bf16.mxu0 %v534
        %1513 = vmatmul.mubr.bf16.gmra.mxu0 %v533
        %v1514 = vpop.f32.mrf.mxu0
        %v1515 = vadd.f32 %v1162, %v1514
        %v1516 = vpop.f32.mrf.mxu0
        %v1517 = vadd.f32 %v1164, %v1516
        %v1518 = vpop.f32.mrf.mxu0
        %v1519 = vadd.f32 %v1166, %v1518
        %v1520 = vpop.f32.mrf.mxu0
        %v1521 = vadd.f32 %v1168, %v1520
        %1522 = vmatprep.mubr.bf16.mxu0 %v538
        %1523 = vmatmul.mubr.bf16.gmra.mxu0 %v537
        %v1524 = vpop.f32.mrf.mxu0
        %v1525 = vadd.f32 %v1172, %v1524
        %v1526 = vpop.f32.mrf.mxu0
        %v1527 = vadd.f32 %v1174, %v1526
        %v1528 = vpop.f32.mrf.mxu0
        %v1529 = vadd.f32 %v1176, %v1528
        %v1530 = vpop.f32.mrf.mxu0
        %v1531 = vadd.f32 %v1178, %v1530
        %1532 = vmatprep.mubr.bf16.mxu0 %v542
        %1533 = vmatmul.mubr.bf16.gmra.mxu0 %v541
        %v1534 = vpop.f32.mrf.mxu0
        %v1535 = vadd.f32 %v1182, %v1534
        %v1536 = vpop.f32.mrf.mxu0
        %v1537 = vadd.f32 %v1184, %v1536
        %v1538 = vpop.f32.mrf.mxu0
        %v1539 = vadd.f32 %v1186, %v1538
        %v1540 = vpop.f32.mrf.mxu0
        %v1541 = vadd.f32 %v1188, %v1540
        %1542 = vmatprep.mubr.bf16.mxu0 %v546
        %1543 = vmatmul.mubr.bf16.gmra.mxu0 %v545
        %v1544 = vpop.f32.mrf.mxu0
        %v1545 = vadd.f32 %v1192, %v1544
        %v1546 = vpop.f32.mrf.mxu0
        %v1547 = vadd.f32 %v1194, %v1546
        %v1548 = vpop.f32.mrf.mxu0
        %v1549 = vadd.f32 %v1196, %v1548
        %v1550 = vpop.f32.mrf.mxu0
        %v1551 = vadd.f32 %v1198, %v1550
        %1552 = vmatprep.mubr.bf16.mxu0 %v550
        %1553 = vmatmul.mubr.bf16.gmra.mxu0 %v549
        %v1554 = vpop.f32.mrf.mxu0
        %v1555 = vadd.f32 %v1202, %v1554
        %v1556 = vpop.f32.mrf.mxu0
        %v1557 = vadd.f32 %v1204, %v1556
        %v1558 = vpop.f32.mrf.mxu0
        %v1559 = vadd.f32 %v1206, %v1558
        %v1560 = vpop.f32.mrf.mxu0
        %v1561 = vadd.f32 %v1208, %v1560
        %1562 = vmatprep.mubr.bf16.mxu0 %v554
        %1563 = vmatmul.mubr.bf16.gmra.mxu0 %v553
        %v1564 = vpop.f32.mrf.mxu0
        %v1565 = vadd.f32 %v1212, %v1564
        %v1566 = vpop.f32.mrf.mxu0
        %v1567 = vadd.f32 %v1214, %v1566
        %v1568 = vpop.f32.mrf.mxu0
        %v1569 = vadd.f32 %v1216, %v1568
        %v1570 = vpop.f32.mrf.mxu0
        %v1571 = vadd.f32 %v1218, %v1570
        %1572 = vmatprep.mubr.bf16.mxu0 %v558
        %1573 = vmatmul.mubr.bf16.gmra.mxu0 %v557
        %v1574 = vpop.f32.mrf.mxu0
        %v1575 = vadd.f32 %v1222, %v1574
        %v1576 = vpop.f32.mrf.mxu0
        %v1577 = vadd.f32 %v1224, %v1576
        %v1578 = vpop.f32.mrf.mxu0
        %v1579 = vadd.f32 %v1226, %v1578
        %v1580 = vpop.f32.mrf.mxu0
        %v1581 = vadd.f32 %v1228, %v1580
        %1582 = vmatprep.mubr.bf16.mxu0 %v562
        %1583 = vmatmul.mubr.bf16.gmra.mxu0 %v561
        %v1584 = vpop.f32.mrf.mxu0
        %v1585 = vadd.f32 %v1232, %v1584
        %v1586 = vpop.f32.mrf.mxu0
        %v1587 = vadd.f32 %v1234, %v1586
        %v1588 = vpop.f32.mrf.mxu0
        %v1589 = vadd.f32 %v1236, %v1588
        %v1590 = vpop.f32.mrf.mxu0
        %v1591 = vadd.f32 %v1238, %v1590
        %1592 = vmatprep.mubr.bf16.mxu0 %v566
        %1593 = vmatmul.mubr.bf16.gmra.mxu0 %v565
        %v1594 = vpop.f32.mrf.mxu0
        %v1595 = vadd.f32 %v1242, %v1594
        %v1596 = vpop.f32.mrf.mxu0
        %v1597 = vadd.f32 %v1244, %v1596
        %v1598 = vpop.f32.mrf.mxu0
        %v1599 = vadd.f32 %v1246, %v1598
        %v1600 = vpop.f32.mrf.mxu0
        %v1601 = vadd.f32 %v1248, %v1600
        %1602 = vmatprep.mubr.bf16.mxu0 %v570
        %1603 = vmatmul.mubr.bf16.gmra.mxu0 %v569
        %v1604 = vpop.f32.mrf.mxu0
        %v1605 = vadd.f32 %v1252, %v1604
        %v1606 = vpop.f32.mrf.mxu0
        %v1607 = vadd.f32 %v1254, %v1606
        %v1608 = vpop.f32.mrf.mxu0
        %v1609 = vadd.f32 %v1256, %v1608
        %v1610 = vpop.f32.mrf.mxu0
        %v1611 = vadd.f32 %v1258, %v1610
        %1612 = vmatprep.mubr.bf16.mxu0 %v574
        %1613 = vmatmul.mubr.bf16.gmra.mxu0 %v573
        %v1614 = vpop.f32.mrf.mxu0
        %v1615 = vadd.f32 %v1262, %v1614
        %v1616 = vpop.f32.mrf.mxu0
        %v1617 = vadd.f32 %v1264, %v1616
        %v1618 = vpop.f32.mrf.mxu0
        %v1619 = vadd.f32 %v1266, %v1618
        %v1620 = vpop.f32.mrf.mxu0
        %v1621 = vadd.f32 %v1268, %v1620
        %1622 = vmatprep.mubr.bf16.mxu0 %v578
        %1623 = vmatmul.mubr.bf16.gmra.mxu0 %v577
        %v1624 = vpop.f32.mrf.mxu0
        %v1625 = vadd.f32 %v1272, %v1624
        %v1626 = vpop.f32.mrf.mxu0
        %v1627 = vadd.f32 %v1274, %v1626
        %v1628 = vpop.f32.mrf.mxu0
        %v1629 = vadd.f32 %v1276, %v1628
        %v1630 = vpop.f32.mrf.mxu0
        %v1631 = vadd.f32 %v1278, %v1630
        %1632 = vmatprep.mubr.bf16.mxu0 %v582
        %1633 = vmatmul.mubr.bf16.gmra.mxu0 %v581
        %v1634 = vpop.f32.mrf.mxu0
        %v1635 = vadd.f32 %v1282, %v1634
        %v1636 = vpop.f32.mrf.mxu0
        %v1637 = vadd.f32 %v1284, %v1636
        %v1638 = vpop.f32.mrf.mxu0
        %v1639 = vadd.f32 %v1286, %v1638
        %v1640 = vpop.f32.mrf.mxu0
        %v1641 = vadd.f32 %v1288, %v1640
        %1642 = vmatprep.mubr.bf16.mxu0 %v586
        %1643 = vmatmul.mubr.bf16.gmra.mxu0 %v585
        %v1644 = vpop.f32.mrf.mxu0
        %v1645 = vadd.f32 %v1292, %v1644
        %v1646 = vpop.f32.mrf.mxu0
        %v1647 = vadd.f32 %v1294, %v1646
        %v1648 = vpop.f32.mrf.mxu0
        %v1649 = vadd.f32 %v1296, %v1648
        %v1650 = vpop.f32.mrf.mxu0
        %v1651 = vadd.f32 %v1298, %v1650
        %1652 = vmatprep.mubr.bf16.mxu0 %v590
        %1653 = vmatmul.mubr.bf16.gmra.mxu0 %v589
        %v1654 = vpop.f32.mrf.mxu0
        %v1655 = vadd.f32 %v1302, %v1654
        %v1656 = vpop.f32.mrf.mxu0
        %v1657 = vadd.f32 %v1304, %v1656
        %v1658 = vpop.f32.mrf.mxu0
        %v1659 = vadd.f32 %v1306, %v1658
        %v1660 = vpop.f32.mrf.mxu0
        %v1661 = vadd.f32 %v1308, %v1660
        %1662 = vmatprep.mubr.bf16.mxu0 %v594
        %1663 = vmatmul.mubr.bf16.gmra.mxu0 %v593
        %v1664 = vpop.f32.mrf.mxu0
        %v1665 = vadd.f32 %v1312, %v1664
        %v1666 = vpop.f32.mrf.mxu0
        %v1667 = vadd.f32 %v1314, %v1666
        %v1668 = vpop.f32.mrf.mxu0
        %v1669 = vadd.f32 %v1316, %v1668
        %v1670 = vpop.f32.mrf.mxu0
        %v1671 = vadd.f32 %v1318, %v1670
        %1672 = vmatprep.mubr.bf16.mxu0 %v598
        %1673 = vmatmul.mubr.bf16.gmra.mxu0 %v597
        %v1674 = vpop.f32.mrf.mxu0
        %v1675 = vadd.f32 %v1322, %v1674
        %v1676 = vpop.f32.mrf.mxu0
        %v1677 = vadd.f32 %v1324, %v1676
        %v1678 = vpop.f32.mrf.mxu0
        %v1679 = vadd.f32 %v1326, %v1678
        %v1680 = vpop.f32.mrf.mxu0
        %v1681 = vadd.f32 %v1328, %v1680
        %1682 = vmatprep.mubr.bf16.mxu0 %v602
        %1683 = vmatmul.mubr.bf16.gmra.mxu0 %v601
        %v1684 = vpop.f32.mrf.mxu0
        %v1685 = vadd.f32 %v1332, %v1684
        %v1686 = vpop.f32.mrf.mxu0
        %v1687 = vadd.f32 %v1334, %v1686
        %v1688 = vpop.f32.mrf.mxu0
        %v1689 = vadd.f32 %v1336, %v1688
        %v1690 = vpop.f32.mrf.mxu0
        %v1691 = vadd.f32 %v1338, %v1690
        %1692 = vdwg.mxu0
        %v1693 = vld [vmem:[#allocation7] sm:$0x1]
        %v1694 = vlaneseq
        %v1695 = vshrl.u32 %v1694, 7
        %v1696 = vsub.s32 0, %v1695
        %v1697 = vrot.slane %v1693, %v1696
        %v1698 = vadd.f32 %v1375, %v1697
        %v1699 = vadd.f32 %v1379, %v1697
        %v1700 = vadd.f32 %v1385, %v1697
        %v1701 = vadd.f32 %v1389, %v1697
        %v1702 = vadd.f32 %v1395, %v1697
        %v1703 = vadd.f32 %v1399, %v1697
        %v1704 = vadd.f32 %v1405, %v1697
        %v1705 = vadd.f32 %v1409, %v1697
        %v1706 = vadd.f32 %v1415, %v1697
        %v1707 = vadd.f32 %v1419, %v1697
        %v1708 = vadd.f32 %v1425, %v1697
        %v1709 = vadd.f32 %v1429, %v1697
        %v1710 = vadd.f32 %v1435, %v1697
        %v1711 = vadd.f32 %v1439, %v1697
        %v1712 = vadd.f32 %v1445, %v1697
        %v1713 = vadd.f32 %v1449, %v1697
        %v1714 = vadd.f32 %v1455, %v1697
        %v1715 = vadd.f32 %v1459, %v1697
        %v1716 = vadd.f32 %v1465, %v1697
        %v1717 = vadd.f32 %v1469, %v1697
        %v1718 = vadd.f32 %v1475, %v1697
        %v1719 = vadd.f32 %v1479, %v1697
        %v1720 = vadd.f32 %v1485, %v1697
        %v1721 = vadd.f32 %v1489, %v1697
        %v1722 = vadd.f32 %v1495, %v1697
        %v1723 = vadd.f32 %v1499, %v1697
        %v1724 = vadd.f32 %v1505, %v1697
        %v1725 = vadd.f32 %v1509, %v1697
        %v1726 = vadd.f32 %v1515, %v1697
        %v1727 = vadd.f32 %v1519, %v1697
        %v1728 = vadd.f32 %v1525, %v1697
        %v1729 = vadd.f32 %v1529, %v1697
        %v1730 = vadd.f32 %v1535, %v1697
        %v1731 = vadd.f32 %v1539, %v1697
        %v1732 = vadd.f32 %v1545, %v1697
        %v1733 = vadd.f32 %v1549, %v1697
        %v1734 = vadd.f32 %v1555, %v1697
        %v1735 = vadd.f32 %v1559, %v1697
        %v1736 = vadd.f32 %v1565, %v1697
        %v1737 = vadd.f32 %v1569, %v1697
        %v1738 = vadd.f32 %v1575, %v1697
        %v1739 = vadd.f32 %v1579, %v1697
        %v1740 = vadd.f32 %v1585, %v1697
        %v1741 = vadd.f32 %v1589, %v1697
        %v1742 = vadd.f32 %v1595, %v1697
        %v1743 = vadd.f32 %v1599, %v1697
        %v1744 = vadd.f32 %v1605, %v1697
        %v1745 = vadd.f32 %v1609, %v1697
        %v1746 = vadd.f32 %v1615, %v1697
        %v1747 = vadd.f32 %v1619, %v1697
        %v1748 = vadd.f32 %v1625, %v1697
        %v1749 = vadd.f32 %v1629, %v1697
        %v1750 = vadd.f32 %v1635, %v1697
        %v1751 = vadd.f32 %v1639, %v1697
        %v1752 = vadd.f32 %v1645, %v1697
        %v1753 = vadd.f32 %v1649, %v1697
        %v1754 = vadd.f32 %v1655, %v1697
        %v1755 = vadd.f32 %v1659, %v1697
        %v1756 = vadd.f32 %v1665, %v1697
        %v1757 = vadd.f32 %v1669, %v1697
        %v1758 = vadd.f32 %v1675, %v1697
        %v1759 = vadd.f32 %v1679, %v1697
        %v1760 = vadd.f32 %v1685, %v1697
        %v1761 = vadd.f32 %v1689, %v1697
        %v1762 = vmul.f32 %v1377, 0.25
        %v1763 = vmul.f32 %v1381, 0.25
        %v1764 = vmul.f32 %v1387, 0.25
        %v1765 = vmul.f32 %v1391, 0.25
        %v1766 = vmul.f32 %v1397, 0.25
        %v1767 = vmul.f32 %v1401, 0.25
        %v1768 = vmul.f32 %v1407, 0.25
        %v1769 = vmul.f32 %v1411, 0.25
        %v1770 = vmul.f32 %v1417, 0.25
        %v1771 = vmul.f32 %v1421, 0.25
        %v1772 = vmul.f32 %v1427, 0.25
        %v1773 = vmul.f32 %v1431, 0.25
        %v1774 = vmul.f32 %v1437, 0.25
        %v1775 = vmul.f32 %v1441, 0.25
        %v1776 = vmul.f32 %v1447, 0.25
        %v1777 = vmul.f32 %v1451, 0.25
        %v1778 = vmul.f32 %v1457, 0.25
        %v1779 = vmul.f32 %v1461, 0.25
        %v1780 = vmul.f32 %v1467, 0.25
        %v1781 = vmul.f32 %v1471, 0.25
        %v1782 = vmul.f32 %v1477, 0.25
        %v1783 = vmul.f32 %v1481, 0.25
        %v1784 = vmul.f32 %v1487, 0.25
        %v1785 = vmul.f32 %v1491, 0.25
        %v1786 = vmul.f32 %v1497, 0.25
        %v1787 = vmul.f32 %v1501, 0.25
        %v1788 = vmul.f32 %v1507, 0.25
        %v1789 = vmul.f32 %v1511, 0.25
        %v1790 = vmul.f32 %v1517, 0.25
        %v1791 = vmul.f32 %v1521, 0.25
        %v1792 = vmul.f32 %v1527, 0.25
        %v1793 = vmul.f32 %v1531, 0.25
        %v1794 = vmul.f32 %v1537, 0.25
        %v1795 = vmul.f32 %v1541, 0.25
        %v1796 = vmul.f32 %v1547, 0.25
        %v1797 = vmul.f32 %v1551, 0.25
        %v1798 = vmul.f32 %v1557, 0.25
        %v1799 = vmul.f32 %v1561, 0.25
        %v1800 = vmul.f32 %v1567, 0.25
        %v1801 = vmul.f32 %v1571, 0.25
        %v1802 = vmul.f32 %v1577, 0.25
        %v1803 = vmul.f32 %v1581, 0.25
        %v1804 = vmul.f32 %v1587, 0.25
        %v1805 = vmul.f32 %v1591, 0.25
        %v1806 = vmul.f32 %v1597, 0.25
        %v1807 = vmul.f32 %v1601, 0.25
        %v1808 = vmul.f32 %v1607, 0.25
        %v1809 = vmul.f32 %v1611, 0.25
        %v1810 = vmul.f32 %v1617, 0.25
        %v1811 = vmul.f32 %v1621, 0.25
        %v1812 = vmul.f32 %v1627, 0.25
        %v1813 = vmul.f32 %v1631, 0.25
        %v1814 = vmul.f32 %v1637, 0.25
        %v1815 = vmul.f32 %v1641, 0.25
        %v1816 = vmul.f32 %v1647, 0.25
        %v1817 = vmul.f32 %v1651, 0.25
        %v1818 = vmul.f32 %v1657, 0.25
        %v1819 = vmul.f32 %v1661, 0.25
        %v1820 = vmul.f32 %v1667, 0.25
        %v1821 = vmul.f32 %v1671, 0.25
        %v1822 = vmul.f32 %v1677, 0.25
        %v1823 = vmul.f32 %v1681, 0.25
        %v1824 = vmul.f32 %v1687, 0.25
        %v1825 = vmul.f32 %v1691, 0.25
        %1826 = vadd.xlane.f32.xlu0 %v1698
        %v1827 = vpop.xlane.xlu0 %1826
        %1828 = vadd.xlane.f32.xlu0 %v1699
        %v1829 = vpop.xlane.xlu0 %1828
        %1830 = vadd.xlane.f32.xlu0 %v1700
        %v1831 = vpop.xlane.xlu0 %1830
        %1832 = vadd.xlane.f32.xlu0 %v1701
        %v1833 = vpop.xlane.xlu0 %1832
        %1834 = vadd.xlane.f32.xlu0 %v1702
        %v1835 = vpop.xlane.xlu0 %1834
        %1836 = vadd.xlane.f32.xlu0 %v1703
        %v1837 = vpop.xlane.xlu0 %1836
        %1838 = vadd.xlane.f32.xlu0 %v1704
        %v1839 = vpop.xlane.xlu0 %1838
        %1840 = vadd.xlane.f32.xlu0 %v1705
        %v1841 = vpop.xlane.xlu0 %1840
        %1842 = vadd.xlane.f32.xlu0 %v1706
        %v1843 = vpop.xlane.xlu0 %1842
        %1844 = vadd.xlane.f32.xlu0 %v1707
        %v1845 = vpop.xlane.xlu0 %1844
        %1846 = vadd.xlane.f32.xlu0 %v1708
        %v1847 = vpop.xlane.xlu0 %1846
        %1848 = vadd.xlane.f32.xlu0 %v1709
        %v1849 = vpop.xlane.xlu0 %1848
        %1850 = vadd.xlane.f32.xlu0 %v1710
        %v1851 = vpop.xlane.xlu0 %1850
        %1852 = vadd.xlane.f32.xlu0 %v1711
        %v1853 = vpop.xlane.xlu0 %1852
        %1854 = vadd.xlane.f32.xlu0 %v1712
        %v1855 = vpop.xlane.xlu0 %1854
        %1856 = vadd.xlane.f32.xlu0 %v1713
        %v1857 = vpop.xlane.xlu0 %1856
        %1858 = vadd.xlane.f32.xlu0 %v1714
        %v1859 = vpop.xlane.xlu0 %1858
        %1860 = vadd.xlane.f32.xlu0 %v1715
        %v1861 = vpop.xlane.xlu0 %1860
        %1862 = vadd.xlane.f32.xlu0 %v1716
        %v1863 = vpop.xlane.xlu0 %1862
        %1864 = vadd.xlane.f32.xlu0 %v1717
        %v1865 = vpop.xlane.xlu0 %1864
        %1866 = vadd.xlane.f32.xlu0 %v1718
        %v1867 = vpop.xlane.xlu0 %1866
        %1868 = vadd.xlane.f32.xlu0 %v1719
        %v1869 = vpop.xlane.xlu0 %1868
        %1870 = vadd.xlane.f32.xlu0 %v1720
        %v1871 = vpop.xlane.xlu0 %1870
        %1872 = vadd.xlane.f32.xlu0 %v1721
        %v1873 = vpop.xlane.xlu0 %1872
        %1874 = vadd.xlane.f32.xlu0 %v1722
        %v1875 = vpop.xlane.xlu0 %1874
        %1876 = vadd.xlane.f32.xlu0 %v1723
        %v1877 = vpop.xlane.xlu0 %1876
        %1878 = vadd.xlane.f32.xlu0 %v1724
        %v1879 = vpop.xlane.xlu0 %1878
        %1880 = vadd.xlane.f32.xlu0 %v1725
        %v1881 = vpop.xlane.xlu0 %1880
        %1882 = vadd.xlane.f32.xlu0 %v1726
        %v1883 = vpop.xlane.xlu0 %1882
        %1884 = vadd.xlane.f32.xlu0 %v1727
        %v1885 = vpop.xlane.xlu0 %1884
        %1886 = vadd.xlane.f32.xlu0 %v1728
        %v1887 = vpop.xlane.xlu0 %1886
        %1888 = vadd.xlane.f32.xlu0 %v1729
        %v1889 = vpop.xlane.xlu0 %1888
        %1890 = vadd.xlane.f32.xlu0 %v1730
        %v1891 = vpop.xlane.xlu0 %1890
        %1892 = vadd.xlane.f32.xlu0 %v1731
        %v1893 = vpop.xlane.xlu0 %1892
        %1894 = vadd.xlane.f32.xlu0 %v1732
        %v1895 = vpop.xlane.xlu0 %1894
        %1896 = vadd.xlane.f32.xlu0 %v1733
        %v1897 = vpop.xlane.xlu0 %1896
        %1898 = vadd.xlane.f32.xlu0 %v1734
        %v1899 = vpop.xlane.xlu0 %1898
        %1900 = vadd.xlane.f32.xlu0 %v1735
        %v1901 = vpop.xlane.xlu0 %1900
        %1902 = vadd.xlane.f32.xlu0 %v1736
        %v1903 = vpop.xlane.xlu0 %1902
        %1904 = vadd.xlane.f32.xlu0 %v1737
        %v1905 = vpop.xlane.xlu0 %1904
        %1906 = vadd.xlane.f32.xlu0 %v1738
        %v1907 = vpop.xlane.xlu0 %1906
        %1908 = vadd.xlane.f32.xlu0 %v1739
        %v1909 = vpop.xlane.xlu0 %1908
        %1910 = vadd.xlane.f32.xlu0 %v1740
        %v1911 = vpop.xlane.xlu0 %1910
        %1912 = vadd.xlane.f32.xlu0 %v1741
        %v1913 = vpop.xlane.xlu0 %1912
        %1914 = vadd.xlane.f32.xlu0 %v1742
        %v1915 = vpop.xlane.xlu0 %1914
        %1916 = vadd.xlane.f32.xlu0 %v1743
        %v1917 = vpop.xlane.xlu0 %1916
        %1918 = vadd.xlane.f32.xlu0 %v1744
        %v1919 = vpop.xlane.xlu0 %1918
        %1920 = vadd.xlane.f32.xlu0 %v1745
        %v1921 = vpop.xlane.xlu0 %1920
        %1922 = vadd.xlane.f32.xlu0 %v1746
        %v1923 = vpop.xlane.xlu0 %1922
        %1924 = vadd.xlane.f32.xlu0 %v1747
        %v1925 = vpop.xlane.xlu0 %1924
        %1926 = vadd.xlane.f32.xlu0 %v1748
        %v1927 = vpop.xlane.xlu0 %1926
        %1928 = vadd.xlane.f32.xlu0 %v1749
        %v1929 = vpop.xlane.xlu0 %1928
        %1930 = vadd.xlane.f32.xlu0 %v1750
        %v1931 = vpop.xlane.xlu0 %1930
        %1932 = vadd.xlane.f32.xlu0 %v1751
        %v1933 = vpop.xlane.xlu0 %1932
        %1934 = vadd.xlane.f32.xlu0 %v1752
        %v1935 = vpop.xlane.xlu0 %1934
        %1936 = vadd.xlane.f32.xlu0 %v1753
        %v1937 = vpop.xlane.xlu0 %1936
        %1938 = vadd.xlane.f32.xlu0 %v1754
        %v1939 = vpop.xlane.xlu0 %1938
        %1940 = vadd.xlane.f32.xlu0 %v1755
        %v1941 = vpop.xlane.xlu0 %1940
        %1942 = vadd.xlane.f32.xlu0 %v1756
        %v1943 = vpop.xlane.xlu0 %1942
        %1944 = vadd.xlane.f32.xlu0 %v1757
        %v1945 = vpop.xlane.xlu0 %1944
        %1946 = vadd.xlane.f32.xlu0 %v1758
        %v1947 = vpop.xlane.xlu0 %1946
        %1948 = vadd.xlane.f32.xlu0 %v1759
        %v1949 = vpop.xlane.xlu0 %1948
        %1950 = vadd.xlane.f32.xlu0 %v1760
        %v1951 = vpop.xlane.xlu0 %1950
        %1952 = vadd.xlane.f32.xlu0 %v1761
        %v1953 = vpop.xlane.xlu0 %1952
        %v1954 = vrcp.pop 128.0
        %v1955 = vmul.f32 %v1827, %v1954
        %v1956 = vmul.f32 %v1829, %v1954
        %v1957 = vmul.f32 %v1831, %v1954
        %v1958 = vmul.f32 %v1833, %v1954
        %v1959 = vmul.f32 %v1835, %v1954
        %v1960 = vmul.f32 %v1837, %v1954
        %v1961 = vmul.f32 %v1839, %v1954
        %v1962 = vmul.f32 %v1841, %v1954
        %v1963 = vmul.f32 %v1843, %v1954
        %v1964 = vmul.f32 %v1845, %v1954
        %v1965 = vmul.f32 %v1847, %v1954
        %v1966 = vmul.f32 %v1849, %v1954
        %v1967 = vmul.f32 %v1851, %v1954
        %v1968 = vmul.f32 %v1853, %v1954
        %v1969 = vmul.f32 %v1855, %v1954
        %v1970 = vmul.f32 %v1857, %v1954
        %v1971 = vmul.f32 %v1859, %v1954
        %v1972 = vmul.f32 %v1861, %v1954
        %v1973 = vmul.f32 %v1863, %v1954
        %v1974 = vmul.f32 %v1865, %v1954
        %v1975 = vmul.f32 %v1867, %v1954
        %v1976 = vmul.f32 %v1869, %v1954
        %v1977 = vmul.f32 %v1871, %v1954
        %v1978 = vmul.f32 %v1873, %v1954
        %v1979 = vmul.f32 %v1875, %v1954
        %v1980 = vmul.f32 %v1877, %v1954
        %v1981 = vmul.f32 %v1879, %v1954
        %v1982 = vmul.f32 %v1881, %v1954
        %v1983 = vmul.f32 %v1883, %v1954
        %v1984 = vmul.f32 %v1885, %v1954
        %v1985 = vmul.f32 %v1887, %v1954
        %v1986 = vmul.f32 %v1889, %v1954
        %v1987 = vmul.f32 %v1891, %v1954
        %v1988 = vmul.f32 %v1893, %v1954
        %v1989 = vmul.f32 %v1895, %v1954
        %v1990 = vmul.f32 %v1897, %v1954
        %v1991 = vmul.f32 %v1899, %v1954
        %v1992 = vmul.f32 %v1901, %v1954
        %v1993 = vmul.f32 %v1903, %v1954
        %v1994 = vmul.f32 %v1905, %v1954
        %v1995 = vmul.f32 %v1907, %v1954
        %v1996 = vmul.f32 %v1909, %v1954
        %v1997 = vmul.f32 %v1911, %v1954
        %v1998 = vmul.f32 %v1913, %v1954
        %v1999 = vmul.f32 %v1915, %v1954
        %v2000 = vmul.f32 %v1917, %v1954
        %v2001 = vmul.f32 %v1919, %v1954
        %v2002 = vmul.f32 %v1921, %v1954
        %v2003 = vmul.f32 %v1923, %v1954
        %v2004 = vmul.f32 %v1925, %v1954
        %v2005 = vmul.f32 %v1927, %v1954
        %v2006 = vmul.f32 %v1929, %v1954
        %v2007 = vmul.f32 %v1931, %v1954
        %v2008 = vmul.f32 %v1933, %v1954
        %v2009 = vmul.f32 %v1935, %v1954
        %v2010 = vmul.f32 %v1937, %v1954
        %v2011 = vmul.f32 %v1939, %v1954
        %v2012 = vmul.f32 %v1941, %v1954
        %v2013 = vmul.f32 %v1943, %v1954
        %v2014 = vmul.f32 %v1945, %v1954
        %v2015 = vmul.f32 %v1947, %v1954
        %v2016 = vmul.f32 %v1949, %v1954
        %v2017 = vmul.f32 %v1951, %v1954
        %v2018 = vmul.f32 %v1953, %v1954
        %v2019 = vsub.f32 %v1698, %v1955
        %v2020 = vsub.f32 %v1699, %v1956
        %v2021 = vsub.f32 %v1700, %v1957
        %v2022 = vsub.f32 %v1701, %v1958
        %v2023 = vsub.f32 %v1702, %v1959
        %v2024 = vsub.f32 %v1703, %v1960
        %v2025 = vsub.f32 %v1704, %v1961
        %v2026 = vsub.f32 %v1705, %v1962
        %v2027 = vsub.f32 %v1706, %v1963
        %v2028 = vsub.f32 %v1707, %v1964
        %v2029 = vsub.f32 %v1708, %v1965
        %v2030 = vsub.f32 %v1709, %v1966
        %v2031 = vsub.f32 %v1710, %v1967
        %v2032 = vsub.f32 %v1711, %v1968
        %v2033 = vsub.f32 %v1712, %v1969
        %v2034 = vsub.f32 %v1713, %v1970
        %v2035 = vsub.f32 %v1714, %v1971
        %v2036 = vsub.f32 %v1715, %v1972
        %v2037 = vsub.f32 %v1716, %v1973
        %v2038 = vsub.f32 %v1717, %v1974
        %v2039 = vsub.f32 %v1718, %v1975
        %v2040 = vsub.f32 %v1719, %v1976
        %v2041 = vsub.f32 %v1720, %v1977
        %v2042 = vsub.f32 %v1721, %v1978
        %v2043 = vsub.f32 %v1722, %v1979
        %v2044 = vsub.f32 %v1723, %v1980
        %v2045 = vsub.f32 %v1724, %v1981
        %v2046 = vsub.f32 %v1725, %v1982
        %v2047 = vsub.f32 %v1726, %v1983
        %v2048 = vsub.f32 %v1727, %v1984
        %v2049 = vsub.f32 %v1728, %v1985
        %v2050 = vsub.f32 %v1729, %v1986
        %v2051 = vsub.f32 %v1730, %v1987
        %v2052 = vsub.f32 %v1731, %v1988
        %v2053 = vsub.f32 %v1732, %v1989
        %v2054 = vsub.f32 %v1733, %v1990
        %v2055 = vsub.f32 %v1734, %v1991
        %v2056 = vsub.f32 %v1735, %v1992
        %v2057 = vsub.f32 %v1736, %v1993
        %v2058 = vsub.f32 %v1737, %v1994
        %v2059 = vsub.f32 %v1738, %v1995
        %v2060 = vsub.f32 %v1739, %v1996
        %v2061 = vsub.f32 %v1740, %v1997
        %v2062 = vsub.f32 %v1741, %v1998
        %v2063 = vsub.f32 %v1742, %v1999
        %v2064 = vsub.f32 %v1743, %v2000
        %v2065 = vsub.f32 %v1744, %v2001
        %v2066 = vsub.f32 %v1745, %v2002
        %v2067 = vsub.f32 %v1746, %v2003
        %v2068 = vsub.f32 %v1747, %v2004
        %v2069 = vsub.f32 %v1748, %v2005
        %v2070 = vsub.f32 %v1749, %v2006
        %v2071 = vsub.f32 %v1750, %v2007
        %v2072 = vsub.f32 %v1751, %v2008
        %v2073 = vsub.f32 %v1752, %v2009
        %v2074 = vsub.f32 %v1753, %v2010
        %v2075 = vsub.f32 %v1754, %v2011
        %v2076 = vsub.f32 %v1755, %v2012
        %v2077 = vsub.f32 %v1756, %v2013
        %v2078 = vsub.f32 %v1757, %v2014
        %v2079 = vsub.f32 %v1758, %v2015
        %v2080 = vsub.f32 %v1759, %v2016
        %v2081 = vsub.f32 %v1760, %v2017
        %v2082 = vsub.f32 %v1761, %v2018
        %v2083 = vmul.f32 %v2019, %v2019
        %v2084 = vmul.f32 %v2020, %v2020
        %v2085 = vmul.f32 %v2021, %v2021
        %v2086 = vmul.f32 %v2022, %v2022
        %v2087 = vmul.f32 %v2023, %v2023
        %v2088 = vmul.f32 %v2024, %v2024
        %v2089 = vmul.f32 %v2025, %v2025
        %v2090 = vmul.f32 %v2026, %v2026
        %v2091 = vmul.f32 %v2027, %v2027
        %v2092 = vmul.f32 %v2028, %v2028
        %v2093 = vmul.f32 %v2029, %v2029
        %v2094 = vmul.f32 %v2030, %v2030
        %v2095 = vmul.f32 %v2031, %v2031
        %v2096 = vmul.f32 %v2032, %v2032
        %v2097 = vmul.f32 %v2033, %v2033
        %v2098 = vmul.f32 %v2034, %v2034
        %v2099 = vmul.f32 %v2035, %v2035
        %v2100 = vmul.f32 %v2036, %v2036
        %v2101 = vmul.f32 %v2037, %v2037
        %v2102 = vmul.f32 %v2038, %v2038
        %v2103 = vmul.f32 %v2039, %v2039
        %v2104 = vmul.f32 %v2040, %v2040
        %v2105 = vmul.f32 %v2041, %v2041
        %v2106 = vmul.f32 %v2042, %v2042
        %v2107 = vmul.f32 %v2043, %v2043
        %v2108 = vmul.f32 %v2044, %v2044
        %v2109 = vmul.f32 %v2045, %v2045
        %v2110 = vmul.f32 %v2046, %v2046
        %v2111 = vmul.f32 %v2047, %v2047
        %v2112 = vmul.f32 %v2048, %v2048
        %v2113 = vmul.f32 %v2049, %v2049
        %v2114 = vmul.f32 %v2050, %v2050
        %v2115 = vmul.f32 %v2051, %v2051
        %v2116 = vmul.f32 %v2052, %v2052
        %v2117 = vmul.f32 %v2053, %v2053
        %v2118 = vmul.f32 %v2054, %v2054
        %v2119 = vmul.f32 %v2055, %v2055
        %v2120 = vmul.f32 %v2056, %v2056
        %v2121 = vmul.f32 %v2057, %v2057
        %v2122 = vmul.f32 %v2058, %v2058
        %v2123 = vmul.f32 %v2059, %v2059
        %v2124 = vmul.f32 %v2060, %v2060
        %v2125 = vmul.f32 %v2061, %v2061
        %v2126 = vmul.f32 %v2062, %v2062
        %v2127 = vmul.f32 %v2063, %v2063
        %v2128 = vmul.f32 %v2064, %v2064
        %v2129 = vmul.f32 %v2065, %v2065
        %v2130 = vmul.f32 %v2066, %v2066
        %v2131 = vmul.f32 %v2067, %v2067
        %v2132 = vmul.f32 %v2068, %v2068
        %v2133 = vmul.f32 %v2069, %v2069
        %v2134 = vmul.f32 %v2070, %v2070
        %v2135 = vmul.f32 %v2071, %v2071
        %v2136 = vmul.f32 %v2072, %v2072
        %v2137 = vmul.f32 %v2073, %v2073
        %v2138 = vmul.f32 %v2074, %v2074
        %v2139 = vmul.f32 %v2075, %v2075
        %v2140 = vmul.f32 %v2076, %v2076
        %v2141 = vmul.f32 %v2077, %v2077
        %v2142 = vmul.f32 %v2078, %v2078
        %v2143 = vmul.f32 %v2079, %v2079
        %v2144 = vmul.f32 %v2080, %v2080
        %v2145 = vmul.f32 %v2081, %v2081
        %v2146 = vmul.f32 %v2082, %v2082
        %2147 = vadd.xlane.f32.xlu0 %v2083
        %v2148 = vpop.xlane.xlu0 %2147
        %2149 = vadd.xlane.f32.xlu0 %v2084
        %v2150 = vpop.xlane.xlu0 %2149
        %2151 = vadd.xlane.f32.xlu0 %v2085
        %v2152 = vpop.xlane.xlu0 %2151
        %2153 = vadd.xlane.f32.xlu0 %v2086
        %v2154 = vpop.xlane.xlu0 %2153
        %2155 = vadd.xlane.f32.xlu0 %v2087
        %v2156 = vpop.xlane.xlu0 %2155
        %2157 = vadd.xlane.f32.xlu0 %v2088
        %v2158 = vpop.xlane.xlu0 %2157
        %2159 = vadd.xlane.f32.xlu0 %v2089
        %v2160 = vpop.xlane.xlu0 %2159
        %2161 = vadd.xlane.f32.xlu0 %v2090
        %v2162 = vpop.xlane.xlu0 %2161
        %2163 = vadd.xlane.f32.xlu0 %v2091
        %v2164 = vpop.xlane.xlu0 %2163
        %2165 = vadd.xlane.f32.xlu0 %v2092
        %v2166 = vpop.xlane.xlu0 %2165
        %2167 = vadd.xlane.f32.xlu0 %v2093
        %v2168 = vpop.xlane.xlu0 %2167
        %2169 = vadd.xlane.f32.xlu0 %v2094
        %v2170 = vpop.xlane.xlu0 %2169
        %2171 = vadd.xlane.f32.xlu0 %v2095
        %v2172 = vpop.xlane.xlu0 %2171
        %2173 = vadd.xlane.f32.xlu0 %v2096
        %v2174 = vpop.xlane.xlu0 %2173
        %2175 = vadd.xlane.f32.xlu0 %v2097
        %v2176 = vpop.xlane.xlu0 %2175
        %2177 = vadd.xlane.f32.xlu0 %v2098
        %v2178 = vpop.xlane.xlu0 %2177
        %2179 = vadd.xlane.f32.xlu0 %v2099
        %v2180 = vpop.xlane.xlu0 %2179
        %2181 = vadd.xlane.f32.xlu0 %v2100
        %v2182 = vpop.xlane.xlu0 %2181
        %2183 = vadd.xlane.f32.xlu0 %v2101
        %v2184 = vpop.xlane.xlu0 %2183
        %2185 = vadd.xlane.f32.xlu0 %v2102
        %v2186 = vpop.xlane.xlu0 %2185
        %2187 = vadd.xlane.f32.xlu0 %v2103
        %v2188 = vpop.xlane.xlu0 %2187
        %2189 = vadd.xlane.f32.xlu0 %v2104
        %v2190 = vpop.xlane.xlu0 %2189
        %2191 = vadd.xlane.f32.xlu0 %v2105
        %v2192 = vpop.xlane.xlu0 %2191
        %2193 = vadd.xlane.f32.xlu0 %v2106
        %v2194 = vpop.xlane.xlu0 %2193
        %2195 = vadd.xlane.f32.xlu0 %v2107
        %v2196 = vpop.xlane.xlu0 %2195
        %2197 = vadd.xlane.f32.xlu0 %v2108
        %v2198 = vpop.xlane.xlu0 %2197
        %2199 = vadd.xlane.f32.xlu0 %v2109
        %v2200 = vpop.xlane.xlu0 %2199
        %2201 = vadd.xlane.f32.xlu0 %v2110
        %v2202 = vpop.xlane.xlu0 %2201
        %2203 = vadd.xlane.f32.xlu0 %v2111
        %v2204 = vpop.xlane.xlu0 %2203
        %2205 = vadd.xlane.f32.xlu0 %v2112
        %v2206 = vpop.xlane.xlu0 %2205
        %2207 = vadd.xlane.f32.xlu0 %v2113
        %v2208 = vpop.xlane.xlu0 %2207
        %2209 = vadd.xlane.f32.xlu0 %v2114
        %v2210 = vpop.xlane.xlu0 %2209
        %2211 = vadd.xlane.f32.xlu0 %v2115
        %v2212 = vpop.xlane.xlu0 %2211
        %2213 = vadd.xlane.f32.xlu0 %v2116
        %v2214 = vpop.xlane.xlu0 %2213
        %2215 = vadd.xlane.f32.xlu0 %v2117
        %v2216 = vpop.xlane.xlu0 %2215
        %2217 = vadd.xlane.f32.xlu0 %v2118
        %v2218 = vpop.xlane.xlu0 %2217
        %2219 = vadd.xlane.f32.xlu0 %v2119
        %v2220 = vpop.xlane.xlu0 %2219
        %2221 = vadd.xlane.f32.xlu0 %v2120
        %v2222 = vpop.xlane.xlu0 %2221
        %2223 = vadd.xlane.f32.xlu0 %v2121
        %v2224 = vpop.xlane.xlu0 %2223
        %2225 = vadd.xlane.f32.xlu0 %v2122
        %v2226 = vpop.xlane.xlu0 %2225
        %2227 = vadd.xlane.f32.xlu0 %v2123
        %v2228 = vpop.xlane.xlu0 %2227
        %2229 = vadd.xlane.f32.xlu0 %v2124
        %v2230 = vpop.xlane.xlu0 %2229
        %2231 = vadd.xlane.f32.xlu0 %v2125
        %v2232 = vpop.xlane.xlu0 %2231
        %2233 = vadd.xlane.f32.xlu0 %v2126
        %v2234 = vpop.xlane.xlu0 %2233
        %2235 = vadd.xlane.f32.xlu0 %v2127
        %v2236 = vpop.xlane.xlu0 %2235
        %2237 = vadd.xlane.f32.xlu0 %v2128
        %v2238 = vpop.xlane.xlu0 %2237
        %2239 = vadd.xlane.f32.xlu0 %v2129
        %v2240 = vpop.xlane.xlu0 %2239
        %2241 = vadd.xlane.f32.xlu0 %v2130
        %v2242 = vpop.xlane.xlu0 %2241
        %2243 = vadd.xlane.f32.xlu0 %v2131
        %v2244 = vpop.xlane.xlu0 %2243
        %2245 = vadd.xlane.f32.xlu0 %v2132
        %v2246 = vpop.xlane.xlu0 %2245
        %2247 = vadd.xlane.f32.xlu0 %v2133
        %v2248 = vpop.xlane.xlu0 %2247
        %2249 = vadd.xlane.f32.xlu0 %v2134
        %v2250 = vpop.xlane.xlu0 %2249
        %2251 = vadd.xlane.f32.xlu0 %v2135
        %v2252 = vpop.xlane.xlu0 %2251
        %2253 = vadd.xlane.f32.xlu0 %v2136
        %v2254 = vpop.xlane.xlu0 %2253
        %2255 = vadd.xlane.f32.xlu0 %v2137
        %v2256 = vpop.xlane.xlu0 %2255
        %2257 = vadd.xlane.f32.xlu0 %v2138
        %v2258 = vpop.xlane.xlu0 %2257
        %2259 = vadd.xlane.f32.xlu0 %v2139
        %v2260 = vpop.xlane.xlu0 %2259
        %2261 = vadd.xlane.f32.xlu0 %v2140
        %v2262 = vpop.xlane.xlu0 %2261
        %2263 = vadd.xlane.f32.xlu0 %v2141
        %v2264 = vpop.xlane.xlu0 %2263
        %2265 = vadd.xlane.f32.xlu0 %v2142
        %v2266 = vpop.xlane.xlu0 %2265
        %2267 = vadd.xlane.f32.xlu0 %v2143
        %v2268 = vpop.xlane.xlu0 %2267
        %2269 = vadd.xlane.f32.xlu0 %v2144
        %v2270 = vpop.xlane.xlu0 %2269
        %2271 = vadd.xlane.f32.xlu0 %v2145
        %v2272 = vpop.xlane.xlu0 %2271
        %2273 = vadd.xlane.f32.xlu0 %v2146
        %v2274 = vpop.xlane.xlu0 %2273
        %v2275 = vmul.f32 %v2148, %v1954
        %v2276 = vmul.f32 %v2150, %v1954
        %v2277 = vmul.f32 %v2152, %v1954
        %v2278 = vmul.f32 %v2154, %v1954
        %v2279 = vmul.f32 %v2156, %v1954
        %v2280 = vmul.f32 %v2158, %v1954
        %v2281 = vmul.f32 %v2160, %v1954
        %v2282 = vmul.f32 %v2162, %v1954
        %v2283 = vmul.f32 %v2164, %v1954
        %v2284 = vmul.f32 %v2166, %v1954
        %v2285 = vmul.f32 %v2168, %v1954
        %v2286 = vmul.f32 %v2170, %v1954
        %v2287 = vmul.f32 %v2172, %v1954
        %v2288 = vmul.f32 %v2174, %v1954
        %v2289 = vmul.f32 %v2176, %v1954
        %v2290 = vmul.f32 %v2178, %v1954
        %v2291 = vmul.f32 %v2180, %v1954
        %v2292 = vmul.f32 %v2182, %v1954
        %v2293 = vmul.f32 %v2184, %v1954
        %v2294 = vmul.f32 %v2186, %v1954
        %v2295 = vmul.f32 %v2188, %v1954
        %v2296 = vmul.f32 %v2190, %v1954
        %v2297 = vmul.f32 %v2192, %v1954
        %v2298 = vmul.f32 %v2194, %v1954
        %v2299 = vmul.f32 %v2196, %v1954
        %v2300 = vmul.f32 %v2198, %v1954
        %v2301 = vmul.f32 %v2200, %v1954
        %v2302 = vmul.f32 %v2202, %v1954
        %v2303 = vmul.f32 %v2204, %v1954
        %v2304 = vmul.f32 %v2206, %v1954
        %v2305 = vmul.f32 %v2208, %v1954
        %v2306 = vmul.f32 %v2210, %v1954
        %v2307 = vmul.f32 %v2212, %v1954
        %v2308 = vmul.f32 %v2214, %v1954
        %v2309 = vmul.f32 %v2216, %v1954
        %v2310 = vmul.f32 %v2218, %v1954
        %v2311 = vmul.f32 %v2220, %v1954
        %v2312 = vmul.f32 %v2222, %v1954
        %v2313 = vmul.f32 %v2224, %v1954
        %v2314 = vmul.f32 %v2226, %v1954
        %v2315 = vmul.f32 %v2228, %v1954
        %v2316 = vmul.f32 %v2230, %v1954
        %v2317 = vmul.f32 %v2232, %v1954
        %v2318 = vmul.f32 %v2234, %v1954
        %v2319 = vmul.f32 %v2236, %v1954
        %v2320 = vmul.f32 %v2238, %v1954
        %v2321 = vmul.f32 %v2240, %v1954
        %v2322 = vmul.f32 %v2242, %v1954
        %v2323 = vmul.f32 %v2244, %v1954
        %v2324 = vmul.f32 %v2246, %v1954
        %v2325 = vmul.f32 %v2248, %v1954
        %v2326 = vmul.f32 %v2250, %v1954
        %v2327 = vmul.f32 %v2252, %v1954
        %v2328 = vmul.f32 %v2254, %v1954
        %v2329 = vmul.f32 %v2256, %v1954
        %v2330 = vmul.f32 %v2258, %v1954
        %v2331 = vmul.f32 %v2260, %v1954
        %v2332 = vmul.f32 %v2262, %v1954
        %v2333 = vmul.f32 %v2264, %v1954
        %v2334 = vmul.f32 %v2266, %v1954
        %v2335 = vmul.f32 %v2268, %v1954
        %v2336 = vmul.f32 %v2270, %v1954
        %v2337 = vmul.f32 %v2272, %v1954
        %v2338 = vmul.f32 %v2274, %v1954
        %v2339 = vadd.f32 %v2275, 1e-06
        %v2340 = vadd.f32 %v2276, 1e-06
        %v2341 = vadd.f32 %v2277, 1e-06
        %v2342 = vadd.f32 %v2278, 1e-06
        %v2343 = vadd.f32 %v2279, 1e-06
        %v2344 = vadd.f32 %v2280, 1e-06
        %v2345 = vadd.f32 %v2281, 1e-06
        %v2346 = vadd.f32 %v2282, 1e-06
        %v2347 = vadd.f32 %v2283, 1e-06
        %v2348 = vadd.f32 %v2284, 1e-06
        %v2349 = vadd.f32 %v2285, 1e-06
        %v2350 = vadd.f32 %v2286, 1e-06
        %v2351 = vadd.f32 %v2287, 1e-06
        %v2352 = vadd.f32 %v2288, 1e-06
        %v2353 = vadd.f32 %v2289, 1e-06
        %v2354 = vadd.f32 %v2290, 1e-06
        %v2355 = vadd.f32 %v2291, 1e-06
        %v2356 = vadd.f32 %v2292, 1e-06
        %v2357 = vadd.f32 %v2293, 1e-06
        %v2358 = vadd.f32 %v2294, 1e-06
        %v2359 = vadd.f32 %v2295, 1e-06
        %v2360 = vadd.f32 %v2296, 1e-06
        %v2361 = vadd.f32 %v2297, 1e-06
        %v2362 = vadd.f32 %v2298, 1e-06
        %v2363 = vadd.f32 %v2299, 1e-06
        %v2364 = vadd.f32 %v2300, 1e-06
        %v2365 = vadd.f32 %v2301, 1e-06
        %v2366 = vadd.f32 %v2302, 1e-06
        %v2367 = vadd.f32 %v2303, 1e-06
        %v2368 = vadd.f32 %v2304, 1e-06
        %v2369 = vadd.f32 %v2305, 1e-06
        %v2370 = vadd.f32 %v2306, 1e-06
        %v2371 = vadd.f32 %v2307, 1e-06
        %v2372 = vadd.f32 %v2308, 1e-06
        %v2373 = vadd.f32 %v2309, 1e-06
        %v2374 = vadd.f32 %v2310, 1e-06
        %v2375 = vadd.f32 %v2311, 1e-06
        %v2376 = vadd.f32 %v2312, 1e-06
        %v2377 = vadd.f32 %v2313, 1e-06
        %v2378 = vadd.f32 %v2314, 1e-06
        %v2379 = vadd.f32 %v2315, 1e-06
        %v2380 = vadd.f32 %v2316, 1e-06
        %v2381 = vadd.f32 %v2317, 1e-06
        %v2382 = vadd.f32 %v2318, 1e-06
        %v2383 = vadd.f32 %v2319, 1e-06
        %v2384 = vadd.f32 %v2320, 1e-06
        %v2385 = vadd.f32 %v2321, 1e-06
        %v2386 = vadd.f32 %v2322, 1e-06
        %v2387 = vadd.f32 %v2323, 1e-06
        %v2388 = vadd.f32 %v2324, 1e-06
        %v2389 = vadd.f32 %v2325, 1e-06
        %v2390 = vadd.f32 %v2326, 1e-06
        %v2391 = vadd.f32 %v2327, 1e-06
        %v2392 = vadd.f32 %v2328, 1e-06
        %v2393 = vadd.f32 %v2329, 1e-06
        %v2394 = vadd.f32 %v2330, 1e-06
        %v2395 = vadd.f32 %v2331, 1e-06
        %v2396 = vadd.f32 %v2332, 1e-06
        %v2397 = vadd.f32 %v2333, 1e-06
        %v2398 = vadd.f32 %v2334, 1e-06
        %v2399 = vadd.f32 %v2335, 1e-06
        %v2400 = vadd.f32 %v2336, 1e-06
        %v2401 = vadd.f32 %v2337, 1e-06
        %v2402 = vadd.f32 %v2338, 1e-06
        %v2403 = vrsqrt.pop %v2339
        %v2404 = vrsqrt.pop %v2340
        %v2405 = vrsqrt.pop %v2341
        %v2406 = vrsqrt.pop %v2342
        %v2407 = vrsqrt.pop %v2343
        %v2408 = vrsqrt.pop %v2344
        %v2409 = vrsqrt.pop %v2345
        %v2410 = vrsqrt.pop %v2346
        %v2411 = vrsqrt.pop %v2347
        %v2412 = vrsqrt.pop %v2348
        %v2413 = vrsqrt.pop %v2349
        %v2414 = vrsqrt.pop %v2350
        %v2415 = vrsqrt.pop %v2351
        %v2416 = vrsqrt.pop %v2352
        %v2417 = vrsqrt.pop %v2353
        %v2418 = vrsqrt.pop %v2354
        %v2419 = vrsqrt.pop %v2355
        %v2420 = vrsqrt.pop %v2356
        %v2421 = vrsqrt.pop %v2357
        %v2422 = vrsqrt.pop %v2358
        %v2423 = vrsqrt.pop %v2359
        %v2424 = vrsqrt.pop %v2360
        %v2425 = vrsqrt.pop %v2361
        %v2426 = vrsqrt.pop %v2362
        %v2427 = vrsqrt.pop %v2363
        %v2428 = vrsqrt.pop %v2364
        %v2429 = vrsqrt.pop %v2365
        %v2430 = vrsqrt.pop %v2366
        %v2431 = vrsqrt.pop %v2367
        %v2432 = vrsqrt.pop %v2368
        %v2433 = vrsqrt.pop %v2369
        %v2434 = vrsqrt.pop %v2370
        %v2435 = vrsqrt.pop %v2371
        %v2436 = vrsqrt.pop %v2372
        %v2437 = vrsqrt.pop %v2373
        %v2438 = vrsqrt.pop %v2374
        %v2439 = vrsqrt.pop %v2375
        %v2440 = vrsqrt.pop %v2376
        %v2441 = vrsqrt.pop %v2377
        %v2442 = vrsqrt.pop %v2378
        %v2443 = vrsqrt.pop %v2379
        %v2444 = vrsqrt.pop %v2380
        %v2445 = vrsqrt.pop %v2381
        %v2446 = vrsqrt.pop %v2382
        %v2447 = vrsqrt.pop %v2383
        %v2448 = vrsqrt.pop %v2384
        %v2449 = vrsqrt.pop %v2385
        %v2450 = vrsqrt.pop %v2386
        %v2451 = vrsqrt.pop %v2387
        %v2452 = vrsqrt.pop %v2388
        %v2453 = vrsqrt.pop %v2389
        %v2454 = vrsqrt.pop %v2390
        %v2455 = vrsqrt.pop %v2391
        %v2456 = vrsqrt.pop %v2392
        %v2457 = vrsqrt.pop %v2393
        %v2458 = vrsqrt.pop %v2394
        %v2459 = vrsqrt.pop %v2395
        %v2460 = vrsqrt.pop %v2396
        %v2461 = vrsqrt.pop %v2397
        %v2462 = vrsqrt.pop %v2398
        %v2463 = vrsqrt.pop %v2399
        %v2464 = vrsqrt.pop %v2400
        %v2465 = vrsqrt.pop %v2401
        %v2466 = vrsqrt.pop %v2402
        %v2467 = vmul.f32 %v2019, %v2403
        %v2468 = vmul.f32 %v2020, %v2404
        %v2469 = vmul.f32 %v2021, %v2405
        %v2470 = vmul.f32 %v2022, %v2406
        %v2471 = vmul.f32 %v2023, %v2407
        %v2472 = vmul.f32 %v2024, %v2408
        %v2473 = vmul.f32 %v2025, %v2409
        %v2474 = vmul.f32 %v2026, %v2410
        %v2475 = vmul.f32 %v2027, %v2411
        %v2476 = vmul.f32 %v2028, %v2412
        %v2477 = vmul.f32 %v2029, %v2413
        %v2478 = vmul.f32 %v2030, %v2414
        %v2479 = vmul.f32 %v2031, %v2415
        %v2480 = vmul.f32 %v2032, %v2416
        %v2481 = vmul.f32 %v2033, %v2417
        %v2482 = vmul.f32 %v2034, %v2418
        %v2483 = vmul.f32 %v2035, %v2419
        %v2484 = vmul.f32 %v2036, %v2420
        %v2485 = vmul.f32 %v2037, %v2421
        %v2486 = vmul.f32 %v2038, %v2422
        %v2487 = vmul.f32 %v2039, %v2423
        %v2488 = vmul.f32 %v2040, %v2424
        %v2489 = vmul.f32 %v2041, %v2425
        %v2490 = vmul.f32 %v2042, %v2426
        %v2491 = vmul.f32 %v2043, %v2427
        %v2492 = vmul.f32 %v2044, %v2428
        %v2493 = vmul.f32 %v2045, %v2429
        %v2494 = vmul.f32 %v2046, %v2430
        %v2495 = vmul.f32 %v2047, %v2431
        %v2496 = vmul.f32 %v2048, %v2432
        %v2497 = vmul.f32 %v2049, %v2433
        %v2498 = vmul.f32 %v2050, %v2434
        %v2499 = vmul.f32 %v2051, %v2435
        %v2500 = vmul.f32 %v2052, %v2436
        %v2501 = vmul.f32 %v2053, %v2437
        %v2502 = vmul.f32 %v2054, %v2438
        %v2503 = vmul.f32 %v2055, %v2439
        %v2504 = vmul.f32 %v2056, %v2440
        %v2505 = vmul.f32 %v2057, %v2441
        %v2506 = vmul.f32 %v2058, %v2442
        %v2507 = vmul.f32 %v2059, %v2443
        %v2508 = vmul.f32 %v2060, %v2444
        %v2509 = vmul.f32 %v2061, %v2445
        %v2510 = vmul.f32 %v2062, %v2446
        %v2511 = vmul.f32 %v2063, %v2447
        %v2512 = vmul.f32 %v2064, %v2448
        %v2513 = vmul.f32 %v2065, %v2449
        %v2514 = vmul.f32 %v2066, %v2450
        %v2515 = vmul.f32 %v2067, %v2451
        %v2516 = vmul.f32 %v2068, %v2452
        %v2517 = vmul.f32 %v2069, %v2453
        %v2518 = vmul.f32 %v2070, %v2454
        %v2519 = vmul.f32 %v2071, %v2455
        %v2520 = vmul.f32 %v2072, %v2456
        %v2521 = vmul.f32 %v2073, %v2457
        %v2522 = vmul.f32 %v2074, %v2458
        %v2523 = vmul.f32 %v2075, %v2459
        %v2524 = vmul.f32 %v2076, %v2460
        %v2525 = vmul.f32 %v2077, %v2461
        %v2526 = vmul.f32 %v2078, %v2462
        %v2527 = vmul.f32 %v2079, %v2463
        %v2528 = vmul.f32 %v2080, %v2464
        %v2529 = vmul.f32 %v2081, %v2465
        %v2530 = vmul.f32 %v2082, %v2466
        %v2531 = vld [vmem:[#allocation7 + $0x1] sm:$0x1]
        %v2532 = vlaneseq
        %v2533 = vshrl.u32 %v2532, 7
        %v2534 = vsub.s32 0, %v2533
        %v2535 = vrot.slane %v2531, %v2534
        %v2536 = vmul.f32 %v2467, %v2535
        %v2537 = vmul.f32 %v2468, %v2535
        %v2538 = vmul.f32 %v2469, %v2535
        %v2539 = vmul.f32 %v2470, %v2535
        %v2540 = vmul.f32 %v2471, %v2535
        %v2541 = vmul.f32 %v2472, %v2535
        %v2542 = vmul.f32 %v2473, %v2535
        %v2543 = vmul.f32 %v2474, %v2535
        %v2544 = vmul.f32 %v2475, %v2535
        %v2545 = vmul.f32 %v2476, %v2535
        %v2546 = vmul.f32 %v2477, %v2535
        %v2547 = vmul.f32 %v2478, %v2535
        %v2548 = vmul.f32 %v2479, %v2535
        %v2549 = vmul.f32 %v2480, %v2535
        %v2550 = vmul.f32 %v2481, %v2535
        %v2551 = vmul.f32 %v2482, %v2535
        %v2552 = vmul.f32 %v2483, %v2535
        %v2553 = vmul.f32 %v2484, %v2535
        %v2554 = vmul.f32 %v2485, %v2535
        %v2555 = vmul.f32 %v2486, %v2535
        %v2556 = vmul.f32 %v2487, %v2535
        %v2557 = vmul.f32 %v2488, %v2535
        %v2558 = vmul.f32 %v2489, %v2535
        %v2559 = vmul.f32 %v2490, %v2535
        %v2560 = vmul.f32 %v2491, %v2535
        %v2561 = vmul.f32 %v2492, %v2535
        %v2562 = vmul.f32 %v2493, %v2535
        %v2563 = vmul.f32 %v2494, %v2535
        %v2564 = vmul.f32 %v2495, %v2535
        %v2565 = vmul.f32 %v2496, %v2535
        %v2566 = vmul.f32 %v2497, %v2535
        %v2567 = vmul.f32 %v2498, %v2535
        %v2568 = vmul.f32 %v2499, %v2535
        %v2569 = vmul.f32 %v2500, %v2535
        %v2570 = vmul.f32 %v2501, %v2535
        %v2571 = vmul.f32 %v2502, %v2535
        %v2572 = vmul.f32 %v2503, %v2535
        %v2573 = vmul.f32 %v2504, %v2535
        %v2574 = vmul.f32 %v2505, %v2535
        %v2575 = vmul.f32 %v2506, %v2535
        %v2576 = vmul.f32 %v2507, %v2535
        %v2577 = vmul.f32 %v2508, %v2535
        %v2578 = vmul.f32 %v2509, %v2535
        %v2579 = vmul.f32 %v2510, %v2535
        %v2580 = vmul.f32 %v2511, %v2535
        %v2581 = vmul.f32 %v2512, %v2535
        %v2582 = vmul.f32 %v2513, %v2535
        %v2583 = vmul.f32 %v2514, %v2535
        %v2584 = vmul.f32 %v2515, %v2535
        %v2585 = vmul.f32 %v2516, %v2535
        %v2586 = vmul.f32 %v2517, %v2535
        %v2587 = vmul.f32 %v2518, %v2535
        %v2588 = vmul.f32 %v2519, %v2535
        %v2589 = vmul.f32 %v2520, %v2535
        %v2590 = vmul.f32 %v2521, %v2535
        %v2591 = vmul.f32 %v2522, %v2535
        %v2592 = vmul.f32 %v2523, %v2535
        %v2593 = vmul.f32 %v2524, %v2535
        %v2594 = vmul.f32 %v2525, %v2535
        %v2595 = vmul.f32 %v2526, %v2535
        %v2596 = vmul.f32 %v2527, %v2535
        %v2597 = vmul.f32 %v2528, %v2535
        %v2598 = vmul.f32 %v2529, %v2535
        %v2599 = vmul.f32 %v2530, %v2535
        %v2600 = vld [vmem:[#allocation7 + $0x2] sm:$0x1]
        %v2601 = vlaneseq
        %v2602 = vshrl.u32 %v2601, 7
        %v2603 = vsub.s32 0, %v2602
        %v2604 = vrot.slane %v2600, %v2603
        %v2605 = vadd.f32 %v2536, %v2604
        %v2606 = vadd.f32 %v2537, %v2604
        %v2607 = vadd.f32 %v2538, %v2604
        %v2608 = vadd.f32 %v2539, %v2604
        %v2609 = vadd.f32 %v2540, %v2604
        %v2610 = vadd.f32 %v2541, %v2604
        %v2611 = vadd.f32 %v2542, %v2604
        %v2612 = vadd.f32 %v2543, %v2604
        %v2613 = vadd.f32 %v2544, %v2604
        %v2614 = vadd.f32 %v2545, %v2604
        %v2615 = vadd.f32 %v2546, %v2604
        %v2616 = vadd.f32 %v2547, %v2604
        %v2617 = vadd.f32 %v2548, %v2604
        %v2618 = vadd.f32 %v2549, %v2604
        %v2619 = vadd.f32 %v2550, %v2604
        %v2620 = vadd.f32 %v2551, %v2604
        %v2621 = vadd.f32 %v2552, %v2604
        %v2622 = vadd.f32 %v2553, %v2604
        %v2623 = vadd.f32 %v2554, %v2604
        %v2624 = vadd.f32 %v2555, %v2604
        %v2625 = vadd.f32 %v2556, %v2604
        %v2626 = vadd.f32 %v2557, %v2604
        %v2627 = vadd.f32 %v2558, %v2604
        %v2628 = vadd.f32 %v2559, %v2604
        %v2629 = vadd.f32 %v2560, %v2604
        %v2630 = vadd.f32 %v2561, %v2604
        %v2631 = vadd.f32 %v2562, %v2604
        %v2632 = vadd.f32 %v2563, %v2604
        %v2633 = vadd.f32 %v2564, %v2604
        %v2634 = vadd.f32 %v2565, %v2604
        %v2635 = vadd.f32 %v2566, %v2604
        %v2636 = vadd.f32 %v2567, %v2604
        %v2637 = vadd.f32 %v2568, %v2604
        %v2638 = vadd.f32 %v2569, %v2604
        %v2639 = vadd.f32 %v2570, %v2604
        %v2640 = vadd.f32 %v2571, %v2604
        %v2641 = vadd.f32 %v2572, %v2604
        %v2642 = vadd.f32 %v2573, %v2604
        %v2643 = vadd.f32 %v2574, %v2604
        %v2644 = vadd.f32 %v2575, %v2604
        %v2645 = vadd.f32 %v2576, %v2604
        %v2646 = vadd.f32 %v2577, %v2604
        %v2647 = vadd.f32 %v2578, %v2604
        %v2648 = vadd.f32 %v2579, %v2604
        %v2649 = vadd.f32 %v2580, %v2604
        %v2650 = vadd.f32 %v2581, %v2604
        %v2651 = vadd.f32 %v2582, %v2604
        %v2652 = vadd.f32 %v2583, %v2604
        %v2653 = vadd.f32 %v2584, %v2604
        %v2654 = vadd.f32 %v2585, %v2604
        %v2655 = vadd.f32 %v2586, %v2604
        %v2656 = vadd.f32 %v2587, %v2604
        %v2657 = vadd.f32 %v2588, %v2604
        %v2658 = vadd.f32 %v2589, %v2604
        %v2659 = vadd.f32 %v2590, %v2604
        %v2660 = vadd.f32 %v2591, %v2604
        %v2661 = vadd.f32 %v2592, %v2604
        %v2662 = vadd.f32 %v2593, %v2604
        %v2663 = vadd.f32 %v2594, %v2604
        %v2664 = vadd.f32 %v2595, %v2604
        %v2665 = vadd.f32 %v2596, %v2604
        %v2666 = vadd.f32 %v2597, %v2604
        %v2667 = vadd.f32 %v2598, %v2604
        %v2668 = vadd.f32 %v2599, %v2604
        %v2669 = vadd.f32 %v2605, %v1762
        %v2670 = vadd.f32 %v2606, %v1763
        %v2671 = vadd.f32 %v2607, %v1764
        %v2672 = vadd.f32 %v2608, %v1765
        %v2673 = vadd.f32 %v2609, %v1766
        %v2674 = vadd.f32 %v2610, %v1767
        %v2675 = vadd.f32 %v2611, %v1768
        %v2676 = vadd.f32 %v2612, %v1769
        %v2677 = vadd.f32 %v2613, %v1770
        %v2678 = vadd.f32 %v2614, %v1771
        %v2679 = vadd.f32 %v2615, %v1772
        %v2680 = vadd.f32 %v2616, %v1773
        %v2681 = vadd.f32 %v2617, %v1774
        %v2682 = vadd.f32 %v2618, %v1775
        %v2683 = vadd.f32 %v2619, %v1776
        %v2684 = vadd.f32 %v2620, %v1777
        %v2685 = vadd.f32 %v2621, %v1778
        %v2686 = vadd.f32 %v2622, %v1779
        %v2687 = vadd.f32 %v2623, %v1780
        %v2688 = vadd.f32 %v2624, %v1781
        %v2689 = vadd.f32 %v2625, %v1782
        %v2690 = vadd.f32 %v2626, %v1783
        %v2691 = vadd.f32 %v2627, %v1784
        %v2692 = vadd.f32 %v2628, %v1785
        %v2693 = vadd.f32 %v2629, %v1786
        %v2694 = vadd.f32 %v2630, %v1787
        %v2695 = vadd.f32 %v2631, %v1788
        %v2696 = vadd.f32 %v2632, %v1789
        %v2697 = vadd.f32 %v2633, %v1790
        %v2698 = vadd.f32 %v2634, %v1791
        %v2699 = vadd.f32 %v2635, %v1792
        %v2700 = vadd.f32 %v2636, %v1793
        %v2701 = vadd.f32 %v2637, %v1794
        %v2702 = vadd.f32 %v2638, %v1795
        %v2703 = vadd.f32 %v2639, %v1796
        %v2704 = vadd.f32 %v2640, %v1797
        %v2705 = vadd.f32 %v2641, %v1798
        %v2706 = vadd.f32 %v2642, %v1799
        %v2707 = vadd.f32 %v2643, %v1800
        %v2708 = vadd.f32 %v2644, %v1801
        %v2709 = vadd.f32 %v2645, %v1802
        %v2710 = vadd.f32 %v2646, %v1803
        %v2711 = vadd.f32 %v2647, %v1804
        %v2712 = vadd.f32 %v2648, %v1805
        %v2713 = vadd.f32 %v2649, %v1806
        %v2714 = vadd.f32 %v2650, %v1807
        %v2715 = vadd.f32 %v2651, %v1808
        %v2716 = vadd.f32 %v2652, %v1809
        %v2717 = vadd.f32 %v2653, %v1810
        %v2718 = vadd.f32 %v2654, %v1811
        %v2719 = vadd.f32 %v2655, %v1812
        %v2720 = vadd.f32 %v2656, %v1813
        %v2721 = vadd.f32 %v2657, %v1814
        %v2722 = vadd.f32 %v2658, %v1815
        %v2723 = vadd.f32 %v2659, %v1816
        %v2724 = vadd.f32 %v2660, %v1817
        %v2725 = vadd.f32 %v2661, %v1818
        %v2726 = vadd.f32 %v2662, %v1819
        %v2727 = vadd.f32 %v2663, %v1820
        %v2728 = vadd.f32 %v2664, %v1821
        %v2729 = vadd.f32 %v2665, %v1822
        %v2730 = vadd.f32 %v2666, %v1823
        %v2731 = vadd.f32 %v2667, %v1824
        %v2732 = vadd.f32 %v2668, %v1825
        %vm2733 = vcmp.ge.f32.partialorder %v2669, 0.0
        %vm2734 = vcmp.ge.f32.partialorder %v2670, 0.0
        %vm2735 = vcmp.ge.f32.partialorder %v2671, 0.0
        %vm2736 = vcmp.ge.f32.partialorder %v2672, 0.0
        %vm2737 = vcmp.ge.f32.partialorder %v2673, 0.0
        %vm2738 = vcmp.ge.f32.partialorder %v2674, 0.0
        %vm2739 = vcmp.ge.f32.partialorder %v2675, 0.0
        %vm2740 = vcmp.ge.f32.partialorder %v2676, 0.0
        %vm2741 = vcmp.ge.f32.partialorder %v2677, 0.0
        %vm2742 = vcmp.ge.f32.partialorder %v2678, 0.0
        %vm2743 = vcmp.ge.f32.partialorder %v2679, 0.0
        %vm2744 = vcmp.ge.f32.partialorder %v2680, 0.0
        %vm2745 = vcmp.ge.f32.partialorder %v2681, 0.0
        %vm2746 = vcmp.ge.f32.partialorder %v2682, 0.0
        %vm2747 = vcmp.ge.f32.partialorder %v2683, 0.0
        %vm2748 = vcmp.ge.f32.partialorder %v2684, 0.0
        %vm2749 = vcmp.ge.f32.partialorder %v2685, 0.0
        %vm2750 = vcmp.ge.f32.partialorder %v2686, 0.0
        %vm2751 = vcmp.ge.f32.partialorder %v2687, 0.0
        %vm2752 = vcmp.ge.f32.partialorder %v2688, 0.0
        %vm2753 = vcmp.ge.f32.partialorder %v2689, 0.0
        %vm2754 = vcmp.ge.f32.partialorder %v2690, 0.0
        %vm2755 = vcmp.ge.f32.partialorder %v2691, 0.0
        %vm2756 = vcmp.ge.f32.partialorder %v2692, 0.0
        %vm2757 = vcmp.ge.f32.partialorder %v2693, 0.0
        %vm2758 = vcmp.ge.f32.partialorder %v2694, 0.0
        %vm2759 = vcmp.ge.f32.partialorder %v2695, 0.0
        %vm2760 = vcmp.ge.f32.partialorder %v2696, 0.0
        %vm2761 = vcmp.ge.f32.partialorder %v2697, 0.0
        %vm2762 = vcmp.ge.f32.partialorder %v2698, 0.0
        %vm2763 = vcmp.ge.f32.partialorder %v2699, 0.0
        %vm2764 = vcmp.ge.f32.partialorder %v2700, 0.0
        %vm2765 = vcmp.ge.f32.partialorder %v2701, 0.0
        %vm2766 = vcmp.ge.f32.partialorder %v2702, 0.0
        %vm2767 = vcmp.ge.f32.partialorder %v2703, 0.0
        %vm2768 = vcmp.ge.f32.partialorder %v2704, 0.0
        %vm2769 = vcmp.ge.f32.partialorder %v2705, 0.0
        %vm2770 = vcmp.ge.f32.partialorder %v2706, 0.0
        %vm2771 = vcmp.ge.f32.partialorder %v2707, 0.0
        %vm2772 = vcmp.ge.f32.partialorder %v2708, 0.0
        %vm2773 = vcmp.ge.f32.partialorder %v2709, 0.0
        %vm2774 = vcmp.ge.f32.partialorder %v2710, 0.0
        %vm2775 = vcmp.ge.f32.partialorder %v2711, 0.0
        %vm2776 = vcmp.ge.f32.partialorder %v2712, 0.0
        %vm2777 = vcmp.ge.f32.partialorder %v2713, 0.0
        %vm2778 = vcmp.ge.f32.partialorder %v2714, 0.0
        %vm2779 = vcmp.ge.f32.partialorder %v2715, 0.0
        %vm2780 = vcmp.ge.f32.partialorder %v2716, 0.0
        %vm2781 = vcmp.ge.f32.partialorder %v2717, 0.0
        %vm2782 = vcmp.ge.f32.partialorder %v2718, 0.0
        %vm2783 = vcmp.ge.f32.partialorder %v2719, 0.0
        %vm2784 = vcmp.ge.f32.partialorder %v2720, 0.0
        %vm2785 = vcmp.ge.f32.partialorder %v2721, 0.0
        %vm2786 = vcmp.ge.f32.partialorder %v2722, 0.0
        %vm2787 = vcmp.ge.f32.partialorder %v2723, 0.0
        %vm2788 = vcmp.ge.f32.partialorder %v2724, 0.0
        %vm2789 = vcmp.ge.f32.partialorder %v2725, 0.0
        %vm2790 = vcmp.ge.f32.partialorder %v2726, 0.0
        %vm2791 = vcmp.ge.f32.partialorder %v2727, 0.0
        %vm2792 = vcmp.ge.f32.partialorder %v2728, 0.0
        %vm2793 = vcmp.ge.f32.partialorder %v2729, 0.0
        %vm2794 = vcmp.ge.f32.partialorder %v2730, 0.0
        %vm2795 = vcmp.ge.f32.partialorder %v2731, 0.0
        %vm2796 = vcmp.ge.f32.partialorder %v2732, 0.0
        %v2797 = vld [vmem:[#allocation7 + $0x3] sm:$0x1]
        %v2798 = vlaneseq
        %v2799 = vshrl.u32 %v2798, 7
        %v2800 = vsub.s32 0, %v2799
        %v2801 = vrot.slane %v2797, %v2800
        %v2802 = vmul.f32 %v2669, %v2801
        %v2803 = vmul.f32 %v2670, %v2801
        %v2804 = vmul.f32 %v2671, %v2801
        %v2805 = vmul.f32 %v2672, %v2801
        %v2806 = vmul.f32 %v2673, %v2801
        %v2807 = vmul.f32 %v2674, %v2801
        %v2808 = vmul.f32 %v2675, %v2801
        %v2809 = vmul.f32 %v2676, %v2801
        %v2810 = vmul.f32 %v2677, %v2801
        %v2811 = vmul.f32 %v2678, %v2801
        %v2812 = vmul.f32 %v2679, %v2801
        %v2813 = vmul.f32 %v2680, %v2801
        %v2814 = vmul.f32 %v2681, %v2801
        %v2815 = vmul.f32 %v2682, %v2801
        %v2816 = vmul.f32 %v2683, %v2801
        %v2817 = vmul.f32 %v2684, %v2801
        %v2818 = vmul.f32 %v2685, %v2801
        %v2819 = vmul.f32 %v2686, %v2801
        %v2820 = vmul.f32 %v2687, %v2801
        %v2821 = vmul.f32 %v2688, %v2801
        %v2822 = vmul.f32 %v2689, %v2801
        %v2823 = vmul.f32 %v2690, %v2801
        %v2824 = vmul.f32 %v2691, %v2801
        %v2825 = vmul.f32 %v2692, %v2801
        %v2826 = vmul.f32 %v2693, %v2801
        %v2827 = vmul.f32 %v2694, %v2801
        %v2828 = vmul.f32 %v2695, %v2801
        %v2829 = vmul.f32 %v2696, %v2801
        %v2830 = vmul.f32 %v2697, %v2801
        %v2831 = vmul.f32 %v2698, %v2801
        %v2832 = vmul.f32 %v2699, %v2801
        %v2833 = vmul.f32 %v2700, %v2801
        %v2834 = vmul.f32 %v2701, %v2801
        %v2835 = vmul.f32 %v2702, %v2801
        %v2836 = vmul.f32 %v2703, %v2801
        %v2837 = vmul.f32 %v2704, %v2801
        %v2838 = vmul.f32 %v2705, %v2801
        %v2839 = vmul.f32 %v2706, %v2801
        %v2840 = vmul.f32 %v2707, %v2801
        %v2841 = vmul.f32 %v2708, %v2801
        %v2842 = vmul.f32 %v2709, %v2801
        %v2843 = vmul.f32 %v2710, %v2801
        %v2844 = vmul.f32 %v2711, %v2801
        %v2845 = vmul.f32 %v2712, %v2801
        %v2846 = vmul.f32 %v2713, %v2801
        %v2847 = vmul.f32 %v2714, %v2801
        %v2848 = vmul.f32 %v2715, %v2801
        %v2849 = vmul.f32 %v2716, %v2801
        %v2850 = vmul.f32 %v2717, %v2801
        %v2851 = vmul.f32 %v2718, %v2801
        %v2852 = vmul.f32 %v2719, %v2801
        %v2853 = vmul.f32 %v2720, %v2801
        %v2854 = vmul.f32 %v2721, %v2801
        %v2855 = vmul.f32 %v2722, %v2801
        %v2856 = vmul.f32 %v2723, %v2801
        %v2857 = vmul.f32 %v2724, %v2801
        %v2858 = vmul.f32 %v2725, %v2801
        %v2859 = vmul.f32 %v2726, %v2801
        %v2860 = vmul.f32 %v2727, %v2801
        %v2861 = vmul.f32 %v2728, %v2801
        %v2862 = vmul.f32 %v2729, %v2801
        %v2863 = vmul.f32 %v2730, %v2801
        %v2864 = vmul.f32 %v2731, %v2801
        %v2865 = vmul.f32 %v2732, %v2801
        %v2866 = vld [vmem:[#allocation7 + $0x4] sm:$0x1]
        %v2867 = vlaneseq
        %v2868 = vshrl.u32 %v2867, 7
        %v2869 = vsub.s32 0, %v2868
        %v2870 = vrot.slane %v2866, %v2869
        %v2871 = vmul.f32 %v2669, %v2870
        %v2872 = vmul.f32 %v2670, %v2870
        %v2873 = vmul.f32 %v2671, %v2870
        %v2874 = vmul.f32 %v2672, %v2870
        %v2875 = vmul.f32 %v2673, %v2870
        %v2876 = vmul.f32 %v2674, %v2870
        %v2877 = vmul.f32 %v2675, %v2870
        %v2878 = vmul.f32 %v2676, %v2870
        %v2879 = vmul.f32 %v2677, %v2870
        %v2880 = vmul.f32 %v2678, %v2870
        %v2881 = vmul.f32 %v2679, %v2870
        %v2882 = vmul.f32 %v2680, %v2870
        %v2883 = vmul.f32 %v2681, %v2870
        %v2884 = vmul.f32 %v2682, %v2870
        %v2885 = vmul.f32 %v2683, %v2870
        %v2886 = vmul.f32 %v2684, %v2870
        %v2887 = vmul.f32 %v2685, %v2870
        %v2888 = vmul.f32 %v2686, %v2870
        %v2889 = vmul.f32 %v2687, %v2870
        %v2890 = vmul.f32 %v2688, %v2870
        %v2891 = vmul.f32 %v2689, %v2870
        %v2892 = vmul.f32 %v2690, %v2870
        %v2893 = vmul.f32 %v2691, %v2870
        %v2894 = vmul.f32 %v2692, %v2870
        %v2895 = vmul.f32 %v2693, %v2870
        %v2896 = vmul.f32 %v2694, %v2870
        %v2897 = vmul.f32 %v2695, %v2870
        %v2898 = vmul.f32 %v2696, %v2870
        %v2899 = vmul.f32 %v2697, %v2870
        %v2900 = vmul.f32 %v2698, %v2870
        %v2901 = vmul.f32 %v2699, %v2870
        %v2902 = vmul.f32 %v2700, %v2870
        %v2903 = vmul.f32 %v2701, %v2870
        %v2904 = vmul.f32 %v2702, %v2870
        %v2905 = vmul.f32 %v2703, %v2870
        %v2906 = vmul.f32 %v2704, %v2870
        %v2907 = vmul.f32 %v2705, %v2870
        %v2908 = vmul.f32 %v2706, %v2870
        %v2909 = vmul.f32 %v2707, %v2870
        %v2910 = vmul.f32 %v2708, %v2870
        %v2911 = vmul.f32 %v2709, %v2870
        %v2912 = vmul.f32 %v2710, %v2870
        %v2913 = vmul.f32 %v2711, %v2870
        %v2914 = vmul.f32 %v2712, %v2870
        %v2915 = vmul.f32 %v2713, %v2870
        %v2916 = vmul.f32 %v2714, %v2870
        %v2917 = vmul.f32 %v2715, %v2870
        %v2918 = vmul.f32 %v2716, %v2870
        %v2919 = vmul.f32 %v2717, %v2870
        %v2920 = vmul.f32 %v2718, %v2870
        %v2921 = vmul.f32 %v2719, %v2870
        %v2922 = vmul.f32 %v2720, %v2870
        %v2923 = vmul.f32 %v2721, %v2870
        %v2924 = vmul.f32 %v2722, %v2870
        %v2925 = vmul.f32 %v2723, %v2870
        %v2926 = vmul.f32 %v2724, %v2870
        %v2927 = vmul.f32 %v2725, %v2870
        %v2928 = vmul.f32 %v2726, %v2870
        %v2929 = vmul.f32 %v2727, %v2870
        %v2930 = vmul.f32 %v2728, %v2870
        %v2931 = vmul.f32 %v2729, %v2870
        %v2932 = vmul.f32 %v2730, %v2870
        %v2933 = vmul.f32 %v2731, %v2870
        %v2934 = vmul.f32 %v2732, %v2870
        %v2935 = vsel %vm2733, %v2802, %v2871
        %v2936 = vsel %vm2734, %v2803, %v2872
        %v2937 = vsel %vm2735, %v2804, %v2873
        %v2938 = vsel %vm2736, %v2805, %v2874
        %v2939 = vsel %vm2737, %v2806, %v2875
        %v2940 = vsel %vm2738, %v2807, %v2876
        %v2941 = vsel %vm2739, %v2808, %v2877
        %v2942 = vsel %vm2740, %v2809, %v2878
        %v2943 = vsel %vm2741, %v2810, %v2879
        %v2944 = vsel %vm2742, %v2811, %v2880
        %v2945 = vsel %vm2743, %v2812, %v2881
        %v2946 = vsel %vm2744, %v2813, %v2882
        %v2947 = vsel %vm2745, %v2814, %v2883
        %v2948 = vsel %vm2746, %v2815, %v2884
        %v2949 = vsel %vm2747, %v2816, %v2885
        %v2950 = vsel %vm2748, %v2817, %v2886
        %v2951 = vsel %vm2749, %v2818, %v2887
        %v2952 = vsel %vm2750, %v2819, %v2888
        %v2953 = vsel %vm2751, %v2820, %v2889
        %v2954 = vsel %vm2752, %v2821, %v2890
        %v2955 = vsel %vm2753, %v2822, %v2891
        %v2956 = vsel %vm2754, %v2823, %v2892
        %v2957 = vsel %vm2755, %v2824, %v2893
        %v2958 = vsel %vm2756, %v2825, %v2894
        %v2959 = vsel %vm2757, %v2826, %v2895
        %v2960 = vsel %vm2758, %v2827, %v2896
        %v2961 = vsel %vm2759, %v2828, %v2897
        %v2962 = vsel %vm2760, %v2829, %v2898
        %v2963 = vsel %vm2761, %v2830, %v2899
        %v2964 = vsel %vm2762, %v2831, %v2900
        %v2965 = vsel %vm2763, %v2832, %v2901
        %v2966 = vsel %vm2764, %v2833, %v2902
        %v2967 = vsel %vm2765, %v2834, %v2903
        %v2968 = vsel %vm2766, %v2835, %v2904
        %v2969 = vsel %vm2767, %v2836, %v2905
        %v2970 = vsel %vm2768, %v2837, %v2906
        %v2971 = vsel %vm2769, %v2838, %v2907
        %v2972 = vsel %vm2770, %v2839, %v2908
        %v2973 = vsel %vm2771, %v2840, %v2909
        %v2974 = vsel %vm2772, %v2841, %v2910
        %v2975 = vsel %vm2773, %v2842, %v2911
        %v2976 = vsel %vm2774, %v2843, %v2912
        %v2977 = vsel %vm2775, %v2844, %v2913
        %v2978 = vsel %vm2776, %v2845, %v2914
        %v2979 = vsel %vm2777, %v2846, %v2915
        %v2980 = vsel %vm2778, %v2847, %v2916
        %v2981 = vsel %vm2779, %v2848, %v2917
        %v2982 = vsel %vm2780, %v2849, %v2918
        %v2983 = vsel %vm2781, %v2850, %v2919
        %v2984 = vsel %vm2782, %v2851, %v2920
        %v2985 = vsel %vm2783, %v2852, %v2921
        %v2986 = vsel %vm2784, %v2853, %v2922
        %v2987 = vsel %vm2785, %v2854, %v2923
        %v2988 = vsel %vm2786, %v2855, %v2924
        %v2989 = vsel %vm2787, %v2856, %v2925
        %v2990 = vsel %vm2788, %v2857, %v2926
        %v2991 = vsel %vm2789, %v2858, %v2927
        %v2992 = vsel %vm2790, %v2859, %v2928
        %v2993 = vsel %vm2791, %v2860, %v2929
        %v2994 = vsel %vm2792, %v2861, %v2930
        %v2995 = vsel %vm2793, %v2862, %v2931
        %v2996 = vsel %vm2794, %v2863, %v2932
        %v2997 = vsel %vm2795, %v2864, %v2933
        %v2998 = vsel %vm2796, %v2865, %v2934
        %v2999 = vld [vmem:[#allocation7 + $0x5] sm:$0x1]
        %v3000 = vlaneseq
        %v3001 = vshrl.u32 %v3000, 7
        %v3002 = vsub.s32 0, %v3001
        %v3003 = vrot.slane %v2999, %v3002
        %v3004 = vadd.f32 %v2935, %v3003
        %v3005 = vadd.f32 %v2936, %v3003
        %v3006 = vadd.f32 %v2937, %v3003
        %v3007 = vadd.f32 %v2938, %v3003
        %v3008 = vadd.f32 %v2939, %v3003
        %v3009 = vadd.f32 %v2940, %v3003
        %v3010 = vadd.f32 %v2941, %v3003
        %v3011 = vadd.f32 %v2942, %v3003
        %v3012 = vadd.f32 %v2943, %v3003
        %v3013 = vadd.f32 %v2944, %v3003
        %v3014 = vadd.f32 %v2945, %v3003
        %v3015 = vadd.f32 %v2946, %v3003
        %v3016 = vadd.f32 %v2947, %v3003
        %v3017 = vadd.f32 %v2948, %v3003
        %v3018 = vadd.f32 %v2949, %v3003
        %v3019 = vadd.f32 %v2950, %v3003
        %v3020 = vadd.f32 %v2951, %v3003
        %v3021 = vadd.f32 %v2952, %v3003
        %v3022 = vadd.f32 %v2953, %v3003
        %v3023 = vadd.f32 %v2954, %v3003
        %v3024 = vadd.f32 %v2955, %v3003
        %v3025 = vadd.f32 %v2956, %v3003
        %v3026 = vadd.f32 %v2957, %v3003
        %v3027 = vadd.f32 %v2958, %v3003
        %v3028 = vadd.f32 %v2959, %v3003
        %v3029 = vadd.f32 %v2960, %v3003
        %v3030 = vadd.f32 %v2961, %v3003
        %v3031 = vadd.f32 %v2962, %v3003
        %v3032 = vadd.f32 %v2963, %v3003
        %v3033 = vadd.f32 %v2964, %v3003
        %v3034 = vadd.f32 %v2965, %v3003
        %v3035 = vadd.f32 %v2966, %v3003
        %v3036 = vadd.f32 %v2967, %v3003
        %v3037 = vadd.f32 %v2968, %v3003
        %v3038 = vadd.f32 %v2969, %v3003
        %v3039 = vadd.f32 %v2970, %v3003
        %v3040 = vadd.f32 %v2971, %v3003
        %v3041 = vadd.f32 %v2972, %v3003
        %v3042 = vadd.f32 %v2973, %v3003
        %v3043 = vadd.f32 %v2974, %v3003
        %v3044 = vadd.f32 %v2975, %v3003
        %v3045 = vadd.f32 %v2976, %v3003
        %v3046 = vadd.f32 %v2977, %v3003
        %v3047 = vadd.f32 %v2978, %v3003
        %v3048 = vadd.f32 %v2979, %v3003
        %v3049 = vadd.f32 %v2980, %v3003
        %v3050 = vadd.f32 %v2981, %v3003
        %v3051 = vadd.f32 %v2982, %v3003
        %v3052 = vadd.f32 %v2983, %v3003
        %v3053 = vadd.f32 %v2984, %v3003
        %v3054 = vadd.f32 %v2985, %v3003
        %v3055 = vadd.f32 %v2986, %v3003
        %v3056 = vadd.f32 %v2987, %v3003
        %v3057 = vadd.f32 %v2988, %v3003
        %v3058 = vadd.f32 %v2989, %v3003
        %v3059 = vadd.f32 %v2990, %v3003
        %v3060 = vadd.f32 %v2991, %v3003
        %v3061 = vadd.f32 %v2992, %v3003
        %v3062 = vadd.f32 %v2993, %v3003
        %v3063 = vadd.f32 %v2994, %v3003
        %v3064 = vadd.f32 %v2995, %v3003
        %v3065 = vadd.f32 %v2996, %v3003
        %v3066 = vadd.f32 %v2997, %v3003
        %v3067 = vadd.f32 %v2998, %v3003
        %3068 = vst [vmem:[%s216] sm:$0xff] %v3004
        %3069 = vst [vmem:[%s216 + $0x8] sm:$0xff] %v3005
        %3070 = vst [vmem:[%s216 + $0x10] sm:$0xff] %v3006
        %3071 = vst [vmem:[%s216 + $0x18] sm:$0xff] %v3007
        %3072 = vst [vmem:[%s216 + $0x20] sm:$0xff] %v3008
        %3073 = vst [vmem:[%s216 + $0x28] sm:$0xff] %v3009
        %3074 = vst [vmem:[%s216 + $0x30] sm:$0xff] %v3010
        %3075 = vst [vmem:[%s216 + $0x38] sm:$0xff] %v3011
        %3076 = vst [vmem:[%s216 + $0x40] sm:$0xff] %v3012
        %3077 = vst [vmem:[%s216 + $0x48] sm:$0xff] %v3013
        %3078 = vst [vmem:[%s216 + $0x50] sm:$0xff] %v3014
        %3079 = vst [vmem:[%s216 + $0x58] sm:$0xff] %v3015
        %3080 = vst [vmem:[%s216 + $0x60] sm:$0xff] %v3016
        %3081 = vst [vmem:[%s216 + $0x68] sm:$0xff] %v3017
        %3082 = vst [vmem:[%s216 + $0x70] sm:$0xff] %v3018
        %3083 = vst [vmem:[%s216 + $0x78] sm:$0xff] %v3019
        %3084 = vst [vmem:[%s216 + $0x80] sm:$0xff] %v3020
        %3085 = vst [vmem:[%s216 + $0x88] sm:$0xff] %v3021
        %3086 = vst [vmem:[%s216 + $0x90] sm:$0xff] %v3022
        %3087 = vst [vmem:[%s216 + $0x98] sm:$0xff] %v3023
        %3088 = vst [vmem:[%s216 + $0xa0] sm:$0xff] %v3024
        %3089 = vst [vmem:[%s216 + $0xa8] sm:$0xff] %v3025
        %3090 = vst [vmem:[%s216 + $0xb0] sm:$0xff] %v3026
        %3091 = vst [vmem:[%s216 + $0xb8] sm:$0xff] %v3027
        %3092 = vst [vmem:[%s216 + $0xc0] sm:$0xff] %v3028
        %3093 = vst [vmem:[%s216 + $0xc8] sm:$0xff] %v3029
        %3094 = vst [vmem:[%s216 + $0xd0] sm:$0xff] %v3030
        %3095 = vst [vmem:[%s216 + $0xd8] sm:$0xff] %v3031
        %3096 = vst [vmem:[%s216 + $0xe0] sm:$0xff] %v3032
        %3097 = vst [vmem:[%s216 + $0xe8] sm:$0xff] %v3033
        %3098 = vst [vmem:[%s216 + $0xf0] sm:$0xff] %v3034
        %3099 = vst [vmem:[%s216 + $0xf8] sm:$0xff] %v3035
        %3100 = vst [vmem:[%s216 + $0x100] sm:$0xff] %v3036
        %3101 = vst [vmem:[%s216 + $0x108] sm:$0xff] %v3037
        %3102 = vst [vmem:[%s216 + $0x110] sm:$0xff] %v3038
        %3103 = vst [vmem:[%s216 + $0x118] sm:$0xff] %v3039
        %3104 = vst [vmem:[%s216 + $0x120] sm:$0xff] %v3040
        %3105 = vst [vmem:[%s216 + $0x128] sm:$0xff] %v3041
        %3106 = vst [vmem:[%s216 + $0x130] sm:$0xff] %v3042
        %3107 = vst [vmem:[%s216 + $0x138] sm:$0xff] %v3043
        %3108 = vst [vmem:[%s216 + $0x140] sm:$0xff] %v3044
        %3109 = vst [vmem:[%s216 + $0x148] sm:$0xff] %v3045
        %3110 = vst [vmem:[%s216 + $0x150] sm:$0xff] %v3046
        %3111 = vst [vmem:[%s216 + $0x158] sm:$0xff] %v3047
        %3112 = vst [vmem:[%s216 + $0x160] sm:$0xff] %v3048
        %3113 = vst [vmem:[%s216 + $0x168] sm:$0xff] %v3049
        %3114 = vst [vmem:[%s216 + $0x170] sm:$0xff] %v3050
        %3115 = vst [vmem:[%s216 + $0x178] sm:$0xff] %v3051
        %3116 = vst [vmem:[%s216 + $0x180] sm:$0xff] %v3052
        %3117 = vst [vmem:[%s216 + $0x188] sm:$0xff] %v3053
        %3118 = vst [vmem:[%s216 + $0x190] sm:$0xff] %v3054
        %3119 = vst [vmem:[%s216 + $0x198] sm:$0xff] %v3055
        %3120 = vst [vmem:[%s216 + $0x1a0] sm:$0xff] %v3056
        %3121 = vst [vmem:[%s216 + $0x1a8] sm:$0xff] %v3057
        %3122 = vst [vmem:[%s216 + $0x1b0] sm:$0xff] %v3058
        %3123 = vst [vmem:[%s216 + $0x1b8] sm:$0xff] %v3059
        %3124 = vst [vmem:[%s216 + $0x1c0] sm:$0xff] %v3060
        %3125 = vst [vmem:[%s216 + $0x1c8] sm:$0xff] %v3061
        %3126 = vst [vmem:[%s216 + $0x1d0] sm:$0xff] %v3062
        %3127 = vst [vmem:[%s216 + $0x1d8] sm:$0xff] %v3063
        %3128 = vst [vmem:[%s216 + $0x1e0] sm:$0xff] %v3064
        %3129 = vst [vmem:[%s216 + $0x1e8] sm:$0xff] %v3065
        %3130 = vst [vmem:[%s216 + $0x1f0] sm:$0xff] %v3066
        %3131 = vst [vmem:[%s216 + $0x1f8] sm:$0xff] %v3067
        %s3132 = sand.u32 %s97, 1
        %s3133 = scalar_lea.sflag [#allocation4], %s3132
        %s3134 = sand.u32 %s97, 1
        %s3135 = smul.addr %s3134, 512
        %s3136 = scalar_lea.vmem [#allocation8], %s3135
        // Predicated region
        $region45: #{tpu_custom_call.1} parent=31 // pred_check
          %p3137 = pneg %p107
        $region46: #{tpu_custom_call.1} parent=31 // pred_check_branch
          %3139 = sbr.rel (%p3137) target = $region48
        $region47: #{tpu_custom_call.1} parent=31 // pred_region
          %s3140 = smul.u32 64, %s21
          %s3142 = ssub.s32 8192, 8192
          %3143 = vsyncadd %s3133, %s3142
          %s3144 = smul.addr %s3140, 128
          %s3145 = scalar_lea.hbm %s3, %s3144
          %s3146 = sshll.u32 %s3136, 4
          %s3147 = int_to_ptr.vmem [resolvable:$true] %s3146
          %3152 = dma.vmem_to_hbm [thread:$0]  %s3147, 8192, %s3145, %s3133, 128, 128, 8
        $region48: #{tpu_custom_call.1} parent=31 // pred_fallthru
          _
      $region32: #{tpu_custom_call.1} parent=5 // pred_fallthru
        _
      %p3153 = scmp.le.s32.totalorder 2, %s16
      // Predicated region
      $region49: #{tpu_custom_call.1} parent=5 // pred_check
        %p3154 = pneg %p3153
      $region50: #{tpu_custom_call.1} parent=5 // pred_check_branch
        %3156 = sbr.rel (%p3154) target = $region52
      $region51: #{tpu_custom_call.1} parent=5 // pred_region
        %s3157 = ssub.s32 %s16, 2
        // Predicated region
        $region53: #{tpu_custom_call.1} parent=51 // pred_check
          %p3158 = pneg %p113
        $region54: #{tpu_custom_call.1} parent=51 // pred_check_branch
          %3160 = sbr.rel (%p3158) target = $region56
        $region55: #{tpu_custom_call.1} parent=51 // pred_region
          %s3161 = sand.u32 %s98, 1
          %s3162 = scalar_lea.sflag [#allocation4], %s3161
          %s3163 = sand.u32 %s98, 1
          %s3164 = smul.addr %s3163, 512
          %s3165 = scalar_lea.vmem [#allocation8], %s3164
          %3166 = dma.done %s3162, 8192
        $region56: #{tpu_custom_call.1} parent=51 // pred_fallthru
          _
      $region52: #{tpu_custom_call.1} parent=5 // pred_fallthru
        _
    $region6: #{tpu_custom_call.1} parent=1 // loop_footer
      %s20 = sadd.s32 1, %s16
    $region7: #{tpu_custom_call.1} parent=1 // loop_footer_branch
      %15 = sbr.rel target = $region3
    $region8: #{tpu_custom_call.1} parent=1 // loop_exit
      _
    %3167 = vsyncpa [#allocation3], 1
    %s3168 = scalar_lea.sflag [#allocation3], 1
    %3169 = vsyncpa %s3168, 1
    %3170 = vsyncpa [#allocation6], 1
    %3171 = vsyncpa [#allocation4], 1
    %s3172 = scalar_lea.sflag [#allocation4], 1
    %3173 = vsyncpa %s3172, 1

</llo_original>
